<compile_context>
chip_gen: v7x
topology: tpu7x:2x2x1
jax: 0.10.0
libtpu: 0.0.40
codegen_flags: <defaults>
</compile_context>

<pallas_src>
import jax
import jax.numpy as jnp
from jax.experimental import pallas as pl
from jax.experimental.pallas import tpu as pltpu


def gru_kernel(x_ref,
               wih_r_ref, wih_z_ref, wih_n_ref,
               whh_r_ref, whh_z_ref, whh_n_ref,
               b_r_ref, b_z_ref, b_in_ref, b_hn_ref,
               wfc_ref, bfc_ref,
               out_ref):
    """Single invocation: whole sequence + final Linear.

    x_ref     : (B, T, I)  full input sequence (batch-first, as passed in)
    wih_*_ref : (I, H)     per-gate input->hidden weights (transposed)
    whh_*_ref : (H, H)     per-gate hidden->hidden weights (transposed)
    b_r/b_z   : (1, H)     combined biases (b_ih + b_hh) for r and z gates
    b_in/b_hn : (1, H)     separate n-gate biases (b_hn is scaled by r)
    wfc_ref   : (H, O)     final Linear weights (transposed)
    bfc_ref   : (1, O)     final Linear bias
    out_ref   : (B, O)     output
    """
    B, T, I = x_ref.shape
    H = whh_r_ref.shape[0]
    f32 = jnp.float32

    # ---- hoisted, non-recurrent input projections for all timesteps ----
    # (B*T, I) @ (I, H) once per gate; row index = b*T + t.
    x2 = x_ref[...].reshape(B * T, I)
    gi_r = (jnp.dot(x2, wih_r_ref[...], preferred_element_type=f32)
            + b_r_ref[...]).reshape(B, T, H)
    gi_z = (jnp.dot(x2, wih_z_ref[...], preferred_element_type=f32)
            + b_z_ref[...]).reshape(B, T, H)
    gi_n = (jnp.dot(x2, wih_n_ref[...], preferred_element_type=f32)
            + b_in_ref[...]).reshape(B, T, H)

    whh_r = whh_r_ref[...]
    whh_z = whh_z_ref[...]
    whh_n = whh_n_ref[...]
    b_hn = b_hn_ref[...]

    # ---- recurrent part: fully-unrolled static time loop ----
    h = jnp.zeros((B, H), f32)
    for t in range(T):
        gh_r = jnp.dot(h, whh_r, preferred_element_type=f32)
        gh_z = jnp.dot(h, whh_z, preferred_element_type=f32)
        gh_n = jnp.dot(h, whh_n, preferred_element_type=f32) + b_hn
        r = jax.nn.sigmoid(gi_r[:, t, :] + gh_r)
        z = jax.nn.sigmoid(gi_z[:, t, :] + gh_z)
        n = jnp.tanh(gi_n[:, t, :] + r * gh_n)
        h = (1.0 - z) * n + z * h

    # ---- fused final Linear on the last hidden state ----
    out_ref[...] = (jnp.dot(h, wfc_ref[...], preferred_element_type=f32)
                    + bfc_ref[...]).astype(out_ref.dtype)


def prepare_gru_params(w_ih, w_hh, b_ih, b_hh, w_fc, b_fc):
    """PyTorch layout -> kernel layout.

    w_ih: (3H, I), w_hh: (3H, H), b_ih/b_hh: (3H,), gate order [r, z, n].
    w_fc: (O, H), b_fc: (O,).
    Returns per-gate transposed weight slabs and pre-combined biases.
    """
    H = w_hh.shape[1]
    wih_r, wih_z, wih_n = (w_ih[0:H].T, w_ih[H:2 * H].T, w_ih[2 * H:3 * H].T)
    whh_r, whh_z, whh_n = (w_hh[0:H].T, w_hh[H:2 * H].T, w_hh[2 * H:3 * H].T)
    b_r = (b_ih[0:H] + b_hh[0:H]).reshape(1, H)
    b_z = (b_ih[H:2 * H] + b_hh[H:2 * H]).reshape(1, H)
    b_in = b_ih[2 * H:3 * H].reshape(1, H)
    b_hn = b_hh[2 * H:3 * H].reshape(1, H)
    wfc = w_fc.T
    bfc = b_fc.reshape(1, -1)
    return (wih_r, wih_z, wih_n, whh_r, whh_z, whh_n,
            b_r, b_z, b_in, b_hn, wfc, bfc)


def gru_forward(x, wih_r, wih_z, wih_n, whh_r, whh_z, whh_n,
                b_r, b_z, b_in, b_hn, wfc, bfc):
    """x: (B, T, I) batch-first. Returns (B, O)."""
    B, T, I = x.shape
    H = whh_r.shape[0]
    O = wfc.shape[1]

    def full(shape):
        return pl.BlockSpec(shape, lambda i: (0,) * len(shape))

    return pl.pallas_call(
        gru_kernel,
        out_shape=jax.ShapeDtypeStruct((B, O), jnp.float32),
        grid_spec=pltpu.PrefetchScalarGridSpec(
            num_scalar_prefetch=0,
            grid=(1,),   # single step: all data (~20 KB) is VMEM-resident
            in_specs=[
                full((B, T, I)),                              # x
                full((I, H)), full((I, H)), full((I, H)),     # W_ih r/z/n
                full((H, H)), full((H, H)), full((H, H)),     # W_hh r/z/n
                full((1, H)), full((1, H)),                   # b_r, b_z (combined)
                full((1, H)), full((1, H)),                   # b_in, b_hn
                full((H, O)), full((1, O)),                   # W_fc, b_fc
            ],
            out_specs=full((B, O)),
        ),
        compiler_params=pltpu.CompilerParams(
            dimension_semantics=("arbitrary",)),
    )(x, wih_r, wih_z, wih_n, whh_r, whh_z, whh_n,
      b_r, b_z, b_in, b_hn, wfc, bfc)


def gru_reference(x, w_ih, w_hh, b_ih, b_hh, w_fc, b_fc):
    """Pure-JAX reference matching torch.nn.GRU(batch_first=True) + Linear."""
    B, T, I = x.shape
    H = w_hh.shape[1]

    def step(h, x_t):
        gi = x_t @ w_ih.T + b_ih
        gh = h @ w_hh.T + b_hh
        r = jax.nn.sigmoid(gi[:, 0:H] + gh[:, 0:H])
        z = jax.nn.sigmoid(gi[:, H:2 * H] + gh[:, H:2 * H])
        n = jnp.tanh(gi[:, 2 * H:3 * H] + r * gh[:, 2 * H:3 * H])
        h_new = (1.0 - z) * n + z * h
        return h_new, None

    h0 = jnp.zeros((B, H), jnp.float32)
    h_last, _ = jax.lax.scan(step, h0, jnp.transpose(x, (1, 0, 2)))
    return h_last @ w_fc.T + b_fc


if __name__ == "__main__":
    # Shapes consistent with the module's forward:
    # X: (n_samples=2, n_points=8, dim_X=4), hidden=32, output_dim=8.
    B, T, I, H, O = 2, 8, 4, 32, 8

    key = jax.random.PRNGKey(0)
    ks = jax.random.split(key, 7)
    k = 1.0 / jnp.sqrt(H)  # PyTorch GRU/Linear init range ~ U(-1/sqrt(H), 1/sqrt(H))

    # Parameters in native PyTorch layout (gate order r, z, n).
    w_ih = jax.random.uniform(ks[0], (3 * H, I), jnp.float32, -k, k)
    w_hh = jax.random.uniform(ks[1], (3 * H, H), jnp.float32, -k, k)
    b_ih = jax.random.uniform(ks[2], (3 * H,), jnp.float32, -k, k)
    b_hh = jax.random.uniform(ks[3], (3 * H,), jnp.float32, -k, k)
    w_fc = jax.random.uniform(ks[4], (O, H), jnp.float32, -k, k)
    b_fc = jax.random.uniform(ks[5], (O,), jnp.float32, -k, k)
    x = jax.random.normal(ks[6], (B, T, I), jnp.float32)

    params = prepare_gru_params(w_ih, w_hh, b_ih, b_hh, w_fc, b_fc)

    out = gru_forward(x, *params)
    out = jax.block_until_ready(out)

    ref = gru_reference(x, w_ih, w_hh, b_ih, b_hh, w_fc, b_fc)
    assert out.shape == (B, O)
    assert jnp.allclose(out, ref, atol=1e-5, rtol=1e-5), "mismatch vs reference"

    print("KERNEL_OK")
</pallas_src>

<mosaic_0001>
module attributes {stable_mosaic.version = 11 : i64} {
  func.func @gru_kernel(%arg0: i32, %arg1: memref<2x8x4xf32, #tpu.memory_space<vmem>>, %arg2: memref<4x32xf32, #tpu.memory_space<vmem>>, %arg3: memref<4x32xf32, #tpu.memory_space<vmem>>, %arg4: memref<4x32xf32, #tpu.memory_space<vmem>>, %arg5: memref<32x32xf32, #tpu.memory_space<vmem>>, %arg6: memref<32x32xf32, #tpu.memory_space<vmem>>, %arg7: memref<32x32xf32, #tpu.memory_space<vmem>>, %arg8: memref<1x32xf32, #tpu.memory_space<vmem>>, %arg9: memref<1x32xf32, #tpu.memory_space<vmem>>, %arg10: memref<1x32xf32, #tpu.memory_space<vmem>>, %arg11: memref<1x32xf32, #tpu.memory_space<vmem>>, %arg12: memref<32x8xf32, #tpu.memory_space<vmem>>, %arg13: memref<1x8xf32, #tpu.memory_space<vmem>>, %arg14: memref<2x8xf32, #tpu.memory_space<vmem>>) attributes {dimension_semantics = [#tpu.dimension_semantics<arbitrary>], iteration_bounds = array<i64: 1>, scalar_prefetch = 0 : i64, scratch_operands = 0 : i64, tpu.core_type = #tpu.core_type<tc>, window_params = [{pipeline_mode = #tpu.pipeline_mode<synchronous>, transform_indices = @transform_0, window_bounds = array<i64: 2, 8, 4>}, {pipeline_mode = #tpu.pipeline_mode<synchronous>, transform_indices = @transform_1, window_bounds = array<i64: 4, 32>}, {pipeline_mode = #tpu.pipeline_mode<synchronous>, transform_indices = @transform_2, window_bounds = array<i64: 4, 32>}, {pipeline_mode = #tpu.pipeline_mode<synchronous>, transform_indices = @transform_3, window_bounds = array<i64: 4, 32>}, {pipeline_mode = #tpu.pipeline_mode<synchronous>, transform_indices = @transform_4, window_bounds = array<i64: 32, 32>}, {pipeline_mode = #tpu.pipeline_mode<synchronous>, transform_indices = @transform_5, window_bounds = array<i64: 32, 32>}, {pipeline_mode = #tpu.pipeline_mode<synchronous>, transform_indices = @transform_6, window_bounds = array<i64: 32, 32>}, {pipeline_mode = #tpu.pipeline_mode<synchronous>, transform_indices = @transform_7, window_bounds = array<i64: 1, 32>}, {pipeline_mode = #tpu.pipeline_mode<synchronous>, transform_indices = @transform_8, window_bounds = array<i64: 1, 32>}, {pipeline_mode = #tpu.pipeline_mode<synchronous>, transform_indices = @transform_9, window_bounds = array<i64: 1, 32>}, {pipeline_mode = #tpu.pipeline_mode<synchronous>, transform_indices = @transform_10, window_bounds = array<i64: 1, 32>}, {pipeline_mode = #tpu.pipeline_mode<synchronous>, transform_indices = @transform_11, window_bounds = array<i64: 32, 8>}, {pipeline_mode = #tpu.pipeline_mode<synchronous>, transform_indices = @transform_12, window_bounds = array<i64: 1, 8>}, {pipeline_mode = #tpu.pipeline_mode<synchronous>, transform_indices = @transform_13, window_bounds = array<i64: 2, 8>}]} {
    %c0 = arith.constant 0 : index
    %c0_0 = arith.constant 0 : index
    %c0_1 = arith.constant 0 : index
    %0 = vector.load %arg1[%c0, %c0_0, %c0_1] : memref<2x8x4xf32, #tpu.memory_space<vmem>>, vector<2x8x4xf32>
    %1 = vector.shape_cast %0 : vector<2x8x4xf32> to vector<16x4xf32>
    %c0_2 = arith.constant 0 : index
    %c0_3 = arith.constant 0 : index
    %2 = vector.load %arg2[%c0_2, %c0_3] : memref<4x32xf32, #tpu.memory_space<vmem>>, vector<4x32xf32>
    %cst = arith.constant dense<0.000000e+00> : vector<16x32xf32>
    %3 = tpu.matmul %1, %2, %cst {dimension_numbers = #tpu.dot_dimension_numbers<[1], [0], [0], [1], [0, 0, 1, 1], [], []>} : vector<16x4xf32>, vector<4x32xf32>, vector<16x32xf32> -> vector<16x32xf32>
    %c0_4 = arith.constant 0 : index
    %c0_5 = arith.constant 0 : index
    %4 = vector.load %arg8[%c0_4, %c0_5] : memref<1x32xf32, #tpu.memory_space<vmem>>, vector<1x32xf32>
    %5 = vector.broadcast %4 : vector<1x32xf32> to vector<16x32xf32>
    %6 = arith.addf %3, %5 : vector<16x32xf32>
    %7 = vector.shape_cast %6 : vector<16x32xf32> to vector<2x8x32xf32>
    %c0_6 = arith.constant 0 : index
    %c0_7 = arith.constant 0 : index
    %8 = vector.load %arg3[%c0_6, %c0_7] : memref<4x32xf32, #tpu.memory_space<vmem>>, vector<4x32xf32>
    %cst_8 = arith.constant dense<0.000000e+00> : vector<16x32xf32>
    %9 = tpu.matmul %1, %8, %cst_8 {dimension_numbers = #tpu.dot_dimension_numbers<[1], [0], [0], [1], [0, 0, 1, 1], [], []>} : vector<16x4xf32>, vector<4x32xf32>, vector<16x32xf32> -> vector<16x32xf32>
    %c0_9 = arith.constant 0 : index
    %c0_10 = arith.constant 0 : index
    %10 = vector.load %arg9[%c0_9, %c0_10] : memref<1x32xf32, #tpu.memory_space<vmem>>, vector<1x32xf32>
    %11 = vector.broadcast %10 : vector<1x32xf32> to vector<16x32xf32>
    %12 = arith.addf %9, %11 : vector<16x32xf32>
    %13 = vector.shape_cast %12 : vector<16x32xf32> to vector<2x8x32xf32>
    %c0_11 = arith.constant 0 : index
    %c0_12 = arith.constant 0 : index
    %14 = vector.load %arg4[%c0_11, %c0_12] : memref<4x32xf32, #tpu.memory_space<vmem>>, vector<4x32xf32>
    %cst_13 = arith.constant dense<0.000000e+00> : vector<16x32xf32>
    %15 = tpu.matmul %1, %14, %cst_13 {dimension_numbers = #tpu.dot_dimension_numbers<[1], [0], [0], [1], [0, 0, 1, 1], [], []>} : vector<16x4xf32>, vector<4x32xf32>, vector<16x32xf32> -> vector<16x32xf32>
    %c0_14 = arith.constant 0 : index
    %c0_15 = arith.constant 0 : index
    %16 = vector.load %arg10[%c0_14, %c0_15] : memref<1x32xf32, #tpu.memory_space<vmem>>, vector<1x32xf32>
    %17 = vector.broadcast %16 : vector<1x32xf32> to vector<16x32xf32>
    %18 = arith.addf %15, %17 : vector<16x32xf32>
    %19 = vector.shape_cast %18 : vector<16x32xf32> to vector<2x8x32xf32>
    %c0_16 = arith.constant 0 : index
    %c0_17 = arith.constant 0 : index
    %20 = vector.load %arg5[%c0_16, %c0_17] : memref<32x32xf32, #tpu.memory_space<vmem>>, vector<32x32xf32>
    %c0_18 = arith.constant 0 : index
    %c0_19 = arith.constant 0 : index
    %21 = vector.load %arg6[%c0_18, %c0_19] : memref<32x32xf32, #tpu.memory_space<vmem>>, vector<32x32xf32>
    %c0_20 = arith.constant 0 : index
    %c0_21 = arith.constant 0 : index
    %22 = vector.load %arg7[%c0_20, %c0_21] : memref<32x32xf32, #tpu.memory_space<vmem>>, vector<32x32xf32>
    %c0_22 = arith.constant 0 : index
    %c0_23 = arith.constant 0 : index
    %23 = vector.load %arg11[%c0_22, %c0_23] : memref<1x32xf32, #tpu.memory_space<vmem>>, vector<1x32xf32>
    %cst_24 = arith.constant 0.000000e+00 : f32
    %24 = vector.broadcast %cst_24 : f32 to vector<2x32xf32>
    %cst_25 = arith.constant dense<0.000000e+00> : vector<2x32xf32>
    %25 = tpu.matmul %24, %20, %cst_25 {dimension_numbers = #tpu.dot_dimension_numbers<[1], [0], [0], [1], [0, 0, 1, 1], [], []>} : vector<2x32xf32>, vector<32x32xf32>, vector<2x32xf32> -> vector<2x32xf32>
    %cst_26 = arith.constant dense<0.000000e+00> : vector<2x32xf32>
    %26 = tpu.matmul %24, %21, %cst_26 {dimension_numbers = #tpu.dot_dimension_numbers<[1], [0], [0], [1], [0, 0, 1, 1], [], []>} : vector<2x32xf32>, vector<32x32xf32>, vector<2x32xf32> -> vector<2x32xf32>
    %cst_27 = arith.constant dense<0.000000e+00> : vector<2x32xf32>
    %27 = tpu.matmul %24, %22, %cst_27 {dimension_numbers = #tpu.dot_dimension_numbers<[1], [0], [0], [1], [0, 0, 1, 1], [], []>} : vector<2x32xf32>, vector<32x32xf32>, vector<2x32xf32> -> vector<2x32xf32>
    %28 = vector.broadcast %23 : vector<1x32xf32> to vector<2x32xf32>
    %29 = arith.addf %27, %28 : vector<2x32xf32>
    %30 = vector.extract_strided_slice %7 {offsets = [0, 0, 0], sizes = [2, 1, 32], strides = [1, 1, 1]} : vector<2x8x32xf32> to vector<2x1x32xf32>
    %31 = vector.shape_cast %30 : vector<2x1x32xf32> to vector<2x32xf32>
    %32 = arith.addf %31, %25 : vector<2x32xf32>
    %33 = arith.negf %32 : vector<2x32xf32>
    %34 = math.exp %33 : vector<2x32xf32>
    %cst_28 = arith.constant 1.000000e+00 : f32
    %35 = vector.broadcast %cst_28 : f32 to vector<2x32xf32>
    %36 = arith.addf %35, %34 : vector<2x32xf32>
    %37 = arith.divf %35, %36 : vector<2x32xf32>
    %38 = vector.extract_strided_slice %13 {offsets = [0, 0, 0], sizes = [2, 1, 32], strides = [1, 1, 1]} : vector<2x8x32xf32> to vector<2x1x32xf32>
    %39 = vector.shape_cast %38 : vector<2x1x32xf32> to vector<2x32xf32>
    %40 = arith.addf %39, %26 : vector<2x32xf32>
    %41 = arith.negf %40 : vector<2x32xf32>
    %42 = math.exp %41 : vector<2x32xf32>
    %cst_29 = arith.constant 1.000000e+00 : f32
    %43 = vector.broadcast %cst_29 : f32 to vector<2x32xf32>
    %44 = arith.addf %43, %42 : vector<2x32xf32>
    %45 = arith.divf %43, %44 : vector<2x32xf32>
    %46 = vector.extract_strided_slice %19 {offsets = [0, 0, 0], sizes = [2, 1, 32], strides = [1, 1, 1]} : vector<2x8x32xf32> to vector<2x1x32xf32>
    %47 = vector.shape_cast %46 : vector<2x1x32xf32> to vector<2x32xf32>
    %48 = arith.mulf %37, %29 : vector<2x32xf32>
    %49 = arith.addf %47, %48 : vector<2x32xf32>
    %50 = math.tanh %49 : vector<2x32xf32>
    %cst_30 = arith.constant 1.000000e+00 : f32
    %51 = vector.broadcast %cst_30 : f32 to vector<2x32xf32>
    %52 = arith.subf %51, %45 : vector<2x32xf32>
    %53 = arith.mulf %52, %50 : vector<2x32xf32>
    %54 = arith.mulf %45, %24 : vector<2x32xf32>
    %55 = arith.addf %53, %54 : vector<2x32xf32>
    %cst_31 = arith.constant dense<0.000000e+00> : vector<2x32xf32>
    %56 = tpu.matmul %55, %20, %cst_31 {dimension_numbers = #tpu.dot_dimension_numbers<[1], [0], [0], [1], [0, 0, 1, 1], [], []>} : vector<2x32xf32>, vector<32x32xf32>, vector<2x32xf32> -> vector<2x32xf32>
    %cst_32 = arith.constant dense<0.000000e+00> : vector<2x32xf32>
    %57 = tpu.matmul %55, %21, %cst_32 {dimension_numbers = #tpu.dot_dimension_numbers<[1], [0], [0], [1], [0, 0, 1, 1], [], []>} : vector<2x32xf32>, vector<32x32xf32>, vector<2x32xf32> -> vector<2x32xf32>
    %cst_33 = arith.constant dense<0.000000e+00> : vector<2x32xf32>
    %58 = tpu.matmul %55, %22, %cst_33 {dimension_numbers = #tpu.dot_dimension_numbers<[1], [0], [0], [1], [0, 0, 1, 1], [], []>} : vector<2x32xf32>, vector<32x32xf32>, vector<2x32xf32> -> vector<2x32xf32>
    %59 = vector.broadcast %23 : vector<1x32xf32> to vector<2x32xf32>
    %60 = arith.addf %58, %59 : vector<2x32xf32>
    %61 = vector.extract_strided_slice %7 {offsets = [0, 1, 0], sizes = [2, 1, 32], strides = [1, 1, 1]} : vector<2x8x32xf32> to vector<2x1x32xf32>
    %62 = vector.shape_cast %61 : vector<2x1x32xf32> to vector<2x32xf32>
    %63 = arith.addf %62, %56 : vector<2x32xf32>
    %64 = arith.negf %63 : vector<2x32xf32>
    %65 = math.exp %64 : vector<2x32xf32>
    %cst_34 = arith.constant 1.000000e+00 : f32
    %66 = vector.broadcast %cst_34 : f32 to vector<2x32xf32>
    %67 = arith.addf %66, %65 : vector<2x32xf32>
    %68 = arith.divf %66, %67 : vector<2x32xf32>
    %69 = vector.extract_strided_slice %13 {offsets = [0, 1, 0], sizes = [2, 1, 32], strides = [1, 1, 1]} : vector<2x8x32xf32> to vector<2x1x32xf32>
    %70 = vector.shape_cast %69 : vector<2x1x32xf32> to vector<2x32xf32>
    %71 = arith.addf %70, %57 : vector<2x32xf32>
    %72 = arith.negf %71 : vector<2x32xf32>
    %73 = math.exp %72 : vector<2x32xf32>
    %cst_35 = arith.constant 1.000000e+00 : f32
    %74 = vector.broadcast %cst_35 : f32 to vector<2x32xf32>
    %75 = arith.addf %74, %73 : vector<2x32xf32>
    %76 = arith.divf %74, %75 : vector<2x32xf32>
    %77 = vector.extract_strided_slice %19 {offsets = [0, 1, 0], sizes = [2, 1, 32], strides = [1, 1, 1]} : vector<2x8x32xf32> to vector<2x1x32xf32>
    %78 = vector.shape_cast %77 : vector<2x1x32xf32> to vector<2x32xf32>
    %79 = arith.mulf %68, %60 : vector<2x32xf32>
    %80 = arith.addf %78, %79 : vector<2x32xf32>
    %81 = math.tanh %80 : vector<2x32xf32>
    %cst_36 = arith.constant 1.000000e+00 : f32
    %82 = vector.broadcast %cst_36 : f32 to vector<2x32xf32>
    %83 = arith.subf %82, %76 : vector<2x32xf32>
    %84 = arith.mulf %83, %81 : vector<2x32xf32>
    %85 = arith.mulf %76, %55 : vector<2x32xf32>
    %86 = arith.addf %84, %85 : vector<2x32xf32>
    %cst_37 = arith.constant dense<0.000000e+00> : vector<2x32xf32>
    %87 = tpu.matmul %86, %20, %cst_37 {dimension_numbers = #tpu.dot_dimension_numbers<[1], [0], [0], [1], [0, 0, 1, 1], [], []>} : vector<2x32xf32>, vector<32x32xf32>, vector<2x32xf32> -> vector<2x32xf32>
    %cst_38 = arith.constant dense<0.000000e+00> : vector<2x32xf32>
    %88 = tpu.matmul %86, %21, %cst_38 {dimension_numbers = #tpu.dot_dimension_numbers<[1], [0], [0], [1], [0, 0, 1, 1], [], []>} : vector<2x32xf32>, vector<32x32xf32>, vector<2x32xf32> -> vector<2x32xf32>
    %cst_39 = arith.constant dense<0.000000e+00> : vector<2x32xf32>
    %89 = tpu.matmul %86, %22, %cst_39 {dimension_numbers = #tpu.dot_dimension_numbers<[1], [0], [0], [1], [0, 0, 1, 1], [], []>} : vector<2x32xf32>, vector<32x32xf32>, vector<2x32xf32> -> vector<2x32xf32>
    %90 = vector.broadcast %23 : vector<1x32xf32> to vector<2x32xf32>
    %91 = arith.addf %89, %90 : vector<2x32xf32>
    %92 = vector.extract_strided_slice %7 {offsets = [0, 2, 0], sizes = [2, 1, 32], strides = [1, 1, 1]} : vector<2x8x32xf32> to vector<2x1x32xf32>
    %93 = vector.shape_cast %92 : vector<2x1x32xf32> to vector<2x32xf32>
    %94 = arith.addf %93, %87 : vector<2x32xf32>
    %95 = arith.negf %94 : vector<2x32xf32>
    %96 = math.exp %95 : vector<2x32xf32>
    %cst_40 = arith.constant 1.000000e+00 : f32
    %97 = vector.broadcast %cst_40 : f32 to vector<2x32xf32>
    %98 = arith.addf %97, %96 : vector<2x32xf32>
    %99 = arith.divf %97, %98 : vector<2x32xf32>
    %100 = vector.extract_strided_slice %13 {offsets = [0, 2, 0], sizes = [2, 1, 32], strides = [1, 1, 1]} : vector<2x8x32xf32> to vector<2x1x32xf32>
    %101 = vector.shape_cast %100 : vector<2x1x32xf32> to vector<2x32xf32>
    %102 = arith.addf %101, %88 : vector<2x32xf32>
    %103 = arith.negf %102 : vector<2x32xf32>
    %104 = math.exp %103 : vector<2x32xf32>
    %cst_41 = arith.constant 1.000000e+00 : f32
    %105 = vector.broadcast %cst_41 : f32 to vector<2x32xf32>
    %106 = arith.addf %105, %104 : vector<2x32xf32>
    %107 = arith.divf %105, %106 : vector<2x32xf32>
    %108 = vector.extract_strided_slice %19 {offsets = [0, 2, 0], sizes = [2, 1, 32], strides = [1, 1, 1]} : vector<2x8x32xf32> to vector<2x1x32xf32>
    %109 = vector.shape_cast %108 : vector<2x1x32xf32> to vector<2x32xf32>
    %110 = arith.mulf %99, %91 : vector<2x32xf32>
    %111 = arith.addf %109, %110 : vector<2x32xf32>
    %112 = math.tanh %111 : vector<2x32xf32>
    %cst_42 = arith.constant 1.000000e+00 : f32
    %113 = vector.broadcast %cst_42 : f32 to vector<2x32xf32>
    %114 = arith.subf %113, %107 : vector<2x32xf32>
    %115 = arith.mulf %114, %112 : vector<2x32xf32>
    %116 = arith.mulf %107, %86 : vector<2x32xf32>
    %117 = arith.addf %115, %116 : vector<2x32xf32>
    %cst_43 = arith.constant dense<0.000000e+00> : vector<2x32xf32>
    %118 = tpu.matmul %117, %20, %cst_43 {dimension_numbers = #tpu.dot_dimension_numbers<[1], [0], [0], [1], [0, 0, 1, 1], [], []>} : vector<2x32xf32>, vector<32x32xf32>, vector<2x32xf32> -> vector<2x32xf32>
    %cst_44 = arith.constant dense<0.000000e+00> : vector<2x32xf32>
    %119 = tpu.matmul %117, %21, %cst_44 {dimension_numbers = #tpu.dot_dimension_numbers<[1], [0], [0], [1], [0, 0, 1, 1], [], []>} : vector<2x32xf32>, vector<32x32xf32>, vector<2x32xf32> -> vector<2x32xf32>
    %cst_45 = arith.constant dense<0.000000e+00> : vector<2x32xf32>
    %120 = tpu.matmul %117, %22, %cst_45 {dimension_numbers = #tpu.dot_dimension_numbers<[1], [0], [0], [1], [0, 0, 1, 1], [], []>} : vector<2x32xf32>, vector<32x32xf32>, vector<2x32xf32> -> vector<2x32xf32>
    %121 = vector.broadcast %23 : vector<1x32xf32> to vector<2x32xf32>
    %122 = arith.addf %120, %121 : vector<2x32xf32>
    %123 = vector.extract_strided_slice %7 {offsets = [0, 3, 0], sizes = [2, 1, 32], strides = [1, 1, 1]} : vector<2x8x32xf32> to vector<2x1x32xf32>
    %124 = vector.shape_cast %123 : vector<2x1x32xf32> to vector<2x32xf32>
    %125 = arith.addf %124, %118 : vector<2x32xf32>
    %126 = arith.negf %125 : vector<2x32xf32>
    %127 = math.exp %126 : vector<2x32xf32>
    %cst_46 = arith.constant 1.000000e+00 : f32
    %128 = vector.broadcast %cst_46 : f32 to vector<2x32xf32>
    %129 = arith.addf %128, %127 : vector<2x32xf32>
    %130 = arith.divf %128, %129 : vector<2x32xf32>
    %131 = vector.extract_strided_slice %13 {offsets = [0, 3, 0], sizes = [2, 1, 32], strides = [1, 1, 1]} : vector<2x8x32xf32> to vector<2x1x32xf32>
    %132 = vector.shape_cast %131 : vector<2x1x32xf32> to vector<2x32xf32>
    %133 = arith.addf %132, %119 : vector<2x32xf32>
    %134 = arith.negf %133 : vector<2x32xf32>
    %135 = math.exp %134 : vector<2x32xf32>
    %cst_47 = arith.constant 1.000000e+00 : f32
    %136 = vector.broadcast %cst_47 : f32 to vector<2x32xf32>
    %137 = arith.addf %136, %135 : vector<2x32xf32>
    %138 = arith.divf %136, %137 : vector<2x32xf32>
    %139 = vector.extract_strided_slice %19 {offsets = [0, 3, 0], sizes = [2, 1, 32], strides = [1, 1, 1]} : vector<2x8x32xf32> to vector<2x1x32xf32>
    %140 = vector.shape_cast %139 : vector<2x1x32xf32> to vector<2x32xf32>
    %141 = arith.mulf %130, %122 : vector<2x32xf32>
    %142 = arith.addf %140, %141 : vector<2x32xf32>
    %143 = math.tanh %142 : vector<2x32xf32>
    %cst_48 = arith.constant 1.000000e+00 : f32
    %144 = vector.broadcast %cst_48 : f32 to vector<2x32xf32>
    %145 = arith.subf %144, %138 : vector<2x32xf32>
    %146 = arith.mulf %145, %143 : vector<2x32xf32>
    %147 = arith.mulf %138, %117 : vector<2x32xf32>
    %148 = arith.addf %146, %147 : vector<2x32xf32>
    %cst_49 = arith.constant dense<0.000000e+00> : vector<2x32xf32>
    %149 = tpu.matmul %148, %20, %cst_49 {dimension_numbers = #tpu.dot_dimension_numbers<[1], [0], [0], [1], [0, 0, 1, 1], [], []>} : vector<2x32xf32>, vector<32x32xf32>, vector<2x32xf32> -> vector<2x32xf32>
    %cst_50 = arith.constant dense<0.000000e+00> : vector<2x32xf32>
    %150 = tpu.matmul %148, %21, %cst_50 {dimension_numbers = #tpu.dot_dimension_numbers<[1], [0], [0], [1], [0, 0, 1, 1], [], []>} : vector<2x32xf32>, vector<32x32xf32>, vector<2x32xf32> -> vector<2x32xf32>
    %cst_51 = arith.constant dense<0.000000e+00> : vector<2x32xf32>
    %151 = tpu.matmul %148, %22, %cst_51 {dimension_numbers = #tpu.dot_dimension_numbers<[1], [0], [0], [1], [0, 0, 1, 1], [], []>} : vector<2x32xf32>, vector<32x32xf32>, vector<2x32xf32> -> vector<2x32xf32>
    %152 = vector.broadcast %23 : vector<1x32xf32> to vector<2x32xf32>
    %153 = arith.addf %151, %152 : vector<2x32xf32>
    %154 = vector.extract_strided_slice %7 {offsets = [0, 4, 0], sizes = [2, 1, 32], strides = [1, 1, 1]} : vector<2x8x32xf32> to vector<2x1x32xf32>
    %155 = vector.shape_cast %154 : vector<2x1x32xf32> to vector<2x32xf32>
    %156 = arith.addf %155, %149 : vector<2x32xf32>
    %157 = arith.negf %156 : vector<2x32xf32>
    %158 = math.exp %157 : vector<2x32xf32>
    %cst_52 = arith.constant 1.000000e+00 : f32
    %159 = vector.broadcast %cst_52 : f32 to vector<2x32xf32>
    %160 = arith.addf %159, %158 : vector<2x32xf32>
    %161 = arith.divf %159, %160 : vector<2x32xf32>
    %162 = vector.extract_strided_slice %13 {offsets = [0, 4, 0], sizes = [2, 1, 32], strides = [1, 1, 1]} : vector<2x8x32xf32> to vector<2x1x32xf32>
    %163 = vector.shape_cast %162 : vector<2x1x32xf32> to vector<2x32xf32>
    %164 = arith.addf %163, %150 : vector<2x32xf32>
    %165 = arith.negf %164 : vector<2x32xf32>
    %166 = math.exp %165 : vector<2x32xf32>
    %cst_53 = arith.constant 1.000000e+00 : f32
    %167 = vector.broadcast %cst_53 : f32 to vector<2x32xf32>
    %168 = arith.addf %167, %166 : vector<2x32xf32>
    %169 = arith.divf %167, %168 : vector<2x32xf32>
    %170 = vector.extract_strided_slice %19 {offsets = [0, 4, 0], sizes = [2, 1, 32], strides = [1, 1, 1]} : vector<2x8x32xf32> to vector<2x1x32xf32>
    %171 = vector.shape_cast %170 : vector<2x1x32xf32> to vector<2x32xf32>
    %172 = arith.mulf %161, %153 : vector<2x32xf32>
    %173 = arith.addf %171, %172 : vector<2x32xf32>
    %174 = math.tanh %173 : vector<2x32xf32>
    %cst_54 = arith.constant 1.000000e+00 : f32
    %175 = vector.broadcast %cst_54 : f32 to vector<2x32xf32>
    %176 = arith.subf %175, %169 : vector<2x32xf32>
    %177 = arith.mulf %176, %174 : vector<2x32xf32>
    %178 = arith.mulf %169, %148 : vector<2x32xf32>
    %179 = arith.addf %177, %178 : vector<2x32xf32>
    %cst_55 = arith.constant dense<0.000000e+00> : vector<2x32xf32>
    %180 = tpu.matmul %179, %20, %cst_55 {dimension_numbers = #tpu.dot_dimension_numbers<[1], [0], [0], [1], [0, 0, 1, 1], [], []>} : vector<2x32xf32>, vector<32x32xf32>, vector<2x32xf32> -> vector<2x32xf32>
    %cst_56 = arith.constant dense<0.000000e+00> : vector<2x32xf32>
    %181 = tpu.matmul %179, %21, %cst_56 {dimension_numbers = #tpu.dot_dimension_numbers<[1], [0], [0], [1], [0, 0, 1, 1], [], []>} : vector<2x32xf32>, vector<32x32xf32>, vector<2x32xf32> -> vector<2x32xf32>
    %cst_57 = arith.constant dense<0.000000e+00> : vector<2x32xf32>
    %182 = tpu.matmul %179, %22, %cst_57 {dimension_numbers = #tpu.dot_dimension_numbers<[1], [0], [0], [1], [0, 0, 1, 1], [], []>} : vector<2x32xf32>, vector<32x32xf32>, vector<2x32xf32> -> vector<2x32xf32>
    %183 = vector.broadcast %23 : vector<1x32xf32> to vector<2x32xf32>
    %184 = arith.addf %182, %183 : vector<2x32xf32>
    %185 = vector.extract_strided_slice %7 {offsets = [0, 5, 0], sizes = [2, 1, 32], strides = [1, 1, 1]} : vector<2x8x32xf32> to vector<2x1x32xf32>
    %186 = vector.shape_cast %185 : vector<2x1x32xf32> to vector<2x32xf32>
    %187 = arith.addf %186, %180 : vector<2x32xf32>
    %188 = arith.negf %187 : vector<2x32xf32>
    %189 = math.exp %188 : vector<2x32xf32>
    %cst_58 = arith.constant 1.000000e+00 : f32
    %190 = vector.broadcast %cst_58 : f32 to vector<2x32xf32>
    %191 = arith.addf %190, %189 : vector<2x32xf32>
    %192 = arith.divf %190, %191 : vector<2x32xf32>
    %193 = vector.extract_strided_slice %13 {offsets = [0, 5, 0], sizes = [2, 1, 32], strides = [1, 1, 1]} : vector<2x8x32xf32> to vector<2x1x32xf32>
    %194 = vector.shape_cast %193 : vector<2x1x32xf32> to vector<2x32xf32>
    %195 = arith.addf %194, %181 : vector<2x32xf32>
    %196 = arith.negf %195 : vector<2x32xf32>
    %197 = math.exp %196 : vector<2x32xf32>
    %cst_59 = arith.constant 1.000000e+00 : f32
    %198 = vector.broadcast %cst_59 : f32 to vector<2x32xf32>
    %199 = arith.addf %198, %197 : vector<2x32xf32>
    %200 = arith.divf %198, %199 : vector<2x32xf32>
    %201 = vector.extract_strided_slice %19 {offsets = [0, 5, 0], sizes = [2, 1, 32], strides = [1, 1, 1]} : vector<2x8x32xf32> to vector<2x1x32xf32>
    %202 = vector.shape_cast %201 : vector<2x1x32xf32> to vector<2x32xf32>
    %203 = arith.mulf %192, %184 : vector<2x32xf32>
    %204 = arith.addf %202, %203 : vector<2x32xf32>
    %205 = math.tanh %204 : vector<2x32xf32>
    %cst_60 = arith.constant 1.000000e+00 : f32
    %206 = vector.broadcast %cst_60 : f32 to vector<2x32xf32>
    %207 = arith.subf %206, %200 : vector<2x32xf32>
    %208 = arith.mulf %207, %205 : vector<2x32xf32>
    %209 = arith.mulf %200, %179 : vector<2x32xf32>
    %210 = arith.addf %208, %209 : vector<2x32xf32>
    %cst_61 = arith.constant dense<0.000000e+00> : vector<2x32xf32>
    %211 = tpu.matmul %210, %20, %cst_61 {dimension_numbers = #tpu.dot_dimension_numbers<[1], [0], [0], [1], [0, 0, 1, 1], [], []>} : vector<2x32xf32>, vector<32x32xf32>, vector<2x32xf32> -> vector<2x32xf32>
    %cst_62 = arith.constant dense<0.000000e+00> : vector<2x32xf32>
    %212 = tpu.matmul %210, %21, %cst_62 {dimension_numbers = #tpu.dot_dimension_numbers<[1], [0], [0], [1], [0, 0, 1, 1], [], []>} : vector<2x32xf32>, vector<32x32xf32>, vector<2x32xf32> -> vector<2x32xf32>
    %cst_63 = arith.constant dense<0.000000e+00> : vector<2x32xf32>
    %213 = tpu.matmul %210, %22, %cst_63 {dimension_numbers = #tpu.dot_dimension_numbers<[1], [0], [0], [1], [0, 0, 1, 1], [], []>} : vector<2x32xf32>, vector<32x32xf32>, vector<2x32xf32> -> vector<2x32xf32>
    %214 = vector.broadcast %23 : vector<1x32xf32> to vector<2x32xf32>
    %215 = arith.addf %213, %214 : vector<2x32xf32>
    %216 = vector.extract_strided_slice %7 {offsets = [0, 6, 0], sizes = [2, 1, 32], strides = [1, 1, 1]} : vector<2x8x32xf32> to vector<2x1x32xf32>
    %217 = vector.shape_cast %216 : vector<2x1x32xf32> to vector<2x32xf32>
    %218 = arith.addf %217, %211 : vector<2x32xf32>
    %219 = arith.negf %218 : vector<2x32xf32>
    %220 = math.exp %219 : vector<2x32xf32>
    %cst_64 = arith.constant 1.000000e+00 : f32
    %221 = vector.broadcast %cst_64 : f32 to vector<2x32xf32>
    %222 = arith.addf %221, %220 : vector<2x32xf32>
    %223 = arith.divf %221, %222 : vector<2x32xf32>
    %224 = vector.extract_strided_slice %13 {offsets = [0, 6, 0], sizes = [2, 1, 32], strides = [1, 1, 1]} : vector<2x8x32xf32> to vector<2x1x32xf32>
    %225 = vector.shape_cast %224 : vector<2x1x32xf32> to vector<2x32xf32>
    %226 = arith.addf %225, %212 : vector<2x32xf32>
    %227 = arith.negf %226 : vector<2x32xf32>
    %228 = math.exp %227 : vector<2x32xf32>
    %cst_65 = arith.constant 1.000000e+00 : f32
    %229 = vector.broadcast %cst_65 : f32 to vector<2x32xf32>
    %230 = arith.addf %229, %228 : vector<2x32xf32>
    %231 = arith.divf %229, %230 : vector<2x32xf32>
    %232 = vector.extract_strided_slice %19 {offsets = [0, 6, 0], sizes = [2, 1, 32], strides = [1, 1, 1]} : vector<2x8x32xf32> to vector<2x1x32xf32>
    %233 = vector.shape_cast %232 : vector<2x1x32xf32> to vector<2x32xf32>
    %234 = arith.mulf %223, %215 : vector<2x32xf32>
    %235 = arith.addf %233, %234 : vector<2x32xf32>
    %236 = math.tanh %235 : vector<2x32xf32>
    %cst_66 = arith.constant 1.000000e+00 : f32
    %237 = vector.broadcast %cst_66 : f32 to vector<2x32xf32>
    %238 = arith.subf %237, %231 : vector<2x32xf32>
    %239 = arith.mulf %238, %236 : vector<2x32xf32>
    %240 = arith.mulf %231, %210 : vector<2x32xf32>
    %241 = arith.addf %239, %240 : vector<2x32xf32>
    %cst_67 = arith.constant dense<0.000000e+00> : vector<2x32xf32>
    %242 = tpu.matmul %241, %20, %cst_67 {dimension_numbers = #tpu.dot_dimension_numbers<[1], [0], [0], [1], [0, 0, 1, 1], [], []>} : vector<2x32xf32>, vector<32x32xf32>, vector<2x32xf32> -> vector<2x32xf32>
    %cst_68 = arith.constant dense<0.000000e+00> : vector<2x32xf32>
    %243 = tpu.matmul %241, %21, %cst_68 {dimension_numbers = #tpu.dot_dimension_numbers<[1], [0], [0], [1], [0, 0, 1, 1], [], []>} : vector<2x32xf32>, vector<32x32xf32>, vector<2x32xf32> -> vector<2x32xf32>
    %cst_69 = arith.constant dense<0.000000e+00> : vector<2x32xf32>
    %244 = tpu.matmul %241, %22, %cst_69 {dimension_numbers = #tpu.dot_dimension_numbers<[1], [0], [0], [1], [0, 0, 1, 1], [], []>} : vector<2x32xf32>, vector<32x32xf32>, vector<2x32xf32> -> vector<2x32xf32>
    %245 = vector.broadcast %23 : vector<1x32xf32> to vector<2x32xf32>
    %246 = arith.addf %244, %245 : vector<2x32xf32>
    %247 = vector.extract_strided_slice %7 {offsets = [0, 7, 0], sizes = [2, 1, 32], strides = [1, 1, 1]} : vector<2x8x32xf32> to vector<2x1x32xf32>
    %248 = vector.shape_cast %247 : vector<2x1x32xf32> to vector<2x32xf32>
    %249 = arith.addf %248, %242 : vector<2x32xf32>
    %250 = arith.negf %249 : vector<2x32xf32>
    %251 = math.exp %250 : vector<2x32xf32>
    %cst_70 = arith.constant 1.000000e+00 : f32
    %252 = vector.broadcast %cst_70 : f32 to vector<2x32xf32>
    %253 = arith.addf %252, %251 : vector<2x32xf32>
    %254 = arith.divf %252, %253 : vector<2x32xf32>
    %255 = vector.extract_strided_slice %13 {offsets = [0, 7, 0], sizes = [2, 1, 32], strides = [1, 1, 1]} : vector<2x8x32xf32> to vector<2x1x32xf32>
    %256 = vector.shape_cast %255 : vector<2x1x32xf32> to vector<2x32xf32>
    %257 = arith.addf %256, %243 : vector<2x32xf32>
    %258 = arith.negf %257 : vector<2x32xf32>
    %259 = math.exp %258 : vector<2x32xf32>
    %cst_71 = arith.constant 1.000000e+00 : f32
    %260 = vector.broadcast %cst_71 : f32 to vector<2x32xf32>
    %261 = arith.addf %260, %259 : vector<2x32xf32>
    %262 = arith.divf %260, %261 : vector<2x32xf32>
    %263 = vector.extract_strided_slice %19 {offsets = [0, 7, 0], sizes = [2, 1, 32], strides = [1, 1, 1]} : vector<2x8x32xf32> to vector<2x1x32xf32>
    %264 = vector.shape_cast %263 : vector<2x1x32xf32> to vector<2x32xf32>
    %265 = arith.mulf %254, %246 : vector<2x32xf32>
    %266 = arith.addf %264, %265 : vector<2x32xf32>
    %267 = math.tanh %266 : vector<2x32xf32>
    %cst_72 = arith.constant 1.000000e+00 : f32
    %268 = vector.broadcast %cst_72 : f32 to vector<2x32xf32>
    %269 = arith.subf %268, %262 : vector<2x32xf32>
    %270 = arith.mulf %269, %267 : vector<2x32xf32>
    %271 = arith.mulf %262, %241 : vector<2x32xf32>
    %272 = arith.addf %270, %271 : vector<2x32xf32>
    %c0_73 = arith.constant 0 : index
    %c0_74 = arith.constant 0 : index
    %273 = vector.load %arg12[%c0_73, %c0_74] : memref<32x8xf32, #tpu.memory_space<vmem>>, vector<32x8xf32>
    %cst_75 = arith.constant dense<0.000000e+00> : vector<2x8xf32>
    %274 = tpu.matmul %272, %273, %cst_75 {dimension_numbers = #tpu.dot_dimension_numbers<[1], [0], [0], [1], [0, 0, 1, 1], [], []>} : vector<2x32xf32>, vector<32x8xf32>, vector<2x8xf32> -> vector<2x8xf32>
    %c0_76 = arith.constant 0 : index
    %c0_77 = arith.constant 0 : index
    %275 = vector.load %arg13[%c0_76, %c0_77] : memref<1x8xf32, #tpu.memory_space<vmem>>, vector<1x8xf32>
    %276 = vector.broadcast %275 : vector<1x8xf32> to vector<2x8xf32>
    %277 = arith.addf %274, %276 : vector<2x8xf32>
    %c0_78 = arith.constant 0 : index
    %c0_79 = arith.constant 0 : index
    %278 = vector.load %arg14[%c0_78, %c0_79] : memref<2x8xf32, #tpu.memory_space<vmem>>, vector<2x8xf32>
    tpu.vector_store %arg14[%c0_78, %c0_79], %277 {strides = array<i32>} : memref<2x8xf32, #tpu.memory_space<vmem>>, vector<2x8xf32>,
    return
  }
  func.func @transform_0(%arg0: i32) -> (i32, i32, i32) {
    %c0_i32 = arith.constant 0 : i32
    %c0_i32_0 = arith.constant 0 : i32
    %c0_i32_1 = arith.constant 0 : i32
    %c0_i32_2 = arith.constant 0 : i32
    return %c0_i32, %c0_i32_0, %c0_i32_1 : i32, i32, i32
  }
  func.func @transform_1(%arg0: i32) -> (i32, i32) {
    %c0_i32 = arith.constant 0 : i32
    %c0_i32_0 = arith.constant 0 : i32
    %c0_i32_1 = arith.constant 0 : i32
    return %c0_i32, %c0_i32_0 : i32, i32
  }
  func.func @transform_2(%arg0: i32) -> (i32, i32) {
    %c0_i32 = arith.constant 0 : i32
    %c0_i32_0 = arith.constant 0 : i32
    %c0_i32_1 = arith.constant 0 : i32
    return %c0_i32, %c0_i32_0 : i32, i32
  }
  func.func @transform_3(%arg0: i32) -> (i32, i32) {
    %c0_i32 = arith.constant 0 : i32
    %c0_i32_0 = arith.constant 0 : i32
    %c0_i32_1 = arith.constant 0 : i32
    return %c0_i32, %c0_i32_0 : i32, i32
  }
  func.func @transform_4(%arg0: i32) -> (i32, i32) {
    %c0_i32 = arith.constant 0 : i32
    %c0_i32_0 = arith.constant 0 : i32
    %c0_i32_1 = arith.constant 0 : i32
    return %c0_i32, %c0_i32_0 : i32, i32
  }
  func.func @transform_5(%arg0: i32) -> (i32, i32) {
    %c0_i32 = arith.constant 0 : i32
    %c0_i32_0 = arith.constant 0 : i32
    %c0_i32_1 = arith.constant 0 : i32
    return %c0_i32, %c0_i32_0 : i32, i32
  }
  func.func @transform_6(%arg0: i32) -> (i32, i32) {
    %c0_i32 = arith.constant 0 : i32
    %c0_i32_0 = arith.constant 0 : i32
    %c0_i32_1 = arith.constant 0 : i32
    return %c0_i32, %c0_i32_0 : i32, i32
  }
  func.func @transform_7(%arg0: i32) -> (i32, i32) {
    %c0_i32 = arith.constant 0 : i32
    %c0_i32_0 = arith.constant 0 : i32
    %c0_i32_1 = arith.constant 0 : i32
    return %c0_i32, %c0_i32_0 : i32, i32
  }
  func.func @transform_8(%arg0: i32) -> (i32, i32) {
    %c0_i32 = arith.constant 0 : i32
    %c0_i32_0 = arith.constant 0 : i32
    %c0_i32_1 = arith.constant 0 : i32
    return %c0_i32, %c0_i32_0 : i32, i32
  }
  func.func @transform_9(%arg0: i32) -> (i32, i32) {
    %c0_i32 = arith.constant 0 : i32
    %c0_i32_0 = arith.constant 0 : i32
    %c0_i32_1 = arith.constant 0 : i32
    return %c0_i32, %c0_i32_0 : i32, i32
  }
  func.func @transform_10(%arg0: i32) -> (i32, i32) {
    %c0_i32 = arith.constant 0 : i32
    %c0_i32_0 = arith.constant 0 : i32
    %c0_i32_1 = arith.constant 0 : i32
    return %c0_i32, %c0_i32_0 : i32, i32
  }
  func.func @transform_11(%arg0: i32) -> (i32, i32) {
    %c0_i32 = arith.constant 0 : i32
    %c0_i32_0 = arith.constant 0 : i32
    %c0_i32_1 = arith.constant 0 : i32
    return %c0_i32, %c0_i32_0 : i32, i32
  }
  func.func @transform_12(%arg0: i32) -> (i32, i32) {
    %c0_i32 = arith.constant 0 : i32
    %c0_i32_0 = arith.constant 0 : i32
    %c0_i32_1 = arith.constant 0 : i32
    return %c0_i32, %c0_i32_0 : i32, i32
  }
  func.func @transform_13(%arg0: i32) -> (i32, i32) {
    %c0_i32 = arith.constant 0 : i32
    %c0_i32_0 = arith.constant 0 : i32
    %c0_i32_1 = arith.constant 0 : i32
    return %c0_i32, %c0_i32_0 : i32, i32
  }
}

</mosaic_0001>

<llo_original>
// kernel: tpu_custom_call.1
$region0: #{tpu_custom_call.1}
  #allocation0 [shape = 'u32[]', space=smem, size = 0x4, offset = 0x4, fixed_abs, tag = 'smem constant byte address 0x4 - core index']
  #allocation1 [shape = 'u32[144,128]{1,0:T(1,128)}', space=vmem, size = 0x12000, scoped, tag = 'internal scratch']
  %s0 = inlined_call_operand.vmem [shape: f32[2,8,4], index: 0, kind: input, shape index: {}]
  %s1 = inlined_call_operand.hbm [shape: f32[4,32], index: 1, kind: input, shape index: {}]
  %s2 = inlined_call_operand.hbm [shape: f32[4,32], index: 2, kind: input, shape index: {}]
  %s3 = inlined_call_operand.hbm [shape: f32[4,32], index: 3, kind: input, shape index: {}]
  %s4 = inlined_call_operand.vmem [shape: f32[32,32], index: 4, kind: input, shape index: {}]
  %s5 = inlined_call_operand.vmem [shape: f32[32,32], index: 5, kind: input, shape index: {}]
  %s6 = inlined_call_operand.hbm [shape: f32[32,32], index: 6, kind: input, shape index: {}]
  %s7 = inlined_call_operand.vmem [shape: f32[1,32], index: 7, kind: input, shape index: {}]
  %s8 = inlined_call_operand.vmem [shape: f32[1,32], index: 8, kind: input, shape index: {}]
  %s9 = inlined_call_operand.vmem [shape: f32[1,32], index: 9, kind: input, shape index: {}]
  %s10 = inlined_call_operand.vmem [shape: f32[1,32], index: 10, kind: input, shape index: {}]
  %s11 = inlined_call_operand.vmem [shape: f32[32,8], index: 11, kind: input, shape index: {}]
  %s12 = inlined_call_operand.vmem [shape: f32[1,8], index: 12, kind: input, shape index: {}]
  %s13 = inlined_call_operand.hbm [shape: f32[2,8], index: 13, kind: output, shape index: {}]
  %s14 = sld [smem:[#allocation0]]
  $region78: #{tpu_custom_call.1} parent=0
    _
  %s16 = ssub.s32 1, %s14
  %s17 = scalar_select 0, %s16, %s14
  $region1: #{tpu_custom_call.1} parent=0
    #allocation2 [shape = 'u8[2048]{0}', space=vmem, size = 0x800, scoped, tag = 'input window, operand 1, single buffered']
    #allocation3 [shape = 's32[1]{0}', space=sflag, size = 0x4, scoped, tag = 'scoped memory for tpu_custom_call.1']
    #allocation4 [shape = 's32[1]{0}', space=sflag, size = 0x4, scoped, tag = 'scoped memory for tpu_custom_call.1']
    #allocation5 [shape = 'u8[2048]{0}', space=vmem, size = 0x800, scoped, tag = 'input window, operand 2, single buffered']
    #allocation6 [shape = 's32[1]{0}', space=sflag, size = 0x4, scoped, tag = 'scoped memory for tpu_custom_call.1']
    #allocation7 [shape = 'u8[2048]{0}', space=vmem, size = 0x800, scoped, tag = 'input window, operand 3, single buffered']
    #allocation8 [shape = 'u8[16384]{0}', space=vmem, size = 0x4000, scoped, tag = 'input window, operand 6, single buffered']
    #allocation9 [shape = 's32[1]{0}', space=sflag, size = 0x4, scoped, tag = 'scoped memory for tpu_custom_call.1']
    #allocation10 [shape = 'u8[1024]{0}', space=vmem, size = 0x400, scoped, tag = 'output window, operand 0, single buffered']
    %18 = vsyncpa [#allocation3], 0
    %19 = vsyncpa [#allocation6], 0
    %20 = vsyncpa [#allocation9], 0
    %21 = vsyncpa [#allocation4], 0
    // Predicated region
    $region2: #{tpu_custom_call.1} parent=1 // pred_check
      _
    $region3: #{tpu_custom_call.1} parent=1 // pred_check_branch
      %23 = sbr.rel (0) target = $region5
    $region4: #{tpu_custom_call.1} parent=1 // pred_region
      _
    $region5: #{tpu_custom_call.1} parent=1 // pred_fallthru
      _
    // Predicated region
    $region6: #{tpu_custom_call.1} parent=1 // pred_check
      _
    $region7: #{tpu_custom_call.1} parent=1 // pred_check_branch
      %25 = sbr.rel (0) target = $region9
    $region8: #{tpu_custom_call.1} parent=1 // pred_region
      %s27 = ssub.s32 64, 64
      %28 = vsyncadd [#allocation3], %s27
      %s30 = sshll.u32 [#allocation2], 4
      %s31 = int_to_ptr.vmem [resolvable:$true] %s30
      %33 = dma.hbm_to_vmem [thread:$0]  %s1, 64, %s31, [#allocation3]
    $region9: #{tpu_custom_call.1} parent=1 // pred_fallthru
      _
    // Predicated region
    $region10: #{tpu_custom_call.1} parent=1 // pred_check
      _
    $region11: #{tpu_custom_call.1} parent=1 // pred_check_branch
      %35 = sbr.rel (0) target = $region13
    $region12: #{tpu_custom_call.1} parent=1 // pred_region
      %s37 = ssub.s32 64, 64
      %38 = vsyncadd [#allocation6], %s37
      %s40 = sshll.u32 [#allocation5], 4
      %s41 = int_to_ptr.vmem [resolvable:$true] %s40
      %43 = dma.hbm_to_vmem [thread:$0]  %s2, 64, %s41, [#allocation6]
    $region13: #{tpu_custom_call.1} parent=1 // pred_fallthru
      _
    // Predicated region
    $region14: #{tpu_custom_call.1} parent=1 // pred_check
      _
    $region15: #{tpu_custom_call.1} parent=1 // pred_check_branch
      %45 = sbr.rel (0) target = $region17
    $region16: #{tpu_custom_call.1} parent=1 // pred_region
      %s47 = ssub.s32 64, 64
      %48 = vsyncadd [#allocation6], %s47
      %s50 = sshll.u32 [#allocation7], 4
      %s51 = int_to_ptr.vmem [resolvable:$true] %s50
      %53 = dma.hbm_to_vmem [thread:$0]  %s3, 64, %s51, [#allocation6]
    $region17: #{tpu_custom_call.1} parent=1 // pred_fallthru
      _
    // Predicated region
    $region18: #{tpu_custom_call.1} parent=1 // pred_check
      _
    $region19: #{tpu_custom_call.1} parent=1 // pred_check_branch
      %55 = sbr.rel (0) target = $region21
    $region20: #{tpu_custom_call.1} parent=1 // pred_region
      _
    $region21: #{tpu_custom_call.1} parent=1 // pred_fallthru
      _
    // Predicated region
    $region22: #{tpu_custom_call.1} parent=1 // pred_check
      _
    $region23: #{tpu_custom_call.1} parent=1 // pred_check_branch
      %57 = sbr.rel (0) target = $region25
    $region24: #{tpu_custom_call.1} parent=1 // pred_region
      _
    $region25: #{tpu_custom_call.1} parent=1 // pred_fallthru
      _
    // Predicated region
    $region26: #{tpu_custom_call.1} parent=1 // pred_check
      _
    $region27: #{tpu_custom_call.1} parent=1 // pred_check_branch
      %59 = sbr.rel (0) target = $region29
    $region28: #{tpu_custom_call.1} parent=1 // pred_region
      %s61 = ssub.s32 512, 512
      %62 = vsyncadd [#allocation9], %s61
      %s63 = sshll.u32 [#allocation8], 4
      %s64 = int_to_ptr.vmem [resolvable:$true] %s63
      %69 = dma.hbm_to_vmem [thread:$0]  %s6, 512, %s64, [#allocation9], 128, 128, 8
    $region29: #{tpu_custom_call.1} parent=1 // pred_fallthru
      _
    // Predicated region
    $region30: #{tpu_custom_call.1} parent=1 // pred_check
      _
    $region31: #{tpu_custom_call.1} parent=1 // pred_check_branch
      %71 = sbr.rel (0) target = $region33
    $region32: #{tpu_custom_call.1} parent=1 // pred_region
      _
    $region33: #{tpu_custom_call.1} parent=1 // pred_fallthru
      _
    // Predicated region
    $region34: #{tpu_custom_call.1} parent=1 // pred_check
      _
    $region35: #{tpu_custom_call.1} parent=1 // pred_check_branch
      %73 = sbr.rel (0) target = $region37
    $region36: #{tpu_custom_call.1} parent=1 // pred_region
      _
    $region37: #{tpu_custom_call.1} parent=1 // pred_fallthru
      _
    // Predicated region
    $region38: #{tpu_custom_call.1} parent=1 // pred_check
      _
    $region39: #{tpu_custom_call.1} parent=1 // pred_check_branch
      %75 = sbr.rel (0) target = $region41
    $region40: #{tpu_custom_call.1} parent=1 // pred_region
      _
    $region41: #{tpu_custom_call.1} parent=1 // pred_fallthru
      _
    // Predicated region
    $region42: #{tpu_custom_call.1} parent=1 // pred_check
      _
    $region43: #{tpu_custom_call.1} parent=1 // pred_check_branch
      %77 = sbr.rel (0) target = $region45
    $region44: #{tpu_custom_call.1} parent=1 // pred_region
      _
    $region45: #{tpu_custom_call.1} parent=1 // pred_fallthru
      _
    // Predicated region
    $region46: #{tpu_custom_call.1} parent=1 // pred_check
      _
    $region47: #{tpu_custom_call.1} parent=1 // pred_check_branch
      %79 = sbr.rel (0) target = $region49
    $region48: #{tpu_custom_call.1} parent=1 // pred_region
      _
    $region49: #{tpu_custom_call.1} parent=1 // pred_fallthru
      _
    // Predicated region
    $region50: #{tpu_custom_call.1} parent=1 // pred_check
      _
    $region51: #{tpu_custom_call.1} parent=1 // pred_check_branch
      %81 = sbr.rel (0) target = $region53
    $region52: #{tpu_custom_call.1} parent=1 // pred_region
      _
    $region53: #{tpu_custom_call.1} parent=1 // pred_fallthru
      _
    // Predicated region
    $region54: #{tpu_custom_call.1} parent=1 // pred_check
      _
    $region55: #{tpu_custom_call.1} parent=1 // pred_check_branch
      %83 = sbr.rel (0) target = $region57
    $region56: #{tpu_custom_call.1} parent=1 // pred_region
      %84 = dma.done [#allocation3], 64
    $region57: #{tpu_custom_call.1} parent=1 // pred_fallthru
      _
    // Predicated region
    $region58: #{tpu_custom_call.1} parent=1 // pred_check
      _
    $region59: #{tpu_custom_call.1} parent=1 // pred_check_branch
      %86 = sbr.rel (0) target = $region61
    $region60: #{tpu_custom_call.1} parent=1 // pred_region
      %87 = dma.done [#allocation6], 64
    $region61: #{tpu_custom_call.1} parent=1 // pred_fallthru
      _
    // Predicated region
    $region62: #{tpu_custom_call.1} parent=1 // pred_check
      _
    $region63: #{tpu_custom_call.1} parent=1 // pred_check_branch
      %89 = sbr.rel (0) target = $region65
    $region64: #{tpu_custom_call.1} parent=1 // pred_region
      %90 = dma.done [#allocation6], 64
    $region65: #{tpu_custom_call.1} parent=1 // pred_fallthru
      _
    // Predicated region
    $region66: #{tpu_custom_call.1} parent=1 // pred_check
      _
    $region67: #{tpu_custom_call.1} parent=1 // pred_check_branch
      %92 = sbr.rel (0) target = $region69
    $region68: #{tpu_custom_call.1} parent=1 // pred_region
      %93 = dma.done [#allocation9], 512
    $region69: #{tpu_custom_call.1} parent=1 // pred_fallthru
      _
    %v94 = vld [vmem:[%s0] sm:$0xff]
    %v95 = vld [vmem:[%s0 + $0x8] sm:$0xff]
    %v96 = vld [vmem:[#allocation2] sm:$0xf]
    %v97 = vld [vmem:[%s7] sm:$0x1]
    %v99 = vlaneseq
    %v100 = vshrl.u32 %v99, 7
    %v101 = vsub.s32 0, %v100
    %v102 = vrot.slane %v97, %v101
    %vm104 = vcmask 31744
    %v106 = vsel %vm104, %v94, 0
    %v109 = vsel %vm104, %v95, 0
    %vm111 = vcmask 1043456
    %v113 = vsel %vm111, %v96, 0
    %115 = vmatprep.subr.mxu0 0.0
    %116 = vmatpush1.msra.mxu0 %v113
    %117 = vmatprep.subr.mxu0 0.0
    %118 = vmatpush1.msra.mxu0 0.0
    %119 = vmatprep.subr.mxu0 0.0
    %120 = vmatpush1.msra.mxu0 0.0
    %121 = vmatprep.subr.mxu0 0.0
    %122 = vmatpush1.msra.mxu0 0.0
    %123 = vmatprep.subr.mxu0 0.0
    %124 = vmatpush1.msra.mxu0 0.0
    %125 = vmatprep.subr.mxu0 0.0
    %126 = vmatpush1.msra.mxu0 0.0
    %127 = vmatprep.subr.mxu0 0.0
    %128 = vmatpush1.msra.mxu0 0.0
    %129 = vmatprep.subr.mxu0 0.0
    %130 = vmatpush1.msra.mxu0 0.0
    %131 = vmatprep.subr.mxu0 0.0
    %132 = vmatpush1.msra.mxu0 0.0
    %133 = vmatprep.subr.mxu0 0.0
    %134 = vmatpush1.msra.mxu0 0.0
    %135 = vmatprep.subr.mxu0 0.0
    %136 = vmatpush1.msra.mxu0 0.0
    %137 = vmatprep.subr.mxu0 0.0
    %138 = vmatpush1.msra.mxu0 0.0
    %139 = vmatprep.subr.mxu0 0.0
    %140 = vmatpush1.msra.mxu0 0.0
    %141 = vmatprep.subr.mxu0 0.0
    %142 = vmatpush1.msra.mxu0 0.0
    %143 = vmatprep.subr.mxu0 0.0
    %144 = vmatpush1.msra.mxu0 0.0
    %145 = vmatprep.subr.mxu0 0.0
    %146 = vmatpush1.msra.mxu0 0.0
    %147 = vmatprep.subr.mxu0 0.0
    %148 = vmatpush1.msra.mxu0 0.0
    %149 = vmatprep.subr.mxu0 0.0
    %150 = vmatpush1.msra.mxu0 0.0
    %151 = vmatprep.subr.mxu0 0.0
    %152 = vmatpush1.msra.mxu0 0.0
    %153 = vmatprep.subr.mxu0 0.0
    %154 = vmatpush1.msra.mxu0 0.0
    %155 = vmatprep.subr.mxu0 0.0
    %156 = vmatpush1.msra.mxu0 0.0
    %157 = vmatprep.subr.mxu0 0.0
    %158 = vmatpush1.msra.mxu0 0.0
    %159 = vmatprep.subr.mxu0 0.0
    %160 = vmatpush1.msra.mxu0 0.0
    %161 = vmatprep.subr.mxu0 0.0
    %162 = vmatpush1.msra.mxu0 0.0
    %163 = vmatprep.subr.mxu0 0.0
    %164 = vmatpush1.msra.mxu0 0.0
    %165 = vmatprep.subr.mxu0 0.0
    %166 = vmatpush1.msra.mxu0 0.0
    %167 = vmatprep.subr.mxu0 0.0
    %168 = vmatpush1.msra.mxu0 0.0
    %169 = vmatprep.subr.mxu0 0.0
    %170 = vmatpush1.msra.mxu0 0.0
    %171 = vmatprep.subr.mxu0 0.0
    %172 = vmatpush1.msra.mxu0 0.0
    %173 = vmatprep.subr.mxu0 0.0
    %174 = vmatpush1.msra.mxu0 0.0
    %175 = vmatprep.subr.mxu0 0.0
    %176 = vmatpush1.msra.mxu0 0.0
    %177 = vmatprep.subr.mxu0 0.0
    %178 = vmatpush1.msra.mxu0 0.0
    %179 = vmatprep.mubr.f32.mxu0 0.0
    %180 = vmatmul.mubr.f32.gmra.mrb[0].mxu0 %v106
    %v181 = vpop.f32.mrb[0].mxu0
    %v182 = vadd.f32 %v102, %v181
    %v183 = vpop.f32.mrb[0].mxu0
    %184 = vmatprep.mubr.f32.mxu0 0.0
    %185 = vmatmul.mubr.f32.gmra.mrb[0].mxu0 %v109
    %v186 = vpop.f32.mrb[0].mxu0
    %v187 = vadd.f32 %v102, %v186
    %v188 = vpop.f32.mrb[0].mxu0
    %189 = vdwg.mxu0
    %v190 = vld [vmem:[#allocation5] sm:$0xf]
    %v191 = vld [vmem:[%s8] sm:$0x1]
    %v193 = vlaneseq
    %v194 = vshrl.u32 %v193, 7
    %v195 = vsub.s32 0, %v194
    %v196 = vrot.slane %v191, %v195
    %v199 = vsel %vm111, %v190, 0
    %201 = vmatprep.subr.mxu0 0.0
    %202 = vmatpush1.msra.mxu0 %v199
    %203 = vmatprep.subr.mxu0 0.0
    %204 = vmatpush1.msra.mxu0 0.0
    %205 = vmatprep.subr.mxu0 0.0
    %206 = vmatpush1.msra.mxu0 0.0
    %207 = vmatprep.subr.mxu0 0.0
    %208 = vmatpush1.msra.mxu0 0.0
    %209 = vmatprep.subr.mxu0 0.0
    %210 = vmatpush1.msra.mxu0 0.0
    %211 = vmatprep.subr.mxu0 0.0
    %212 = vmatpush1.msra.mxu0 0.0
    %213 = vmatprep.subr.mxu0 0.0
    %214 = vmatpush1.msra.mxu0 0.0
    %215 = vmatprep.subr.mxu0 0.0
    %216 = vmatpush1.msra.mxu0 0.0
    %217 = vmatprep.subr.mxu0 0.0
    %218 = vmatpush1.msra.mxu0 0.0
    %219 = vmatprep.subr.mxu0 0.0
    %220 = vmatpush1.msra.mxu0 0.0
    %221 = vmatprep.subr.mxu0 0.0
    %222 = vmatpush1.msra.mxu0 0.0
    %223 = vmatprep.subr.mxu0 0.0
    %224 = vmatpush1.msra.mxu0 0.0
    %225 = vmatprep.subr.mxu0 0.0
    %226 = vmatpush1.msra.mxu0 0.0
    %227 = vmatprep.subr.mxu0 0.0
    %228 = vmatpush1.msra.mxu0 0.0
    %229 = vmatprep.subr.mxu0 0.0
    %230 = vmatpush1.msra.mxu0 0.0
    %231 = vmatprep.subr.mxu0 0.0
    %232 = vmatpush1.msra.mxu0 0.0
    %233 = vmatprep.subr.mxu0 0.0
    %234 = vmatpush1.msra.mxu0 0.0
    %235 = vmatprep.subr.mxu0 0.0
    %236 = vmatpush1.msra.mxu0 0.0
    %237 = vmatprep.subr.mxu0 0.0
    %238 = vmatpush1.msra.mxu0 0.0
    %239 = vmatprep.subr.mxu0 0.0
    %240 = vmatpush1.msra.mxu0 0.0
    %241 = vmatprep.subr.mxu0 0.0
    %242 = vmatpush1.msra.mxu0 0.0
    %243 = vmatprep.subr.mxu0 0.0
    %244 = vmatpush1.msra.mxu0 0.0
    %245 = vmatprep.subr.mxu0 0.0
    %246 = vmatpush1.msra.mxu0 0.0
    %247 = vmatprep.subr.mxu0 0.0
    %248 = vmatpush1.msra.mxu0 0.0
    %249 = vmatprep.subr.mxu0 0.0
    %250 = vmatpush1.msra.mxu0 0.0
    %251 = vmatprep.subr.mxu0 0.0
    %252 = vmatpush1.msra.mxu0 0.0
    %253 = vmatprep.subr.mxu0 0.0
    %254 = vmatpush1.msra.mxu0 0.0
    %255 = vmatprep.subr.mxu0 0.0
    %256 = vmatpush1.msra.mxu0 0.0
    %257 = vmatprep.subr.mxu0 0.0
    %258 = vmatpush1.msra.mxu0 0.0
    %259 = vmatprep.subr.mxu0 0.0
    %260 = vmatpush1.msra.mxu0 0.0
    %261 = vmatprep.subr.mxu0 0.0
    %262 = vmatpush1.msra.mxu0 0.0
    %263 = vmatprep.subr.mxu0 0.0
    %264 = vmatpush1.msra.mxu0 0.0
    %265 = vmatprep.mubr.f32.mxu0 0.0
    %266 = vmatmul.mubr.f32.gmra.mrb[0].mxu0 %v106
    %v267 = vpop.f32.mrb[0].mxu0
    %v268 = vadd.f32 %v196, %v267
    %v269 = vpop.f32.mrb[0].mxu0
    %270 = vmatprep.mubr.f32.mxu0 0.0
    %271 = vmatmul.mubr.f32.gmra.mrb[0].mxu0 %v109
    %v272 = vpop.f32.mrb[0].mxu0
    %v273 = vadd.f32 %v196, %v272
    %v274 = vpop.f32.mrb[0].mxu0
    %275 = vdwg.mxu0
    %v276 = vld [vmem:[#allocation7] sm:$0xf]
    %v277 = vld [vmem:[%s9] sm:$0x1]
    %v279 = vlaneseq
    %v280 = vshrl.u32 %v279, 7
    %v281 = vsub.s32 0, %v280
    %v282 = vrot.slane %v277, %v281
    %v285 = vsel %vm111, %v276, 0
    %287 = vmatprep.subr.mxu0 0.0
    %288 = vmatpush1.msra.mxu0 %v285
    %289 = vmatprep.subr.mxu0 0.0
    %290 = vmatpush1.msra.mxu0 0.0
    %291 = vmatprep.subr.mxu0 0.0
    %292 = vmatpush1.msra.mxu0 0.0
    %293 = vmatprep.subr.mxu0 0.0
    %294 = vmatpush1.msra.mxu0 0.0
    %295 = vmatprep.subr.mxu0 0.0
    %296 = vmatpush1.msra.mxu0 0.0
    %297 = vmatprep.subr.mxu0 0.0
    %298 = vmatpush1.msra.mxu0 0.0
    %299 = vmatprep.subr.mxu0 0.0
    %300 = vmatpush1.msra.mxu0 0.0
    %301 = vmatprep.subr.mxu0 0.0
    %302 = vmatpush1.msra.mxu0 0.0
    %303 = vmatprep.subr.mxu0 0.0
    %304 = vmatpush1.msra.mxu0 0.0
    %305 = vmatprep.subr.mxu0 0.0
    %306 = vmatpush1.msra.mxu0 0.0
    %307 = vmatprep.subr.mxu0 0.0
    %308 = vmatpush1.msra.mxu0 0.0
    %309 = vmatprep.subr.mxu0 0.0
    %310 = vmatpush1.msra.mxu0 0.0
    %311 = vmatprep.subr.mxu0 0.0
    %312 = vmatpush1.msra.mxu0 0.0
    %313 = vmatprep.subr.mxu0 0.0
    %314 = vmatpush1.msra.mxu0 0.0
    %315 = vmatprep.subr.mxu0 0.0
    %316 = vmatpush1.msra.mxu0 0.0
    %317 = vmatprep.subr.mxu0 0.0
    %318 = vmatpush1.msra.mxu0 0.0
    %319 = vmatprep.subr.mxu0 0.0
    %320 = vmatpush1.msra.mxu0 0.0
    %321 = vmatprep.subr.mxu0 0.0
    %322 = vmatpush1.msra.mxu0 0.0
    %323 = vmatprep.subr.mxu0 0.0
    %324 = vmatpush1.msra.mxu0 0.0
    %325 = vmatprep.subr.mxu0 0.0
    %326 = vmatpush1.msra.mxu0 0.0
    %327 = vmatprep.subr.mxu0 0.0
    %328 = vmatpush1.msra.mxu0 0.0
    %329 = vmatprep.subr.mxu0 0.0
    %330 = vmatpush1.msra.mxu0 0.0
    %331 = vmatprep.subr.mxu0 0.0
    %332 = vmatpush1.msra.mxu0 0.0
    %333 = vmatprep.subr.mxu0 0.0
    %334 = vmatpush1.msra.mxu0 0.0
    %335 = vmatprep.subr.mxu0 0.0
    %336 = vmatpush1.msra.mxu0 0.0
    %337 = vmatprep.subr.mxu0 0.0
    %338 = vmatpush1.msra.mxu0 0.0
    %339 = vmatprep.subr.mxu0 0.0
    %340 = vmatpush1.msra.mxu0 0.0
    %341 = vmatprep.subr.mxu0 0.0
    %342 = vmatpush1.msra.mxu0 0.0
    %343 = vmatprep.subr.mxu0 0.0
    %344 = vmatpush1.msra.mxu0 0.0
    %345 = vmatprep.subr.mxu0 0.0
    %346 = vmatpush1.msra.mxu0 0.0
    %347 = vmatprep.subr.mxu0 0.0
    %348 = vmatpush1.msra.mxu0 0.0
    %349 = vmatprep.subr.mxu0 0.0
    %350 = vmatpush1.msra.mxu0 0.0
    %351 = vmatprep.mubr.f32.mxu0 0.0
    %352 = vmatmul.mubr.f32.gmra.mrb[0].mxu0 %v106
    %v353 = vpop.f32.mrb[0].mxu0
    %v354 = vadd.f32 %v282, %v353
    %v355 = vpop.f32.mrb[0].mxu0
    %356 = vmatprep.mubr.f32.mxu0 0.0
    %357 = vmatmul.mubr.f32.gmra.mrb[0].mxu0 %v109
    %v358 = vpop.f32.mrb[0].mxu0
    %v359 = vadd.f32 %v282, %v358
    %v360 = vpop.f32.mrb[0].mxu0
    %361 = vdwg.mxu0
    %v362 = vld [vmem:[%s4] sm:$0xff]
    %v363 = vld [vmem:[%s4 + $0x8] sm:$0xff]
    %v364 = vld [vmem:[%s4 + $0x10] sm:$0xff]
    %v365 = vld [vmem:[%s4 + $0x18] sm:$0xff]
    %v366 = vld [vmem:[%s5] sm:$0xff]
    %v367 = vld [vmem:[%s5 + $0x8] sm:$0xff]
    %v368 = vld [vmem:[%s5 + $0x10] sm:$0xff]
    %v369 = vld [vmem:[%s5 + $0x18] sm:$0xff]
    %v370 = vld [vmem:[#allocation8] sm:$0xff]
    %v371 = vld [vmem:[#allocation8 + $0x8] sm:$0xff]
    %v372 = vld [vmem:[#allocation8 + $0x10] sm:$0xff]
    %v373 = vld [vmem:[#allocation8 + $0x18] sm:$0xff]
    %v374 = vld [vmem:[%s10] sm:$0x1]
    %vm375 = vcmask 261120
    %v377 = vsel %vm375, 0.0, 0
    %379 = vmatprep.subr.mxu0 0.0
    %380 = vmatpush1.msra.mxu0 %v362
    %381 = vmatprep.subr.mxu0 0.0
    %382 = vmatpush1.msra.mxu0 %v363
    %383 = vmatprep.subr.mxu0 0.0
    %384 = vmatpush1.msra.mxu0 %v364
    %385 = vmatprep.subr.mxu0 0.0
    %386 = vmatpush1.msra.mxu0 %v365
    %387 = vmatprep.subr.mxu0 0.0
    %388 = vmatpush1.msra.mxu0 0.0
    %389 = vmatprep.subr.mxu0 0.0
    %390 = vmatpush1.msra.mxu0 0.0
    %391 = vmatprep.subr.mxu0 0.0
    %392 = vmatpush1.msra.mxu0 0.0
    %393 = vmatprep.subr.mxu0 0.0
    %394 = vmatpush1.msra.mxu0 0.0
    %395 = vmatprep.subr.mxu0 0.0
    %396 = vmatpush1.msra.mxu0 0.0
    %397 = vmatprep.subr.mxu0 0.0
    %398 = vmatpush1.msra.mxu0 0.0
    %399 = vmatprep.subr.mxu0 0.0
    %400 = vmatpush1.msra.mxu0 0.0
    %401 = vmatprep.subr.mxu0 0.0
    %402 = vmatpush1.msra.mxu0 0.0
    %403 = vmatprep.subr.mxu0 0.0
    %404 = vmatpush1.msra.mxu0 0.0
    %405 = vmatprep.subr.mxu0 0.0
    %406 = vmatpush1.msra.mxu0 0.0
    %407 = vmatprep.subr.mxu0 0.0
    %408 = vmatpush1.msra.mxu0 0.0
    %409 = vmatprep.subr.mxu0 0.0
    %410 = vmatpush1.msra.mxu0 0.0
    %411 = vmatprep.subr.mxu0 0.0
    %412 = vmatpush1.msra.mxu0 0.0
    %413 = vmatprep.subr.mxu0 0.0
    %414 = vmatpush1.msra.mxu0 0.0
    %415 = vmatprep.subr.mxu0 0.0
    %416 = vmatpush1.msra.mxu0 0.0
    %417 = vmatprep.subr.mxu0 0.0
    %418 = vmatpush1.msra.mxu0 0.0
    %419 = vmatprep.subr.mxu0 0.0
    %420 = vmatpush1.msra.mxu0 0.0
    %421 = vmatprep.subr.mxu0 0.0
    %422 = vmatpush1.msra.mxu0 0.0
    %423 = vmatprep.subr.mxu0 0.0
    %424 = vmatpush1.msra.mxu0 0.0
    %425 = vmatprep.subr.mxu0 0.0
    %426 = vmatpush1.msra.mxu0 0.0
    %427 = vmatprep.subr.mxu0 0.0
    %428 = vmatpush1.msra.mxu0 0.0
    %429 = vmatprep.subr.mxu0 0.0
    %430 = vmatpush1.msra.mxu0 0.0
    %431 = vmatprep.subr.mxu0 0.0
    %432 = vmatpush1.msra.mxu0 0.0
    %433 = vmatprep.subr.mxu0 0.0
    %434 = vmatpush1.msra.mxu0 0.0
    %435 = vmatprep.subr.mxu0 0.0
    %436 = vmatpush1.msra.mxu0 0.0
    %437 = vmatprep.subr.mxu0 0.0
    %438 = vmatpush1.msra.mxu0 0.0
    %439 = vmatprep.subr.mxu0 0.0
    %440 = vmatpush1.msra.mxu0 0.0
    %441 = vmatprep.subr.mxu0 0.0
    %442 = vmatpush1.msra.mxu0 0.0
    %443 = vmatprep.mubr.f32.mxu0 0.0
    %444 = vmatmul.mubr.f32.gmra.mrb[0].mxu0 %v377
    %v445 = vpop.f32.mrb[0].mxu0
    %v446 = vadd.f32 0.0, %v445
    %v447 = vpop.f32.mrb[0].mxu0
    %448 = vdwg.mxu0
    %449 = vmatprep.subr.mxu0 0.0
    %450 = vmatpush1.msra.mxu0 %v366
    %451 = vmatprep.subr.mxu0 0.0
    %452 = vmatpush1.msra.mxu0 %v367
    %453 = vmatprep.subr.mxu0 0.0
    %454 = vmatpush1.msra.mxu0 %v368
    %455 = vmatprep.subr.mxu0 0.0
    %456 = vmatpush1.msra.mxu0 %v369
    %457 = vmatprep.subr.mxu0 0.0
    %458 = vmatpush1.msra.mxu0 0.0
    %459 = vmatprep.subr.mxu0 0.0
    %460 = vmatpush1.msra.mxu0 0.0
    %461 = vmatprep.subr.mxu0 0.0
    %462 = vmatpush1.msra.mxu0 0.0
    %463 = vmatprep.subr.mxu0 0.0
    %464 = vmatpush1.msra.mxu0 0.0
    %465 = vmatprep.subr.mxu0 0.0
    %466 = vmatpush1.msra.mxu0 0.0
    %467 = vmatprep.subr.mxu0 0.0
    %468 = vmatpush1.msra.mxu0 0.0
    %469 = vmatprep.subr.mxu0 0.0
    %470 = vmatpush1.msra.mxu0 0.0
    %471 = vmatprep.subr.mxu0 0.0
    %472 = vmatpush1.msra.mxu0 0.0
    %473 = vmatprep.subr.mxu0 0.0
    %474 = vmatpush1.msra.mxu0 0.0
    %475 = vmatprep.subr.mxu0 0.0
    %476 = vmatpush1.msra.mxu0 0.0
    %477 = vmatprep.subr.mxu0 0.0
    %478 = vmatpush1.msra.mxu0 0.0
    %479 = vmatprep.subr.mxu0 0.0
    %480 = vmatpush1.msra.mxu0 0.0
    %481 = vmatprep.subr.mxu0 0.0
    %482 = vmatpush1.msra.mxu0 0.0
    %483 = vmatprep.subr.mxu0 0.0
    %484 = vmatpush1.msra.mxu0 0.0
    %485 = vmatprep.subr.mxu0 0.0
    %486 = vmatpush1.msra.mxu0 0.0
    %487 = vmatprep.subr.mxu0 0.0
    %488 = vmatpush1.msra.mxu0 0.0
    %489 = vmatprep.subr.mxu0 0.0
    %490 = vmatpush1.msra.mxu0 0.0
    %491 = vmatprep.subr.mxu0 0.0
    %492 = vmatpush1.msra.mxu0 0.0
    %493 = vmatprep.subr.mxu0 0.0
    %494 = vmatpush1.msra.mxu0 0.0
    %495 = vmatprep.subr.mxu0 0.0
    %496 = vmatpush1.msra.mxu0 0.0
    %497 = vmatprep.subr.mxu0 0.0
    %498 = vmatpush1.msra.mxu0 0.0
    %499 = vmatprep.subr.mxu0 0.0
    %500 = vmatpush1.msra.mxu0 0.0
    %501 = vmatprep.subr.mxu0 0.0
    %502 = vmatpush1.msra.mxu0 0.0
    %503 = vmatprep.subr.mxu0 0.0
    %504 = vmatpush1.msra.mxu0 0.0
    %505 = vmatprep.subr.mxu0 0.0
    %506 = vmatpush1.msra.mxu0 0.0
    %507 = vmatprep.subr.mxu0 0.0
    %508 = vmatpush1.msra.mxu0 0.0
    %509 = vmatprep.subr.mxu0 0.0
    %510 = vmatpush1.msra.mxu0 0.0
    %511 = vmatprep.subr.mxu0 0.0
    %512 = vmatpush1.msra.mxu0 0.0
    %513 = vmatprep.mubr.f32.mxu0 0.0
    %514 = vmatmul.mubr.f32.gmra.mrb[0].mxu0 %v377
    %v515 = vpop.f32.mrb[0].mxu0
    %v516 = vadd.f32 0.0, %v515
    %v517 = vpop.f32.mrb[0].mxu0
    %518 = vdwg.mxu0
    %v520 = vlaneseq
    %v521 = vshrl.u32 %v520, 7
    %v522 = vsub.s32 0, %v521
    %v523 = vrot.slane %v374, %v522
    %525 = vmatprep.subr.mxu0 0.0
    %526 = vmatpush1.msra.mxu0 %v370
    %527 = vmatprep.subr.mxu0 0.0
    %528 = vmatpush1.msra.mxu0 %v371
    %529 = vmatprep.subr.mxu0 0.0
    %530 = vmatpush1.msra.mxu0 %v372
    %531 = vmatprep.subr.mxu0 0.0
    %532 = vmatpush1.msra.mxu0 %v373
    %533 = vmatprep.subr.mxu0 0.0
    %534 = vmatpush1.msra.mxu0 0.0
    %535 = vmatprep.subr.mxu0 0.0
    %536 = vmatpush1.msra.mxu0 0.0
    %537 = vmatprep.subr.mxu0 0.0
    %538 = vmatpush1.msra.mxu0 0.0
    %539 = vmatprep.subr.mxu0 0.0
    %540 = vmatpush1.msra.mxu0 0.0
    %541 = vmatprep.subr.mxu0 0.0
    %542 = vmatpush1.msra.mxu0 0.0
    %543 = vmatprep.subr.mxu0 0.0
    %544 = vmatpush1.msra.mxu0 0.0
    %545 = vmatprep.subr.mxu0 0.0
    %546 = vmatpush1.msra.mxu0 0.0
    %547 = vmatprep.subr.mxu0 0.0
    %548 = vmatpush1.msra.mxu0 0.0
    %549 = vmatprep.subr.mxu0 0.0
    %550 = vmatpush1.msra.mxu0 0.0
    %551 = vmatprep.subr.mxu0 0.0
    %552 = vmatpush1.msra.mxu0 0.0
    %553 = vmatprep.subr.mxu0 0.0
    %554 = vmatpush1.msra.mxu0 0.0
    %555 = vmatprep.subr.mxu0 0.0
    %556 = vmatpush1.msra.mxu0 0.0
    %557 = vmatprep.subr.mxu0 0.0
    %558 = vmatpush1.msra.mxu0 0.0
    %559 = vmatprep.subr.mxu0 0.0
    %560 = vmatpush1.msra.mxu0 0.0
    %561 = vmatprep.subr.mxu0 0.0
    %562 = vmatpush1.msra.mxu0 0.0
    %563 = vmatprep.subr.mxu0 0.0
    %564 = vmatpush1.msra.mxu0 0.0
    %565 = vmatprep.subr.mxu0 0.0
    %566 = vmatpush1.msra.mxu0 0.0
    %567 = vmatprep.subr.mxu0 0.0
    %568 = vmatpush1.msra.mxu0 0.0
    %569 = vmatprep.subr.mxu0 0.0
    %570 = vmatpush1.msra.mxu0 0.0
    %571 = vmatprep.subr.mxu0 0.0
    %572 = vmatpush1.msra.mxu0 0.0
    %573 = vmatprep.subr.mxu0 0.0
    %574 = vmatpush1.msra.mxu0 0.0
    %575 = vmatprep.subr.mxu0 0.0
    %576 = vmatpush1.msra.mxu0 0.0
    %577 = vmatprep.subr.mxu0 0.0
    %578 = vmatpush1.msra.mxu0 0.0
    %579 = vmatprep.subr.mxu0 0.0
    %580 = vmatpush1.msra.mxu0 0.0
    %581 = vmatprep.subr.mxu0 0.0
    %582 = vmatpush1.msra.mxu0 0.0
    %583 = vmatprep.subr.mxu0 0.0
    %584 = vmatpush1.msra.mxu0 0.0
    %585 = vmatprep.subr.mxu0 0.0
    %586 = vmatpush1.msra.mxu0 0.0
    %587 = vmatprep.subr.mxu0 0.0
    %588 = vmatpush1.msra.mxu0 0.0
    %589 = vmatprep.mubr.f32.mxu0 0.0
    %590 = vmatmul.mubr.f32.gmra.mrb[0].mxu0 %v377
    %v591 = vpop.f32.mrb[0].mxu0
    %v592 = vadd.f32 %v523, %v591
    %v593 = vpop.f32.mrb[0].mxu0
    %594 = vdwg.mxu0
    %v596 = vrot.slane %v446, 1
    %v599 = vadd.f32 %v182, %v446
    %v600 = vadd.f32 %v187, %v596
    %v601 = vxor.u32 %v599, 2147483648
    %v602 = vxor.u32 %v600, 2147483648
    %v603 = vmul.f32 %v601, 1.442695
    %v604 = vpow.pop %v603
    %v605 = vmul.f32 %v602, 1.442695
    %v606 = vpow.pop %v605
    %v607 = vadd.f32 %v604, 1.0
    %v608 = vadd.f32 %v606, 1.0
    %v609 = vrcp.pop %v607
    %v610 = vmul.f32 1.0, %v609
    %v611 = vrcp.pop %v608
    %v612 = vmul.f32 1.0, %v611
    %v614 = vrot.slane %v516, 1
    %v617 = vadd.f32 %v268, %v516
    %v618 = vadd.f32 %v273, %v614
    %v619 = vxor.u32 %v617, 2147483648
    %v620 = vxor.u32 %v618, 2147483648
    %v621 = vmul.f32 %v619, 1.442695
    %v622 = vpow.pop %v621
    %v623 = vmul.f32 %v620, 1.442695
    %v624 = vpow.pop %v623
    %v625 = vadd.f32 %v622, 1.0
    %v626 = vadd.f32 %v624, 1.0
    %v627 = vrcp.pop %v625
    %v628 = vmul.f32 1.0, %v627
    %v629 = vrcp.pop %v626
    %v630 = vmul.f32 1.0, %v629
    %v632 = vrot.slane %v592, 1
    %v635 = vmul.f32 %v610, %v592
    %v636 = vmul.f32 %v612, %v632
    %v637 = vadd.f32 %v354, %v635
    %v638 = vadd.f32 %v359, %v636
    %v639 = vtanh.pop %v637
    %v640 = vtanh.pop %v638
    %v641 = vsub.f32 1.0, %v628
    %v642 = vsub.f32 1.0, %v630
    %v643 = vmul.f32 %v641, %v639
    %v644 = vmul.f32 %v642, %v640
    %v645 = vmul.f32 %v628, 0.0
    %v646 = vmul.f32 %v630, 0.0
    %v647 = vadd.f32 %v643, %v645
    %v648 = vadd.f32 %v644, %v646
    %v651 = vrot.slane %v648, 7
    %vm652 = vcmask 1041409
    %v653 = vsel %vm652, %v651, %v647
    %v654 = vsel %vm375, %v653, 0
    %656 = vmatprep.subr.mxu0 0.0
    %657 = vmatpush1.msra.mxu0 %v362
    %658 = vmatprep.subr.mxu0 0.0
    %659 = vmatpush1.msra.mxu0 %v363
    %660 = vmatprep.subr.mxu0 0.0
    %661 = vmatpush1.msra.mxu0 %v364
    %662 = vmatprep.subr.mxu0 0.0
    %663 = vmatpush1.msra.mxu0 %v365
    %664 = vmatprep.subr.mxu0 0.0
    %665 = vmatpush1.msra.mxu0 0.0
    %666 = vmatprep.subr.mxu0 0.0
    %667 = vmatpush1.msra.mxu0 0.0
    %668 = vmatprep.subr.mxu0 0.0
    %669 = vmatpush1.msra.mxu0 0.0
    %670 = vmatprep.subr.mxu0 0.0
    %671 = vmatpush1.msra.mxu0 0.0
    %672 = vmatprep.subr.mxu0 0.0
    %673 = vmatpush1.msra.mxu0 0.0
    %674 = vmatprep.subr.mxu0 0.0
    %675 = vmatpush1.msra.mxu0 0.0
    %676 = vmatprep.subr.mxu0 0.0
    %677 = vmatpush1.msra.mxu0 0.0
    %678 = vmatprep.subr.mxu0 0.0
    %679 = vmatpush1.msra.mxu0 0.0
    %680 = vmatprep.subr.mxu0 0.0
    %681 = vmatpush1.msra.mxu0 0.0
    %682 = vmatprep.subr.mxu0 0.0
    %683 = vmatpush1.msra.mxu0 0.0
    %684 = vmatprep.subr.mxu0 0.0
    %685 = vmatpush1.msra.mxu0 0.0
    %686 = vmatprep.subr.mxu0 0.0
    %687 = vmatpush1.msra.mxu0 0.0
    %688 = vmatprep.subr.mxu0 0.0
    %689 = vmatpush1.msra.mxu0 0.0
    %690 = vmatprep.subr.mxu0 0.0
    %691 = vmatpush1.msra.mxu0 0.0
    %692 = vmatprep.subr.mxu0 0.0
    %693 = vmatpush1.msra.mxu0 0.0
    %694 = vmatprep.subr.mxu0 0.0
    %695 = vmatpush1.msra.mxu0 0.0
    %696 = vmatprep.subr.mxu0 0.0
    %697 = vmatpush1.msra.mxu0 0.0
    %698 = vmatprep.subr.mxu0 0.0
    %699 = vmatpush1.msra.mxu0 0.0
    %700 = vmatprep.subr.mxu0 0.0
    %701 = vmatpush1.msra.mxu0 0.0
    %702 = vmatprep.subr.mxu0 0.0
    %703 = vmatpush1.msra.mxu0 0.0
    %704 = vmatprep.subr.mxu0 0.0
    %705 = vmatpush1.msra.mxu0 0.0
    %706 = vmatprep.subr.mxu0 0.0
    %707 = vmatpush1.msra.mxu0 0.0
    %708 = vmatprep.subr.mxu0 0.0
    %709 = vmatpush1.msra.mxu0 0.0
    %710 = vmatprep.subr.mxu0 0.0
    %711 = vmatpush1.msra.mxu0 0.0
    %712 = vmatprep.subr.mxu0 0.0
    %713 = vmatpush1.msra.mxu0 0.0
    %714 = vmatprep.subr.mxu0 0.0
    %715 = vmatpush1.msra.mxu0 0.0
    %716 = vmatprep.subr.mxu0 0.0
    %717 = vmatpush1.msra.mxu0 0.0
    %718 = vmatprep.subr.mxu0 0.0
    %719 = vmatpush1.msra.mxu0 0.0
    %720 = vmatprep.mubr.f32.mxu0 0.0
    %721 = vmatmul.mubr.f32.gmra.mrb[0].mxu0 %v654
    %v722 = vpop.f32.mrb[0].mxu0
    %v723 = vadd.f32 0.0, %v722
    %v724 = vpop.f32.mrb[0].mxu0
    %725 = vdwg.mxu0
    %726 = vmatprep.subr.mxu0 0.0
    %727 = vmatpush1.msra.mxu0 %v366
    %728 = vmatprep.subr.mxu0 0.0
    %729 = vmatpush1.msra.mxu0 %v367
    %730 = vmatprep.subr.mxu0 0.0
    %731 = vmatpush1.msra.mxu0 %v368
    %732 = vmatprep.subr.mxu0 0.0
    %733 = vmatpush1.msra.mxu0 %v369
    %734 = vmatprep.subr.mxu0 0.0
    %735 = vmatpush1.msra.mxu0 0.0
    %736 = vmatprep.subr.mxu0 0.0
    %737 = vmatpush1.msra.mxu0 0.0
    %738 = vmatprep.subr.mxu0 0.0
    %739 = vmatpush1.msra.mxu0 0.0
    %740 = vmatprep.subr.mxu0 0.0
    %741 = vmatpush1.msra.mxu0 0.0
    %742 = vmatprep.subr.mxu0 0.0
    %743 = vmatpush1.msra.mxu0 0.0
    %744 = vmatprep.subr.mxu0 0.0
    %745 = vmatpush1.msra.mxu0 0.0
    %746 = vmatprep.subr.mxu0 0.0
    %747 = vmatpush1.msra.mxu0 0.0
    %748 = vmatprep.subr.mxu0 0.0
    %749 = vmatpush1.msra.mxu0 0.0
    %750 = vmatprep.subr.mxu0 0.0
    %751 = vmatpush1.msra.mxu0 0.0
    %752 = vmatprep.subr.mxu0 0.0
    %753 = vmatpush1.msra.mxu0 0.0
    %754 = vmatprep.subr.mxu0 0.0
    %755 = vmatpush1.msra.mxu0 0.0
    %756 = vmatprep.subr.mxu0 0.0
    %757 = vmatpush1.msra.mxu0 0.0
    %758 = vmatprep.subr.mxu0 0.0
    %759 = vmatpush1.msra.mxu0 0.0
    %760 = vmatprep.subr.mxu0 0.0
    %761 = vmatpush1.msra.mxu0 0.0
    %762 = vmatprep.subr.mxu0 0.0
    %763 = vmatpush1.msra.mxu0 0.0
    %764 = vmatprep.subr.mxu0 0.0
    %765 = vmatpush1.msra.mxu0 0.0
    %766 = vmatprep.subr.mxu0 0.0
    %767 = vmatpush1.msra.mxu0 0.0
    %768 = vmatprep.subr.mxu0 0.0
    %769 = vmatpush1.msra.mxu0 0.0
    %770 = vmatprep.subr.mxu0 0.0
    %771 = vmatpush1.msra.mxu0 0.0
    %772 = vmatprep.subr.mxu0 0.0
    %773 = vmatpush1.msra.mxu0 0.0
    %774 = vmatprep.subr.mxu0 0.0
    %775 = vmatpush1.msra.mxu0 0.0
    %776 = vmatprep.subr.mxu0 0.0
    %777 = vmatpush1.msra.mxu0 0.0
    %778 = vmatprep.subr.mxu0 0.0
    %779 = vmatpush1.msra.mxu0 0.0
    %780 = vmatprep.subr.mxu0 0.0
    %781 = vmatpush1.msra.mxu0 0.0
    %782 = vmatprep.subr.mxu0 0.0
    %783 = vmatpush1.msra.mxu0 0.0
    %784 = vmatprep.subr.mxu0 0.0
    %785 = vmatpush1.msra.mxu0 0.0
    %786 = vmatprep.subr.mxu0 0.0
    %787 = vmatpush1.msra.mxu0 0.0
    %788 = vmatprep.subr.mxu0 0.0
    %789 = vmatpush1.msra.mxu0 0.0
    %790 = vmatprep.mubr.f32.mxu0 0.0
    %791 = vmatmul.mubr.f32.gmra.mrb[0].mxu0 %v654
    %v792 = vpop.f32.mrb[0].mxu0
    %v793 = vadd.f32 0.0, %v792
    %v794 = vpop.f32.mrb[0].mxu0
    %795 = vdwg.mxu0
    %796 = vmatprep.subr.mxu0 0.0
    %797 = vmatpush1.msra.mxu0 %v370
    %798 = vmatprep.subr.mxu0 0.0
    %799 = vmatpush1.msra.mxu0 %v371
    %800 = vmatprep.subr.mxu0 0.0
    %801 = vmatpush1.msra.mxu0 %v372
    %802 = vmatprep.subr.mxu0 0.0
    %803 = vmatpush1.msra.mxu0 %v373
    %804 = vmatprep.subr.mxu0 0.0
    %805 = vmatpush1.msra.mxu0 0.0
    %806 = vmatprep.subr.mxu0 0.0
    %807 = vmatpush1.msra.mxu0 0.0
    %808 = vmatprep.subr.mxu0 0.0
    %809 = vmatpush1.msra.mxu0 0.0
    %810 = vmatprep.subr.mxu0 0.0
    %811 = vmatpush1.msra.mxu0 0.0
    %812 = vmatprep.subr.mxu0 0.0
    %813 = vmatpush1.msra.mxu0 0.0
    %814 = vmatprep.subr.mxu0 0.0
    %815 = vmatpush1.msra.mxu0 0.0
    %816 = vmatprep.subr.mxu0 0.0
    %817 = vmatpush1.msra.mxu0 0.0
    %818 = vmatprep.subr.mxu0 0.0
    %819 = vmatpush1.msra.mxu0 0.0
    %820 = vmatprep.subr.mxu0 0.0
    %821 = vmatpush1.msra.mxu0 0.0
    %822 = vmatprep.subr.mxu0 0.0
    %823 = vmatpush1.msra.mxu0 0.0
    %824 = vmatprep.subr.mxu0 0.0
    %825 = vmatpush1.msra.mxu0 0.0
    %826 = vmatprep.subr.mxu0 0.0
    %827 = vmatpush1.msra.mxu0 0.0
    %828 = vmatprep.subr.mxu0 0.0
    %829 = vmatpush1.msra.mxu0 0.0
    %830 = vmatprep.subr.mxu0 0.0
    %831 = vmatpush1.msra.mxu0 0.0
    %832 = vmatprep.subr.mxu0 0.0
    %833 = vmatpush1.msra.mxu0 0.0
    %834 = vmatprep.subr.mxu0 0.0
    %835 = vmatpush1.msra.mxu0 0.0
    %836 = vmatprep.subr.mxu0 0.0
    %837 = vmatpush1.msra.mxu0 0.0
    %838 = vmatprep.subr.mxu0 0.0
    %839 = vmatpush1.msra.mxu0 0.0
    %840 = vmatprep.subr.mxu0 0.0
    %841 = vmatpush1.msra.mxu0 0.0
    %842 = vmatprep.subr.mxu0 0.0
    %843 = vmatpush1.msra.mxu0 0.0
    %844 = vmatprep.subr.mxu0 0.0
    %845 = vmatpush1.msra.mxu0 0.0
    %846 = vmatprep.subr.mxu0 0.0
    %847 = vmatpush1.msra.mxu0 0.0
    %848 = vmatprep.subr.mxu0 0.0
    %849 = vmatpush1.msra.mxu0 0.0
    %850 = vmatprep.subr.mxu0 0.0
    %851 = vmatpush1.msra.mxu0 0.0
    %852 = vmatprep.subr.mxu0 0.0
    %853 = vmatpush1.msra.mxu0 0.0
    %854 = vmatprep.subr.mxu0 0.0
    %855 = vmatpush1.msra.mxu0 0.0
    %856 = vmatprep.subr.mxu0 0.0
    %857 = vmatpush1.msra.mxu0 0.0
    %858 = vmatprep.subr.mxu0 0.0
    %859 = vmatpush1.msra.mxu0 0.0
    %860 = vmatprep.mubr.f32.mxu0 0.0
    %861 = vmatmul.mubr.f32.gmra.mrb[0].mxu0 %v654
    %v862 = vpop.f32.mrb[0].mxu0
    %v863 = vadd.f32 %v523, %v862
    %v864 = vpop.f32.mrb[0].mxu0
    %865 = vdwg.mxu0
    %v867 = vrot.slane %v723, 7
    %v870 = vadd.f32 %v182, %v867
    %v871 = vadd.f32 %v187, %v723
    %v872 = vxor.u32 %v870, 2147483648
    %v873 = vxor.u32 %v871, 2147483648
    %v874 = vmul.f32 %v872, 1.442695
    %v875 = vpow.pop %v874
    %v876 = vmul.f32 %v873, 1.442695
    %v877 = vpow.pop %v876
    %v878 = vadd.f32 %v875, 1.0
    %v879 = vadd.f32 %v877, 1.0
    %v880 = vrcp.pop %v878
    %v881 = vmul.f32 1.0, %v880
    %v882 = vrcp.pop %v879
    %v883 = vmul.f32 1.0, %v882
    %v885 = vrot.slane %v793, 7
    %v888 = vadd.f32 %v268, %v885
    %v889 = vadd.f32 %v273, %v793
    %v890 = vxor.u32 %v888, 2147483648
    %v891 = vxor.u32 %v889, 2147483648
    %v892 = vmul.f32 %v890, 1.442695
    %v893 = vpow.pop %v892
    %v894 = vmul.f32 %v891, 1.442695
    %v895 = vpow.pop %v894
    %v896 = vadd.f32 %v893, 1.0
    %v897 = vadd.f32 %v895, 1.0
    %v898 = vrcp.pop %v896
    %v899 = vmul.f32 1.0, %v898
    %v900 = vrcp.pop %v897
    %v901 = vmul.f32 1.0, %v900
    %v903 = vrot.slane %v863, 7
    %v906 = vmul.f32 %v881, %v903
    %v907 = vmul.f32 %v883, %v863
    %v908 = vadd.f32 %v354, %v906
    %v909 = vadd.f32 %v359, %v907
    %v910 = vtanh.pop %v908
    %v911 = vtanh.pop %v909
    %v912 = vsub.f32 1.0, %v899
    %v913 = vsub.f32 1.0, %v901
    %v914 = vmul.f32 %v912, %v910
    %v915 = vmul.f32 %v913, %v911
    %v916 = vrot.slane %v647, 7
    %v919 = vmul.f32 %v899, %v916
    %v920 = vmul.f32 %v901, %v651
    %v921 = vadd.f32 %v914, %v919
    %v922 = vadd.f32 %v915, %v920
    %v925 = vrot.slane %v921, 1
    %v926 = vsel %vm652, %v922, %v925
    %v927 = vsel %vm375, %v926, 0
    %929 = vmatprep.subr.mxu0 0.0
    %930 = vmatpush1.msra.mxu0 %v362
    %931 = vmatprep.subr.mxu0 0.0
    %932 = vmatpush1.msra.mxu0 %v363
    %933 = vmatprep.subr.mxu0 0.0
    %934 = vmatpush1.msra.mxu0 %v364
    %935 = vmatprep.subr.mxu0 0.0
    %936 = vmatpush1.msra.mxu0 %v365
    %937 = vmatprep.subr.mxu0 0.0
    %938 = vmatpush1.msra.mxu0 0.0
    %939 = vmatprep.subr.mxu0 0.0
    %940 = vmatpush1.msra.mxu0 0.0
    %941 = vmatprep.subr.mxu0 0.0
    %942 = vmatpush1.msra.mxu0 0.0
    %943 = vmatprep.subr.mxu0 0.0
    %944 = vmatpush1.msra.mxu0 0.0
    %945 = vmatprep.subr.mxu0 0.0
    %946 = vmatpush1.msra.mxu0 0.0
    %947 = vmatprep.subr.mxu0 0.0
    %948 = vmatpush1.msra.mxu0 0.0
    %949 = vmatprep.subr.mxu0 0.0
    %950 = vmatpush1.msra.mxu0 0.0
    %951 = vmatprep.subr.mxu0 0.0
    %952 = vmatpush1.msra.mxu0 0.0
    %953 = vmatprep.subr.mxu0 0.0
    %954 = vmatpush1.msra.mxu0 0.0
    %955 = vmatprep.subr.mxu0 0.0
    %956 = vmatpush1.msra.mxu0 0.0
    %957 = vmatprep.subr.mxu0 0.0
    %958 = vmatpush1.msra.mxu0 0.0
    %959 = vmatprep.subr.mxu0 0.0
    %960 = vmatpush1.msra.mxu0 0.0
    %961 = vmatprep.subr.mxu0 0.0
    %962 = vmatpush1.msra.mxu0 0.0
    %963 = vmatprep.subr.mxu0 0.0
    %964 = vmatpush1.msra.mxu0 0.0
    %965 = vmatprep.subr.mxu0 0.0
    %966 = vmatpush1.msra.mxu0 0.0
    %967 = vmatprep.subr.mxu0 0.0
    %968 = vmatpush1.msra.mxu0 0.0
    %969 = vmatprep.subr.mxu0 0.0
    %970 = vmatpush1.msra.mxu0 0.0
    %971 = vmatprep.subr.mxu0 0.0
    %972 = vmatpush1.msra.mxu0 0.0
    %973 = vmatprep.subr.mxu0 0.0
    %974 = vmatpush1.msra.mxu0 0.0
    %975 = vmatprep.subr.mxu0 0.0
    %976 = vmatpush1.msra.mxu0 0.0
    %977 = vmatprep.subr.mxu0 0.0
    %978 = vmatpush1.msra.mxu0 0.0
    %979 = vmatprep.subr.mxu0 0.0
    %980 = vmatpush1.msra.mxu0 0.0
    %981 = vmatprep.subr.mxu0 0.0
    %982 = vmatpush1.msra.mxu0 0.0
    %983 = vmatprep.subr.mxu0 0.0
    %984 = vmatpush1.msra.mxu0 0.0
    %985 = vmatprep.subr.mxu0 0.0
    %986 = vmatpush1.msra.mxu0 0.0
    %987 = vmatprep.subr.mxu0 0.0
    %988 = vmatpush1.msra.mxu0 0.0
    %989 = vmatprep.subr.mxu0 0.0
    %990 = vmatpush1.msra.mxu0 0.0
    %991 = vmatprep.subr.mxu0 0.0
    %992 = vmatpush1.msra.mxu0 0.0
    %993 = vmatprep.mubr.f32.mxu0 0.0
    %994 = vmatmul.mubr.f32.gmra.mrb[0].mxu0 %v927
    %v995 = vpop.f32.mrb[0].mxu0
    %v996 = vadd.f32 0.0, %v995
    %v997 = vpop.f32.mrb[0].mxu0
    %998 = vdwg.mxu0
    %999 = vmatprep.subr.mxu0 0.0
    %1000 = vmatpush1.msra.mxu0 %v366
    %1001 = vmatprep.subr.mxu0 0.0
    %1002 = vmatpush1.msra.mxu0 %v367
    %1003 = vmatprep.subr.mxu0 0.0
    %1004 = vmatpush1.msra.mxu0 %v368
    %1005 = vmatprep.subr.mxu0 0.0
    %1006 = vmatpush1.msra.mxu0 %v369
    %1007 = vmatprep.subr.mxu0 0.0
    %1008 = vmatpush1.msra.mxu0 0.0
    %1009 = vmatprep.subr.mxu0 0.0
    %1010 = vmatpush1.msra.mxu0 0.0
    %1011 = vmatprep.subr.mxu0 0.0
    %1012 = vmatpush1.msra.mxu0 0.0
    %1013 = vmatprep.subr.mxu0 0.0
    %1014 = vmatpush1.msra.mxu0 0.0
    %1015 = vmatprep.subr.mxu0 0.0
    %1016 = vmatpush1.msra.mxu0 0.0
    %1017 = vmatprep.subr.mxu0 0.0
    %1018 = vmatpush1.msra.mxu0 0.0
    %1019 = vmatprep.subr.mxu0 0.0
    %1020 = vmatpush1.msra.mxu0 0.0
    %1021 = vmatprep.subr.mxu0 0.0
    %1022 = vmatpush1.msra.mxu0 0.0
    %1023 = vmatprep.subr.mxu0 0.0
    %1024 = vmatpush1.msra.mxu0 0.0
    %1025 = vmatprep.subr.mxu0 0.0
    %1026 = vmatpush1.msra.mxu0 0.0
    %1027 = vmatprep.subr.mxu0 0.0
    %1028 = vmatpush1.msra.mxu0 0.0
    %1029 = vmatprep.subr.mxu0 0.0
    %1030 = vmatpush1.msra.mxu0 0.0
    %1031 = vmatprep.subr.mxu0 0.0
    %1032 = vmatpush1.msra.mxu0 0.0
    %1033 = vmatprep.subr.mxu0 0.0
    %1034 = vmatpush1.msra.mxu0 0.0
    %1035 = vmatprep.subr.mxu0 0.0
    %1036 = vmatpush1.msra.mxu0 0.0
    %1037 = vmatprep.subr.mxu0 0.0
    %1038 = vmatpush1.msra.mxu0 0.0
    %1039 = vmatprep.subr.mxu0 0.0
    %1040 = vmatpush1.msra.mxu0 0.0
    %1041 = vmatprep.subr.mxu0 0.0
    %1042 = vmatpush1.msra.mxu0 0.0
    %1043 = vmatprep.subr.mxu0 0.0
    %1044 = vmatpush1.msra.mxu0 0.0
    %1045 = vmatprep.subr.mxu0 0.0
    %1046 = vmatpush1.msra.mxu0 0.0
    %1047 = vmatprep.subr.mxu0 0.0
    %1048 = vmatpush1.msra.mxu0 0.0
    %1049 = vmatprep.subr.mxu0 0.0
    %1050 = vmatpush1.msra.mxu0 0.0
    %1051 = vmatprep.subr.mxu0 0.0
    %1052 = vmatpush1.msra.mxu0 0.0
    %1053 = vmatprep.subr.mxu0 0.0
    %1054 = vmatpush1.msra.mxu0 0.0
    %1055 = vmatprep.subr.mxu0 0.0
    %1056 = vmatpush1.msra.mxu0 0.0
    %1057 = vmatprep.subr.mxu0 0.0
    %1058 = vmatpush1.msra.mxu0 0.0
    %1059 = vmatprep.subr.mxu0 0.0
    %1060 = vmatpush1.msra.mxu0 0.0
    %1061 = vmatprep.subr.mxu0 0.0
    %1062 = vmatpush1.msra.mxu0 0.0
    %1063 = vmatprep.mubr.f32.mxu0 0.0
    %1064 = vmatmul.mubr.f32.gmra.mrb[0].mxu0 %v927
    %v1065 = vpop.f32.mrb[0].mxu0
    %v1066 = vadd.f32 0.0, %v1065
    %v1067 = vpop.f32.mrb[0].mxu0
    %1068 = vdwg.mxu0
    %1069 = vmatprep.subr.mxu0 0.0
    %1070 = vmatpush1.msra.mxu0 %v370
    %1071 = vmatprep.subr.mxu0 0.0
    %1072 = vmatpush1.msra.mxu0 %v371
    %1073 = vmatprep.subr.mxu0 0.0
    %1074 = vmatpush1.msra.mxu0 %v372
    %1075 = vmatprep.subr.mxu0 0.0
    %1076 = vmatpush1.msra.mxu0 %v373
    %1077 = vmatprep.subr.mxu0 0.0
    %1078 = vmatpush1.msra.mxu0 0.0
    %1079 = vmatprep.subr.mxu0 0.0
    %1080 = vmatpush1.msra.mxu0 0.0
    %1081 = vmatprep.subr.mxu0 0.0
    %1082 = vmatpush1.msra.mxu0 0.0
    %1083 = vmatprep.subr.mxu0 0.0
    %1084 = vmatpush1.msra.mxu0 0.0
    %1085 = vmatprep.subr.mxu0 0.0
    %1086 = vmatpush1.msra.mxu0 0.0
    %1087 = vmatprep.subr.mxu0 0.0
    %1088 = vmatpush1.msra.mxu0 0.0
    %1089 = vmatprep.subr.mxu0 0.0
    %1090 = vmatpush1.msra.mxu0 0.0
    %1091 = vmatprep.subr.mxu0 0.0
    %1092 = vmatpush1.msra.mxu0 0.0
    %1093 = vmatprep.subr.mxu0 0.0
    %1094 = vmatpush1.msra.mxu0 0.0
    %1095 = vmatprep.subr.mxu0 0.0
    %1096 = vmatpush1.msra.mxu0 0.0
    %1097 = vmatprep.subr.mxu0 0.0
    %1098 = vmatpush1.msra.mxu0 0.0
    %1099 = vmatprep.subr.mxu0 0.0
    %1100 = vmatpush1.msra.mxu0 0.0
    %1101 = vmatprep.subr.mxu0 0.0
    %1102 = vmatpush1.msra.mxu0 0.0
    %1103 = vmatprep.subr.mxu0 0.0
    %1104 = vmatpush1.msra.mxu0 0.0
    %1105 = vmatprep.subr.mxu0 0.0
    %1106 = vmatpush1.msra.mxu0 0.0
    %1107 = vmatprep.subr.mxu0 0.0
    %1108 = vmatpush1.msra.mxu0 0.0
    %1109 = vmatprep.subr.mxu0 0.0
    %1110 = vmatpush1.msra.mxu0 0.0
    %1111 = vmatprep.subr.mxu0 0.0
    %1112 = vmatpush1.msra.mxu0 0.0
    %1113 = vmatprep.subr.mxu0 0.0
    %1114 = vmatpush1.msra.mxu0 0.0
    %1115 = vmatprep.subr.mxu0 0.0
    %1116 = vmatpush1.msra.mxu0 0.0
    %1117 = vmatprep.subr.mxu0 0.0
    %1118 = vmatpush1.msra.mxu0 0.0
    %1119 = vmatprep.subr.mxu0 0.0
    %1120 = vmatpush1.msra.mxu0 0.0
    %1121 = vmatprep.subr.mxu0 0.0
    %1122 = vmatpush1.msra.mxu0 0.0
    %1123 = vmatprep.subr.mxu0 0.0
    %1124 = vmatpush1.msra.mxu0 0.0
    %1125 = vmatprep.subr.mxu0 0.0
    %1126 = vmatpush1.msra.mxu0 0.0
    %1127 = vmatprep.subr.mxu0 0.0
    %1128 = vmatpush1.msra.mxu0 0.0
    %1129 = vmatprep.subr.mxu0 0.0
    %1130 = vmatpush1.msra.mxu0 0.0
    %1131 = vmatprep.subr.mxu0 0.0
    %1132 = vmatpush1.msra.mxu0 0.0
    %1133 = vmatprep.mubr.f32.mxu0 0.0
    %1134 = vmatmul.mubr.f32.gmra.mrb[0].mxu0 %v927
    %v1135 = vpop.f32.mrb[0].mxu0
    %v1136 = vadd.f32 %v523, %v1135
    %v1137 = vpop.f32.mrb[0].mxu0
    %1138 = vdwg.mxu0
    %v1140 = vrot.slane %v996, 6
    %v1141 = vrot.slane %v996, 7
    %v1144 = vadd.f32 %v182, %v1140
    %v1145 = vadd.f32 %v187, %v1141
    %v1146 = vxor.u32 %v1144, 2147483648
    %v1147 = vxor.u32 %v1145, 2147483648
    %v1148 = vmul.f32 %v1146, 1.442695
    %v1149 = vpow.pop %v1148
    %v1150 = vmul.f32 %v1147, 1.442695
    %v1151 = vpow.pop %v1150
    %v1152 = vadd.f32 %v1149, 1.0
    %v1153 = vadd.f32 %v1151, 1.0
    %v1154 = vrcp.pop %v1152
    %v1155 = vmul.f32 1.0, %v1154
    %v1156 = vrcp.pop %v1153
    %v1157 = vmul.f32 1.0, %v1156
    %v1159 = vrot.slane %v1066, 6
    %v1160 = vrot.slane %v1066, 7
    %v1163 = vadd.f32 %v268, %v1159
    %v1164 = vadd.f32 %v273, %v1160
    %v1165 = vxor.u32 %v1163, 2147483648
    %v1166 = vxor.u32 %v1164, 2147483648
    %v1167 = vmul.f32 %v1165, 1.442695
    %v1168 = vpow.pop %v1167
    %v1169 = vmul.f32 %v1166, 1.442695
    %v1170 = vpow.pop %v1169
    %v1171 = vadd.f32 %v1168, 1.0
    %v1172 = vadd.f32 %v1170, 1.0
    %v1173 = vrcp.pop %v1171
    %v1174 = vmul.f32 1.0, %v1173
    %v1175 = vrcp.pop %v1172
    %v1176 = vmul.f32 1.0, %v1175
    %v1178 = vrot.slane %v1136, 6
    %v1179 = vrot.slane %v1136, 7
    %v1182 = vmul.f32 %v1155, %v1178
    %v1183 = vmul.f32 %v1157, %v1179
    %v1184 = vadd.f32 %v354, %v1182
    %v1185 = vadd.f32 %v359, %v1183
    %v1186 = vtanh.pop %v1184
    %v1187 = vtanh.pop %v1185
    %v1188 = vsub.f32 1.0, %v1174
    %v1189 = vsub.f32 1.0, %v1176
    %v1190 = vmul.f32 %v1188, %v1186
    %v1191 = vmul.f32 %v1189, %v1187
    %v1192 = vrot.slane %v921, 7
    %v1193 = vrot.slane %v922, 7
    %v1196 = vmul.f32 %v1174, %v1192
    %v1197 = vmul.f32 %v1176, %v1193
    %v1198 = vadd.f32 %v1190, %v1196
    %v1199 = vadd.f32 %v1191, %v1197
    %v1202 = vrot.slane %v1198, 2
    %v1203 = vrot.slane %v1199, 1
    %v1204 = vsel %vm652, %v1203, %v1202
    %v1205 = vsel %vm375, %v1204, 0
    %1207 = vmatprep.subr.mxu0 0.0
    %1208 = vmatpush1.msra.mxu0 %v362
    %1209 = vmatprep.subr.mxu0 0.0
    %1210 = vmatpush1.msra.mxu0 %v363
    %1211 = vmatprep.subr.mxu0 0.0
    %1212 = vmatpush1.msra.mxu0 %v364
    %1213 = vmatprep.subr.mxu0 0.0
    %1214 = vmatpush1.msra.mxu0 %v365
    %1215 = vmatprep.subr.mxu0 0.0
    %1216 = vmatpush1.msra.mxu0 0.0
    %1217 = vmatprep.subr.mxu0 0.0
    %1218 = vmatpush1.msra.mxu0 0.0
    %1219 = vmatprep.subr.mxu0 0.0
    %1220 = vmatpush1.msra.mxu0 0.0
    %1221 = vmatprep.subr.mxu0 0.0
    %1222 = vmatpush1.msra.mxu0 0.0
    %1223 = vmatprep.subr.mxu0 0.0
    %1224 = vmatpush1.msra.mxu0 0.0
    %1225 = vmatprep.subr.mxu0 0.0
    %1226 = vmatpush1.msra.mxu0 0.0
    %1227 = vmatprep.subr.mxu0 0.0
    %1228 = vmatpush1.msra.mxu0 0.0
    %1229 = vmatprep.subr.mxu0 0.0
    %1230 = vmatpush1.msra.mxu0 0.0
    %1231 = vmatprep.subr.mxu0 0.0
    %1232 = vmatpush1.msra.mxu0 0.0
    %1233 = vmatprep.subr.mxu0 0.0
    %1234 = vmatpush1.msra.mxu0 0.0
    %1235 = vmatprep.subr.mxu0 0.0
    %1236 = vmatpush1.msra.mxu0 0.0
    %1237 = vmatprep.subr.mxu0 0.0
    %1238 = vmatpush1.msra.mxu0 0.0
    %1239 = vmatprep.subr.mxu0 0.0
    %1240 = vmatpush1.msra.mxu0 0.0
    %1241 = vmatprep.subr.mxu0 0.0
    %1242 = vmatpush1.msra.mxu0 0.0
    %1243 = vmatprep.subr.mxu0 0.0
    %1244 = vmatpush1.msra.mxu0 0.0
    %1245 = vmatprep.subr.mxu0 0.0
    %1246 = vmatpush1.msra.mxu0 0.0
    %1247 = vmatprep.subr.mxu0 0.0
    %1248 = vmatpush1.msra.mxu0 0.0
    %1249 = vmatprep.subr.mxu0 0.0
    %1250 = vmatpush1.msra.mxu0 0.0
    %1251 = vmatprep.subr.mxu0 0.0
    %1252 = vmatpush1.msra.mxu0 0.0
    %1253 = vmatprep.subr.mxu0 0.0
    %1254 = vmatpush1.msra.mxu0 0.0
    %1255 = vmatprep.subr.mxu0 0.0
    %1256 = vmatpush1.msra.mxu0 0.0
    %1257 = vmatprep.subr.mxu0 0.0
    %1258 = vmatpush1.msra.mxu0 0.0
    %1259 = vmatprep.subr.mxu0 0.0
    %1260 = vmatpush1.msra.mxu0 0.0
    %1261 = vmatprep.subr.mxu0 0.0
    %1262 = vmatpush1.msra.mxu0 0.0
    %1263 = vmatprep.subr.mxu0 0.0
    %1264 = vmatpush1.msra.mxu0 0.0
    %1265 = vmatprep.subr.mxu0 0.0
    %1266 = vmatpush1.msra.mxu0 0.0
    %1267 = vmatprep.subr.mxu0 0.0
    %1268 = vmatpush1.msra.mxu0 0.0
    %1269 = vmatprep.subr.mxu0 0.0
    %1270 = vmatpush1.msra.mxu0 0.0
    %1271 = vmatprep.mubr.f32.mxu0 0.0
    %1272 = vmatmul.mubr.f32.gmra.mrb[0].mxu0 %v1205
    %v1273 = vpop.f32.mrb[0].mxu0
    %v1274 = vadd.f32 0.0, %v1273
    %v1275 = vpop.f32.mrb[0].mxu0
    %1276 = vdwg.mxu0
    %1277 = vmatprep.subr.mxu0 0.0
    %1278 = vmatpush1.msra.mxu0 %v366
    %1279 = vmatprep.subr.mxu0 0.0
    %1280 = vmatpush1.msra.mxu0 %v367
    %1281 = vmatprep.subr.mxu0 0.0
    %1282 = vmatpush1.msra.mxu0 %v368
    %1283 = vmatprep.subr.mxu0 0.0
    %1284 = vmatpush1.msra.mxu0 %v369
    %1285 = vmatprep.subr.mxu0 0.0
    %1286 = vmatpush1.msra.mxu0 0.0
    %1287 = vmatprep.subr.mxu0 0.0
    %1288 = vmatpush1.msra.mxu0 0.0
    %1289 = vmatprep.subr.mxu0 0.0
    %1290 = vmatpush1.msra.mxu0 0.0
    %1291 = vmatprep.subr.mxu0 0.0
    %1292 = vmatpush1.msra.mxu0 0.0
    %1293 = vmatprep.subr.mxu0 0.0
    %1294 = vmatpush1.msra.mxu0 0.0
    %1295 = vmatprep.subr.mxu0 0.0
    %1296 = vmatpush1.msra.mxu0 0.0
    %1297 = vmatprep.subr.mxu0 0.0
    %1298 = vmatpush1.msra.mxu0 0.0
    %1299 = vmatprep.subr.mxu0 0.0
    %1300 = vmatpush1.msra.mxu0 0.0
    %1301 = vmatprep.subr.mxu0 0.0
    %1302 = vmatpush1.msra.mxu0 0.0
    %1303 = vmatprep.subr.mxu0 0.0
    %1304 = vmatpush1.msra.mxu0 0.0
    %1305 = vmatprep.subr.mxu0 0.0
    %1306 = vmatpush1.msra.mxu0 0.0
    %1307 = vmatprep.subr.mxu0 0.0
    %1308 = vmatpush1.msra.mxu0 0.0
    %1309 = vmatprep.subr.mxu0 0.0
    %1310 = vmatpush1.msra.mxu0 0.0
    %1311 = vmatprep.subr.mxu0 0.0
    %1312 = vmatpush1.msra.mxu0 0.0
    %1313 = vmatprep.subr.mxu0 0.0
    %1314 = vmatpush1.msra.mxu0 0.0
    %1315 = vmatprep.subr.mxu0 0.0
    %1316 = vmatpush1.msra.mxu0 0.0
    %1317 = vmatprep.subr.mxu0 0.0
    %1318 = vmatpush1.msra.mxu0 0.0
    %1319 = vmatprep.subr.mxu0 0.0
    %1320 = vmatpush1.msra.mxu0 0.0
    %1321 = vmatprep.subr.mxu0 0.0
    %1322 = vmatpush1.msra.mxu0 0.0
    %1323 = vmatprep.subr.mxu0 0.0
    %1324 = vmatpush1.msra.mxu0 0.0
    %1325 = vmatprep.subr.mxu0 0.0
    %1326 = vmatpush1.msra.mxu0 0.0
    %1327 = vmatprep.subr.mxu0 0.0
    %1328 = vmatpush1.msra.mxu0 0.0
    %1329 = vmatprep.subr.mxu0 0.0
    %1330 = vmatpush1.msra.mxu0 0.0
    %1331 = vmatprep.subr.mxu0 0.0
    %1332 = vmatpush1.msra.mxu0 0.0
    %1333 = vmatprep.subr.mxu0 0.0
    %1334 = vmatpush1.msra.mxu0 0.0
    %1335 = vmatprep.subr.mxu0 0.0
    %1336 = vmatpush1.msra.mxu0 0.0
    %1337 = vmatprep.subr.mxu0 0.0
    %1338 = vmatpush1.msra.mxu0 0.0
    %1339 = vmatprep.subr.mxu0 0.0
    %1340 = vmatpush1.msra.mxu0 0.0
    %1341 = vmatprep.mubr.f32.mxu0 0.0
    %1342 = vmatmul.mubr.f32.gmra.mrb[0].mxu0 %v1205
    %v1343 = vpop.f32.mrb[0].mxu0
    %v1344 = vadd.f32 0.0, %v1343
    %v1345 = vpop.f32.mrb[0].mxu0
    %1346 = vdwg.mxu0
    %1347 = vmatprep.subr.mxu0 0.0
    %1348 = vmatpush1.msra.mxu0 %v370
    %1349 = vmatprep.subr.mxu0 0.0
    %1350 = vmatpush1.msra.mxu0 %v371
    %1351 = vmatprep.subr.mxu0 0.0
    %1352 = vmatpush1.msra.mxu0 %v372
    %1353 = vmatprep.subr.mxu0 0.0
    %1354 = vmatpush1.msra.mxu0 %v373
    %1355 = vmatprep.subr.mxu0 0.0
    %1356 = vmatpush1.msra.mxu0 0.0
    %1357 = vmatprep.subr.mxu0 0.0
    %1358 = vmatpush1.msra.mxu0 0.0
    %1359 = vmatprep.subr.mxu0 0.0
    %1360 = vmatpush1.msra.mxu0 0.0
    %1361 = vmatprep.subr.mxu0 0.0
    %1362 = vmatpush1.msra.mxu0 0.0
    %1363 = vmatprep.subr.mxu0 0.0
    %1364 = vmatpush1.msra.mxu0 0.0
    %1365 = vmatprep.subr.mxu0 0.0
    %1366 = vmatpush1.msra.mxu0 0.0
    %1367 = vmatprep.subr.mxu0 0.0
    %1368 = vmatpush1.msra.mxu0 0.0
    %1369 = vmatprep.subr.mxu0 0.0
    %1370 = vmatpush1.msra.mxu0 0.0
    %1371 = vmatprep.subr.mxu0 0.0
    %1372 = vmatpush1.msra.mxu0 0.0
    %1373 = vmatprep.subr.mxu0 0.0
    %1374 = vmatpush1.msra.mxu0 0.0
    %1375 = vmatprep.subr.mxu0 0.0
    %1376 = vmatpush1.msra.mxu0 0.0
    %1377 = vmatprep.subr.mxu0 0.0
    %1378 = vmatpush1.msra.mxu0 0.0
    %1379 = vmatprep.subr.mxu0 0.0
    %1380 = vmatpush1.msra.mxu0 0.0
    %1381 = vmatprep.subr.mxu0 0.0
    %1382 = vmatpush1.msra.mxu0 0.0
    %1383 = vmatprep.subr.mxu0 0.0
    %1384 = vmatpush1.msra.mxu0 0.0
    %1385 = vmatprep.subr.mxu0 0.0
    %1386 = vmatpush1.msra.mxu0 0.0
    %1387 = vmatprep.subr.mxu0 0.0
    %1388 = vmatpush1.msra.mxu0 0.0
    %1389 = vmatprep.subr.mxu0 0.0
    %1390 = vmatpush1.msra.mxu0 0.0
    %1391 = vmatprep.subr.mxu0 0.0
    %1392 = vmatpush1.msra.mxu0 0.0
    %1393 = vmatprep.subr.mxu0 0.0
    %1394 = vmatpush1.msra.mxu0 0.0
    %1395 = vmatprep.subr.mxu0 0.0
    %1396 = vmatpush1.msra.mxu0 0.0
    %1397 = vmatprep.subr.mxu0 0.0
    %1398 = vmatpush1.msra.mxu0 0.0
    %1399 = vmatprep.subr.mxu0 0.0
    %1400 = vmatpush1.msra.mxu0 0.0
    %1401 = vmatprep.subr.mxu0 0.0
    %1402 = vmatpush1.msra.mxu0 0.0
    %1403 = vmatprep.subr.mxu0 0.0
    %1404 = vmatpush1.msra.mxu0 0.0
    %1405 = vmatprep.subr.mxu0 0.0
    %1406 = vmatpush1.msra.mxu0 0.0
    %1407 = vmatprep.subr.mxu0 0.0
    %1408 = vmatpush1.msra.mxu0 0.0
    %1409 = vmatprep.subr.mxu0 0.0
    %1410 = vmatpush1.msra.mxu0 0.0
    %1411 = vmatprep.mubr.f32.mxu0 0.0
    %1412 = vmatmul.mubr.f32.gmra.mrb[0].mxu0 %v1205
    %v1413 = vpop.f32.mrb[0].mxu0
    %v1414 = vadd.f32 %v523, %v1413
    %v1415 = vpop.f32.mrb[0].mxu0
    %1416 = vdwg.mxu0
    %v1418 = vrot.slane %v1274, 5
    %v1419 = vrot.slane %v1274, 6
    %v1422 = vadd.f32 %v182, %v1418
    %v1423 = vadd.f32 %v187, %v1419
    %v1424 = vxor.u32 %v1422, 2147483648
    %v1425 = vxor.u32 %v1423, 2147483648
    %v1426 = vmul.f32 %v1424, 1.442695
    %v1427 = vpow.pop %v1426
    %v1428 = vmul.f32 %v1425, 1.442695
    %v1429 = vpow.pop %v1428
    %v1430 = vadd.f32 %v1427, 1.0
    %v1431 = vadd.f32 %v1429, 1.0
    %v1432 = vrcp.pop %v1430
    %v1433 = vmul.f32 1.0, %v1432
    %v1434 = vrcp.pop %v1431
    %v1435 = vmul.f32 1.0, %v1434
    %v1437 = vrot.slane %v1344, 5
    %v1438 = vrot.slane %v1344, 6
    %v1441 = vadd.f32 %v268, %v1437
    %v1442 = vadd.f32 %v273, %v1438
    %v1443 = vxor.u32 %v1441, 2147483648
    %v1444 = vxor.u32 %v1442, 2147483648
    %v1445 = vmul.f32 %v1443, 1.442695
    %v1446 = vpow.pop %v1445
    %v1447 = vmul.f32 %v1444, 1.442695
    %v1448 = vpow.pop %v1447
    %v1449 = vadd.f32 %v1446, 1.0
    %v1450 = vadd.f32 %v1448, 1.0
    %v1451 = vrcp.pop %v1449
    %v1452 = vmul.f32 1.0, %v1451
    %v1453 = vrcp.pop %v1450
    %v1454 = vmul.f32 1.0, %v1453
    %v1456 = vrot.slane %v1414, 5
    %v1457 = vrot.slane %v1414, 6
    %v1460 = vmul.f32 %v1433, %v1456
    %v1461 = vmul.f32 %v1435, %v1457
    %v1462 = vadd.f32 %v354, %v1460
    %v1463 = vadd.f32 %v359, %v1461
    %v1464 = vtanh.pop %v1462
    %v1465 = vtanh.pop %v1463
    %v1466 = vsub.f32 1.0, %v1452
    %v1467 = vsub.f32 1.0, %v1454
    %v1468 = vmul.f32 %v1466, %v1464
    %v1469 = vmul.f32 %v1467, %v1465
    %v1470 = vrot.slane %v1198, 7
    %v1471 = vrot.slane %v1199, 7
    %v1474 = vmul.f32 %v1452, %v1470
    %v1475 = vmul.f32 %v1454, %v1471
    %v1476 = vadd.f32 %v1468, %v1474
    %v1477 = vadd.f32 %v1469, %v1475
    %v1480 = vrot.slane %v1476, 3
    %v1481 = vrot.slane %v1477, 2
    %v1482 = vsel %vm652, %v1481, %v1480
    %v1483 = vsel %vm375, %v1482, 0
    %1485 = vmatprep.subr.mxu0 0.0
    %1486 = vmatpush1.msra.mxu0 %v362
    %1487 = vmatprep.subr.mxu0 0.0
    %1488 = vmatpush1.msra.mxu0 %v363
    %1489 = vmatprep.subr.mxu0 0.0
    %1490 = vmatpush1.msra.mxu0 %v364
    %1491 = vmatprep.subr.mxu0 0.0
    %1492 = vmatpush1.msra.mxu0 %v365
    %1493 = vmatprep.subr.mxu0 0.0
    %1494 = vmatpush1.msra.mxu0 0.0
    %1495 = vmatprep.subr.mxu0 0.0
    %1496 = vmatpush1.msra.mxu0 0.0
    %1497 = vmatprep.subr.mxu0 0.0
    %1498 = vmatpush1.msra.mxu0 0.0
    %1499 = vmatprep.subr.mxu0 0.0
    %1500 = vmatpush1.msra.mxu0 0.0
    %1501 = vmatprep.subr.mxu0 0.0
    %1502 = vmatpush1.msra.mxu0 0.0
    %1503 = vmatprep.subr.mxu0 0.0
    %1504 = vmatpush1.msra.mxu0 0.0
    %1505 = vmatprep.subr.mxu0 0.0
    %1506 = vmatpush1.msra.mxu0 0.0
    %1507 = vmatprep.subr.mxu0 0.0
    %1508 = vmatpush1.msra.mxu0 0.0
    %1509 = vmatprep.subr.mxu0 0.0
    %1510 = vmatpush1.msra.mxu0 0.0
    %1511 = vmatprep.subr.mxu0 0.0
    %1512 = vmatpush1.msra.mxu0 0.0
    %1513 = vmatprep.subr.mxu0 0.0
    %1514 = vmatpush1.msra.mxu0 0.0
    %1515 = vmatprep.subr.mxu0 0.0
    %1516 = vmatpush1.msra.mxu0 0.0
    %1517 = vmatprep.subr.mxu0 0.0
    %1518 = vmatpush1.msra.mxu0 0.0
    %1519 = vmatprep.subr.mxu0 0.0
    %1520 = vmatpush1.msra.mxu0 0.0
    %1521 = vmatprep.subr.mxu0 0.0
    %1522 = vmatpush1.msra.mxu0 0.0
    %1523 = vmatprep.subr.mxu0 0.0
    %1524 = vmatpush1.msra.mxu0 0.0
    %1525 = vmatprep.subr.mxu0 0.0
    %1526 = vmatpush1.msra.mxu0 0.0
    %1527 = vmatprep.subr.mxu0 0.0
    %1528 = vmatpush1.msra.mxu0 0.0
    %1529 = vmatprep.subr.mxu0 0.0
    %1530 = vmatpush1.msra.mxu0 0.0
    %1531 = vmatprep.subr.mxu0 0.0
    %1532 = vmatpush1.msra.mxu0 0.0
    %1533 = vmatprep.subr.mxu0 0.0
    %1534 = vmatpush1.msra.mxu0 0.0
    %1535 = vmatprep.subr.mxu0 0.0
    %1536 = vmatpush1.msra.mxu0 0.0
    %1537 = vmatprep.subr.mxu0 0.0
    %1538 = vmatpush1.msra.mxu0 0.0
    %1539 = vmatprep.subr.mxu0 0.0
    %1540 = vmatpush1.msra.mxu0 0.0
    %1541 = vmatprep.subr.mxu0 0.0
    %1542 = vmatpush1.msra.mxu0 0.0
    %1543 = vmatprep.subr.mxu0 0.0
    %1544 = vmatpush1.msra.mxu0 0.0
    %1545 = vmatprep.subr.mxu0 0.0
    %1546 = vmatpush1.msra.mxu0 0.0
    %1547 = vmatprep.subr.mxu0 0.0
    %1548 = vmatpush1.msra.mxu0 0.0
    %1549 = vmatprep.mubr.f32.mxu0 0.0
    %1550 = vmatmul.mubr.f32.gmra.mrb[0].mxu0 %v1483
    %v1551 = vpop.f32.mrb[0].mxu0
    %v1552 = vadd.f32 0.0, %v1551
    %v1553 = vpop.f32.mrb[0].mxu0
    %1554 = vdwg.mxu0
    %1555 = vmatprep.subr.mxu0 0.0
    %1556 = vmatpush1.msra.mxu0 %v366
    %1557 = vmatprep.subr.mxu0 0.0
    %1558 = vmatpush1.msra.mxu0 %v367
    %1559 = vmatprep.subr.mxu0 0.0
    %1560 = vmatpush1.msra.mxu0 %v368
    %1561 = vmatprep.subr.mxu0 0.0
    %1562 = vmatpush1.msra.mxu0 %v369
    %1563 = vmatprep.subr.mxu0 0.0
    %1564 = vmatpush1.msra.mxu0 0.0
    %1565 = vmatprep.subr.mxu0 0.0
    %1566 = vmatpush1.msra.mxu0 0.0
    %1567 = vmatprep.subr.mxu0 0.0
    %1568 = vmatpush1.msra.mxu0 0.0
    %1569 = vmatprep.subr.mxu0 0.0
    %1570 = vmatpush1.msra.mxu0 0.0
    %1571 = vmatprep.subr.mxu0 0.0
    %1572 = vmatpush1.msra.mxu0 0.0
    %1573 = vmatprep.subr.mxu0 0.0
    %1574 = vmatpush1.msra.mxu0 0.0
    %1575 = vmatprep.subr.mxu0 0.0
    %1576 = vmatpush1.msra.mxu0 0.0
    %1577 = vmatprep.subr.mxu0 0.0
    %1578 = vmatpush1.msra.mxu0 0.0
    %1579 = vmatprep.subr.mxu0 0.0
    %1580 = vmatpush1.msra.mxu0 0.0
    %1581 = vmatprep.subr.mxu0 0.0
    %1582 = vmatpush1.msra.mxu0 0.0
    %1583 = vmatprep.subr.mxu0 0.0
    %1584 = vmatpush1.msra.mxu0 0.0
    %1585 = vmatprep.subr.mxu0 0.0
    %1586 = vmatpush1.msra.mxu0 0.0
    %1587 = vmatprep.subr.mxu0 0.0
    %1588 = vmatpush1.msra.mxu0 0.0
    %1589 = vmatprep.subr.mxu0 0.0
    %1590 = vmatpush1.msra.mxu0 0.0
    %1591 = vmatprep.subr.mxu0 0.0
    %1592 = vmatpush1.msra.mxu0 0.0
    %1593 = vmatprep.subr.mxu0 0.0
    %1594 = vmatpush1.msra.mxu0 0.0
    %1595 = vmatprep.subr.mxu0 0.0
    %1596 = vmatpush1.msra.mxu0 0.0
    %1597 = vmatprep.subr.mxu0 0.0
    %1598 = vmatpush1.msra.mxu0 0.0
    %1599 = vmatprep.subr.mxu0 0.0
    %1600 = vmatpush1.msra.mxu0 0.0
    %1601 = vmatprep.subr.mxu0 0.0
    %1602 = vmatpush1.msra.mxu0 0.0
    %1603 = vmatprep.subr.mxu0 0.0
    %1604 = vmatpush1.msra.mxu0 0.0
    %1605 = vmatprep.subr.mxu0 0.0
    %1606 = vmatpush1.msra.mxu0 0.0
    %1607 = vmatprep.subr.mxu0 0.0
    %1608 = vmatpush1.msra.mxu0 0.0
    %1609 = vmatprep.subr.mxu0 0.0
    %1610 = vmatpush1.msra.mxu0 0.0
    %1611 = vmatprep.subr.mxu0 0.0
    %1612 = vmatpush1.msra.mxu0 0.0
    %1613 = vmatprep.subr.mxu0 0.0
    %1614 = vmatpush1.msra.mxu0 0.0
    %1615 = vmatprep.subr.mxu0 0.0
    %1616 = vmatpush1.msra.mxu0 0.0
    %1617 = vmatprep.subr.mxu0 0.0
    %1618 = vmatpush1.msra.mxu0 0.0
    %1619 = vmatprep.mubr.f32.mxu0 0.0
    %1620 = vmatmul.mubr.f32.gmra.mrb[0].mxu0 %v1483
    %v1621 = vpop.f32.mrb[0].mxu0
    %v1622 = vadd.f32 0.0, %v1621
    %v1623 = vpop.f32.mrb[0].mxu0
    %1624 = vdwg.mxu0
    %1625 = vmatprep.subr.mxu0 0.0
    %1626 = vmatpush1.msra.mxu0 %v370
    %1627 = vmatprep.subr.mxu0 0.0
    %1628 = vmatpush1.msra.mxu0 %v371
    %1629 = vmatprep.subr.mxu0 0.0
    %1630 = vmatpush1.msra.mxu0 %v372
    %1631 = vmatprep.subr.mxu0 0.0
    %1632 = vmatpush1.msra.mxu0 %v373
    %1633 = vmatprep.subr.mxu0 0.0
    %1634 = vmatpush1.msra.mxu0 0.0
    %1635 = vmatprep.subr.mxu0 0.0
    %1636 = vmatpush1.msra.mxu0 0.0
    %1637 = vmatprep.subr.mxu0 0.0
    %1638 = vmatpush1.msra.mxu0 0.0
    %1639 = vmatprep.subr.mxu0 0.0
    %1640 = vmatpush1.msra.mxu0 0.0
    %1641 = vmatprep.subr.mxu0 0.0
    %1642 = vmatpush1.msra.mxu0 0.0
    %1643 = vmatprep.subr.mxu0 0.0
    %1644 = vmatpush1.msra.mxu0 0.0
    %1645 = vmatprep.subr.mxu0 0.0
    %1646 = vmatpush1.msra.mxu0 0.0
    %1647 = vmatprep.subr.mxu0 0.0
    %1648 = vmatpush1.msra.mxu0 0.0
    %1649 = vmatprep.subr.mxu0 0.0
    %1650 = vmatpush1.msra.mxu0 0.0
    %1651 = vmatprep.subr.mxu0 0.0
    %1652 = vmatpush1.msra.mxu0 0.0
    %1653 = vmatprep.subr.mxu0 0.0
    %1654 = vmatpush1.msra.mxu0 0.0
    %1655 = vmatprep.subr.mxu0 0.0
    %1656 = vmatpush1.msra.mxu0 0.0
    %1657 = vmatprep.subr.mxu0 0.0
    %1658 = vmatpush1.msra.mxu0 0.0
    %1659 = vmatprep.subr.mxu0 0.0
    %1660 = vmatpush1.msra.mxu0 0.0
    %1661 = vmatprep.subr.mxu0 0.0
    %1662 = vmatpush1.msra.mxu0 0.0
    %1663 = vmatprep.subr.mxu0 0.0
    %1664 = vmatpush1.msra.mxu0 0.0
    %1665 = vmatprep.subr.mxu0 0.0
    %1666 = vmatpush1.msra.mxu0 0.0
    %1667 = vmatprep.subr.mxu0 0.0
    %1668 = vmatpush1.msra.mxu0 0.0
    %1669 = vmatprep.subr.mxu0 0.0
    %1670 = vmatpush1.msra.mxu0 0.0
    %1671 = vmatprep.subr.mxu0 0.0
    %1672 = vmatpush1.msra.mxu0 0.0
    %1673 = vmatprep.subr.mxu0 0.0
    %1674 = vmatpush1.msra.mxu0 0.0
    %1675 = vmatprep.subr.mxu0 0.0
    %1676 = vmatpush1.msra.mxu0 0.0
    %1677 = vmatprep.subr.mxu0 0.0
    %1678 = vmatpush1.msra.mxu0 0.0
    %1679 = vmatprep.subr.mxu0 0.0
    %1680 = vmatpush1.msra.mxu0 0.0
    %1681 = vmatprep.subr.mxu0 0.0
    %1682 = vmatpush1.msra.mxu0 0.0
    %1683 = vmatprep.subr.mxu0 0.0
    %1684 = vmatpush1.msra.mxu0 0.0
    %1685 = vmatprep.subr.mxu0 0.0
    %1686 = vmatpush1.msra.mxu0 0.0
    %1687 = vmatprep.subr.mxu0 0.0
    %1688 = vmatpush1.msra.mxu0 0.0
    %1689 = vmatprep.mubr.f32.mxu0 0.0
    %1690 = vmatmul.mubr.f32.gmra.mrb[0].mxu0 %v1483
    %v1691 = vpop.f32.mrb[0].mxu0
    %v1692 = vadd.f32 %v523, %v1691
    %v1693 = vpop.f32.mrb[0].mxu0
    %1694 = vdwg.mxu0
    %v1696 = vrot.slane %v1552, 4
    %v1697 = vrot.slane %v1552, 5
    %v1700 = vadd.f32 %v182, %v1696
    %v1701 = vadd.f32 %v187, %v1697
    %v1702 = vxor.u32 %v1700, 2147483648
    %v1703 = vxor.u32 %v1701, 2147483648
    %v1704 = vmul.f32 %v1702, 1.442695
    %v1705 = vpow.pop %v1704
    %v1706 = vmul.f32 %v1703, 1.442695
    %v1707 = vpow.pop %v1706
    %v1708 = vadd.f32 %v1705, 1.0
    %v1709 = vadd.f32 %v1707, 1.0
    %v1710 = vrcp.pop %v1708
    %v1711 = vmul.f32 1.0, %v1710
    %v1712 = vrcp.pop %v1709
    %v1713 = vmul.f32 1.0, %v1712
    %v1715 = vrot.slane %v1622, 4
    %v1716 = vrot.slane %v1622, 5
    %v1719 = vadd.f32 %v268, %v1715
    %v1720 = vadd.f32 %v273, %v1716
    %v1721 = vxor.u32 %v1719, 2147483648
    %v1722 = vxor.u32 %v1720, 2147483648
    %v1723 = vmul.f32 %v1721, 1.442695
    %v1724 = vpow.pop %v1723
    %v1725 = vmul.f32 %v1722, 1.442695
    %v1726 = vpow.pop %v1725
    %v1727 = vadd.f32 %v1724, 1.0
    %v1728 = vadd.f32 %v1726, 1.0
    %v1729 = vrcp.pop %v1727
    %v1730 = vmul.f32 1.0, %v1729
    %v1731 = vrcp.pop %v1728
    %v1732 = vmul.f32 1.0, %v1731
    %v1734 = vrot.slane %v1692, 4
    %v1735 = vrot.slane %v1692, 5
    %v1738 = vmul.f32 %v1711, %v1734
    %v1739 = vmul.f32 %v1713, %v1735
    %v1740 = vadd.f32 %v354, %v1738
    %v1741 = vadd.f32 %v359, %v1739
    %v1742 = vtanh.pop %v1740
    %v1743 = vtanh.pop %v1741
    %v1744 = vsub.f32 1.0, %v1730
    %v1745 = vsub.f32 1.0, %v1732
    %v1746 = vmul.f32 %v1744, %v1742
    %v1747 = vmul.f32 %v1745, %v1743
    %v1748 = vrot.slane %v1476, 7
    %v1749 = vrot.slane %v1477, 7
    %v1752 = vmul.f32 %v1730, %v1748
    %v1753 = vmul.f32 %v1732, %v1749
    %v1754 = vadd.f32 %v1746, %v1752
    %v1755 = vadd.f32 %v1747, %v1753
    %v1758 = vrot.slane %v1754, 4
    %v1759 = vrot.slane %v1755, 3
    %v1760 = vsel %vm652, %v1759, %v1758
    %v1761 = vsel %vm375, %v1760, 0
    %1763 = vmatprep.subr.mxu0 0.0
    %1764 = vmatpush1.msra.mxu0 %v362
    %1765 = vmatprep.subr.mxu0 0.0
    %1766 = vmatpush1.msra.mxu0 %v363
    %1767 = vmatprep.subr.mxu0 0.0
    %1768 = vmatpush1.msra.mxu0 %v364
    %1769 = vmatprep.subr.mxu0 0.0
    %1770 = vmatpush1.msra.mxu0 %v365
    %1771 = vmatprep.subr.mxu0 0.0
    %1772 = vmatpush1.msra.mxu0 0.0
    %1773 = vmatprep.subr.mxu0 0.0
    %1774 = vmatpush1.msra.mxu0 0.0
    %1775 = vmatprep.subr.mxu0 0.0
    %1776 = vmatpush1.msra.mxu0 0.0
    %1777 = vmatprep.subr.mxu0 0.0
    %1778 = vmatpush1.msra.mxu0 0.0
    %1779 = vmatprep.subr.mxu0 0.0
    %1780 = vmatpush1.msra.mxu0 0.0
    %1781 = vmatprep.subr.mxu0 0.0
    %1782 = vmatpush1.msra.mxu0 0.0
    %1783 = vmatprep.subr.mxu0 0.0
    %1784 = vmatpush1.msra.mxu0 0.0
    %1785 = vmatprep.subr.mxu0 0.0
    %1786 = vmatpush1.msra.mxu0 0.0
    %1787 = vmatprep.subr.mxu0 0.0
    %1788 = vmatpush1.msra.mxu0 0.0
    %1789 = vmatprep.subr.mxu0 0.0
    %1790 = vmatpush1.msra.mxu0 0.0
    %1791 = vmatprep.subr.mxu0 0.0
    %1792 = vmatpush1.msra.mxu0 0.0
    %1793 = vmatprep.subr.mxu0 0.0
    %1794 = vmatpush1.msra.mxu0 0.0
    %1795 = vmatprep.subr.mxu0 0.0
    %1796 = vmatpush1.msra.mxu0 0.0
    %1797 = vmatprep.subr.mxu0 0.0
    %1798 = vmatpush1.msra.mxu0 0.0
    %1799 = vmatprep.subr.mxu0 0.0
    %1800 = vmatpush1.msra.mxu0 0.0
    %1801 = vmatprep.subr.mxu0 0.0
    %1802 = vmatpush1.msra.mxu0 0.0
    %1803 = vmatprep.subr.mxu0 0.0
    %1804 = vmatpush1.msra.mxu0 0.0
    %1805 = vmatprep.subr.mxu0 0.0
    %1806 = vmatpush1.msra.mxu0 0.0
    %1807 = vmatprep.subr.mxu0 0.0
    %1808 = vmatpush1.msra.mxu0 0.0
    %1809 = vmatprep.subr.mxu0 0.0
    %1810 = vmatpush1.msra.mxu0 0.0
    %1811 = vmatprep.subr.mxu0 0.0
    %1812 = vmatpush1.msra.mxu0 0.0
    %1813 = vmatprep.subr.mxu0 0.0
    %1814 = vmatpush1.msra.mxu0 0.0
    %1815 = vmatprep.subr.mxu0 0.0
    %1816 = vmatpush1.msra.mxu0 0.0
    %1817 = vmatprep.subr.mxu0 0.0
    %1818 = vmatpush1.msra.mxu0 0.0
    %1819 = vmatprep.subr.mxu0 0.0
    %1820 = vmatpush1.msra.mxu0 0.0
    %1821 = vmatprep.subr.mxu0 0.0
    %1822 = vmatpush1.msra.mxu0 0.0
    %1823 = vmatprep.subr.mxu0 0.0
    %1824 = vmatpush1.msra.mxu0 0.0
    %1825 = vmatprep.subr.mxu0 0.0
    %1826 = vmatpush1.msra.mxu0 0.0
    %1827 = vmatprep.mubr.f32.mxu0 0.0
    %1828 = vmatmul.mubr.f32.gmra.mrb[0].mxu0 %v1761
    %v1829 = vpop.f32.mrb[0].mxu0
    %v1830 = vadd.f32 0.0, %v1829
    %v1831 = vpop.f32.mrb[0].mxu0
    %1832 = vdwg.mxu0
    %1833 = vmatprep.subr.mxu0 0.0
    %1834 = vmatpush1.msra.mxu0 %v366
    %1835 = vmatprep.subr.mxu0 0.0
    %1836 = vmatpush1.msra.mxu0 %v367
    %1837 = vmatprep.subr.mxu0 0.0
    %1838 = vmatpush1.msra.mxu0 %v368
    %1839 = vmatprep.subr.mxu0 0.0
    %1840 = vmatpush1.msra.mxu0 %v369
    %1841 = vmatprep.subr.mxu0 0.0
    %1842 = vmatpush1.msra.mxu0 0.0
    %1843 = vmatprep.subr.mxu0 0.0
    %1844 = vmatpush1.msra.mxu0 0.0
    %1845 = vmatprep.subr.mxu0 0.0
    %1846 = vmatpush1.msra.mxu0 0.0
    %1847 = vmatprep.subr.mxu0 0.0
    %1848 = vmatpush1.msra.mxu0 0.0
    %1849 = vmatprep.subr.mxu0 0.0
    %1850 = vmatpush1.msra.mxu0 0.0
    %1851 = vmatprep.subr.mxu0 0.0
    %1852 = vmatpush1.msra.mxu0 0.0
    %1853 = vmatprep.subr.mxu0 0.0
    %1854 = vmatpush1.msra.mxu0 0.0
    %1855 = vmatprep.subr.mxu0 0.0
    %1856 = vmatpush1.msra.mxu0 0.0
    %1857 = vmatprep.subr.mxu0 0.0
    %1858 = vmatpush1.msra.mxu0 0.0
    %1859 = vmatprep.subr.mxu0 0.0
    %1860 = vmatpush1.msra.mxu0 0.0
    %1861 = vmatprep.subr.mxu0 0.0
    %1862 = vmatpush1.msra.mxu0 0.0
    %1863 = vmatprep.subr.mxu0 0.0
    %1864 = vmatpush1.msra.mxu0 0.0
    %1865 = vmatprep.subr.mxu0 0.0
    %1866 = vmatpush1.msra.mxu0 0.0
    %1867 = vmatprep.subr.mxu0 0.0
    %1868 = vmatpush1.msra.mxu0 0.0
    %1869 = vmatprep.subr.mxu0 0.0
    %1870 = vmatpush1.msra.mxu0 0.0
    %1871 = vmatprep.subr.mxu0 0.0
    %1872 = vmatpush1.msra.mxu0 0.0
    %1873 = vmatprep.subr.mxu0 0.0
    %1874 = vmatpush1.msra.mxu0 0.0
    %1875 = vmatprep.subr.mxu0 0.0
    %1876 = vmatpush1.msra.mxu0 0.0
    %1877 = vmatprep.subr.mxu0 0.0
    %1878 = vmatpush1.msra.mxu0 0.0
    %1879 = vmatprep.subr.mxu0 0.0
    %1880 = vmatpush1.msra.mxu0 0.0
    %1881 = vmatprep.subr.mxu0 0.0
    %1882 = vmatpush1.msra.mxu0 0.0
    %1883 = vmatprep.subr.mxu0 0.0
    %1884 = vmatpush1.msra.mxu0 0.0
    %1885 = vmatprep.subr.mxu0 0.0
    %1886 = vmatpush1.msra.mxu0 0.0
    %1887 = vmatprep.subr.mxu0 0.0
    %1888 = vmatpush1.msra.mxu0 0.0
    %1889 = vmatprep.subr.mxu0 0.0
    %1890 = vmatpush1.msra.mxu0 0.0
    %1891 = vmatprep.subr.mxu0 0.0
    %1892 = vmatpush1.msra.mxu0 0.0
    %1893 = vmatprep.subr.mxu0 0.0
    %1894 = vmatpush1.msra.mxu0 0.0
    %1895 = vmatprep.subr.mxu0 0.0
    %1896 = vmatpush1.msra.mxu0 0.0
    %1897 = vmatprep.mubr.f32.mxu0 0.0
    %1898 = vmatmul.mubr.f32.gmra.mrb[0].mxu0 %v1761
    %v1899 = vpop.f32.mrb[0].mxu0
    %v1900 = vadd.f32 0.0, %v1899
    %v1901 = vpop.f32.mrb[0].mxu0
    %1902 = vdwg.mxu0
    %1903 = vmatprep.subr.mxu0 0.0
    %1904 = vmatpush1.msra.mxu0 %v370
    %1905 = vmatprep.subr.mxu0 0.0
    %1906 = vmatpush1.msra.mxu0 %v371
    %1907 = vmatprep.subr.mxu0 0.0
    %1908 = vmatpush1.msra.mxu0 %v372
    %1909 = vmatprep.subr.mxu0 0.0
    %1910 = vmatpush1.msra.mxu0 %v373
    %1911 = vmatprep.subr.mxu0 0.0
    %1912 = vmatpush1.msra.mxu0 0.0
    %1913 = vmatprep.subr.mxu0 0.0
    %1914 = vmatpush1.msra.mxu0 0.0
    %1915 = vmatprep.subr.mxu0 0.0
    %1916 = vmatpush1.msra.mxu0 0.0
    %1917 = vmatprep.subr.mxu0 0.0
    %1918 = vmatpush1.msra.mxu0 0.0
    %1919 = vmatprep.subr.mxu0 0.0
    %1920 = vmatpush1.msra.mxu0 0.0
    %1921 = vmatprep.subr.mxu0 0.0
    %1922 = vmatpush1.msra.mxu0 0.0
    %1923 = vmatprep.subr.mxu0 0.0
    %1924 = vmatpush1.msra.mxu0 0.0
    %1925 = vmatprep.subr.mxu0 0.0
    %1926 = vmatpush1.msra.mxu0 0.0
    %1927 = vmatprep.subr.mxu0 0.0
    %1928 = vmatpush1.msra.mxu0 0.0
    %1929 = vmatprep.subr.mxu0 0.0
    %1930 = vmatpush1.msra.mxu0 0.0
    %1931 = vmatprep.subr.mxu0 0.0
    %1932 = vmatpush1.msra.mxu0 0.0
    %1933 = vmatprep.subr.mxu0 0.0
    %1934 = vmatpush1.msra.mxu0 0.0
    %1935 = vmatprep.subr.mxu0 0.0
    %1936 = vmatpush1.msra.mxu0 0.0
    %1937 = vmatprep.subr.mxu0 0.0
    %1938 = vmatpush1.msra.mxu0 0.0
    %1939 = vmatprep.subr.mxu0 0.0
    %1940 = vmatpush1.msra.mxu0 0.0
    %1941 = vmatprep.subr.mxu0 0.0
    %1942 = vmatpush1.msra.mxu0 0.0
    %1943 = vmatprep.subr.mxu0 0.0
    %1944 = vmatpush1.msra.mxu0 0.0
    %1945 = vmatprep.subr.mxu0 0.0
    %1946 = vmatpush1.msra.mxu0 0.0
    %1947 = vmatprep.subr.mxu0 0.0
    %1948 = vmatpush1.msra.mxu0 0.0
    %1949 = vmatprep.subr.mxu0 0.0
    %1950 = vmatpush1.msra.mxu0 0.0
    %1951 = vmatprep.subr.mxu0 0.0
    %1952 = vmatpush1.msra.mxu0 0.0
    %1953 = vmatprep.subr.mxu0 0.0
    %1954 = vmatpush1.msra.mxu0 0.0
    %1955 = vmatprep.subr.mxu0 0.0
    %1956 = vmatpush1.msra.mxu0 0.0
    %1957 = vmatprep.subr.mxu0 0.0
    %1958 = vmatpush1.msra.mxu0 0.0
    %1959 = vmatprep.subr.mxu0 0.0
    %1960 = vmatpush1.msra.mxu0 0.0
    %1961 = vmatprep.subr.mxu0 0.0
    %1962 = vmatpush1.msra.mxu0 0.0
    %1963 = vmatprep.subr.mxu0 0.0
    %1964 = vmatpush1.msra.mxu0 0.0
    %1965 = vmatprep.subr.mxu0 0.0
    %1966 = vmatpush1.msra.mxu0 0.0
    %1967 = vmatprep.mubr.f32.mxu0 0.0
    %1968 = vmatmul.mubr.f32.gmra.mrb[0].mxu0 %v1761
    %v1969 = vpop.f32.mrb[0].mxu0
    %v1970 = vadd.f32 %v523, %v1969
    %v1971 = vpop.f32.mrb[0].mxu0
    %1972 = vdwg.mxu0
    %v1974 = vrot.slane %v1830, 3
    %v1975 = vrot.slane %v1830, 4
    %v1978 = vadd.f32 %v182, %v1974
    %v1979 = vadd.f32 %v187, %v1975
    %v1980 = vxor.u32 %v1978, 2147483648
    %v1981 = vxor.u32 %v1979, 2147483648
    %v1982 = vmul.f32 %v1980, 1.442695
    %v1983 = vpow.pop %v1982
    %v1984 = vmul.f32 %v1981, 1.442695
    %v1985 = vpow.pop %v1984
    %v1986 = vadd.f32 %v1983, 1.0
    %v1987 = vadd.f32 %v1985, 1.0
    %v1988 = vrcp.pop %v1986
    %v1989 = vmul.f32 1.0, %v1988
    %v1990 = vrcp.pop %v1987
    %v1991 = vmul.f32 1.0, %v1990
    %v1993 = vrot.slane %v1900, 3
    %v1994 = vrot.slane %v1900, 4
    %v1997 = vadd.f32 %v268, %v1993
    %v1998 = vadd.f32 %v273, %v1994
    %v1999 = vxor.u32 %v1997, 2147483648
    %v2000 = vxor.u32 %v1998, 2147483648
    %v2001 = vmul.f32 %v1999, 1.442695
    %v2002 = vpow.pop %v2001
    %v2003 = vmul.f32 %v2000, 1.442695
    %v2004 = vpow.pop %v2003
    %v2005 = vadd.f32 %v2002, 1.0
    %v2006 = vadd.f32 %v2004, 1.0
    %v2007 = vrcp.pop %v2005
    %v2008 = vmul.f32 1.0, %v2007
    %v2009 = vrcp.pop %v2006
    %v2010 = vmul.f32 1.0, %v2009
    %v2012 = vrot.slane %v1970, 3
    %v2013 = vrot.slane %v1970, 4
    %v2016 = vmul.f32 %v1989, %v2012
    %v2017 = vmul.f32 %v1991, %v2013
    %v2018 = vadd.f32 %v354, %v2016
    %v2019 = vadd.f32 %v359, %v2017
    %v2020 = vtanh.pop %v2018
    %v2021 = vtanh.pop %v2019
    %v2022 = vsub.f32 1.0, %v2008
    %v2023 = vsub.f32 1.0, %v2010
    %v2024 = vmul.f32 %v2022, %v2020
    %v2025 = vmul.f32 %v2023, %v2021
    %v2026 = vrot.slane %v1754, 7
    %v2027 = vrot.slane %v1755, 7
    %v2030 = vmul.f32 %v2008, %v2026
    %v2031 = vmul.f32 %v2010, %v2027
    %v2032 = vadd.f32 %v2024, %v2030
    %v2033 = vadd.f32 %v2025, %v2031
    %v2036 = vrot.slane %v2032, 5
    %v2037 = vrot.slane %v2033, 4
    %v2038 = vsel %vm652, %v2037, %v2036
    %v2039 = vsel %vm375, %v2038, 0
    %2041 = vmatprep.subr.mxu0 0.0
    %2042 = vmatpush1.msra.mxu0 %v362
    %2043 = vmatprep.subr.mxu0 0.0
    %2044 = vmatpush1.msra.mxu0 %v363
    %2045 = vmatprep.subr.mxu0 0.0
    %2046 = vmatpush1.msra.mxu0 %v364
    %2047 = vmatprep.subr.mxu0 0.0
    %2048 = vmatpush1.msra.mxu0 %v365
    %2049 = vmatprep.subr.mxu0 0.0
    %2050 = vmatpush1.msra.mxu0 0.0
    %2051 = vmatprep.subr.mxu0 0.0
    %2052 = vmatpush1.msra.mxu0 0.0
    %2053 = vmatprep.subr.mxu0 0.0
    %2054 = vmatpush1.msra.mxu0 0.0
    %2055 = vmatprep.subr.mxu0 0.0
    %2056 = vmatpush1.msra.mxu0 0.0
    %2057 = vmatprep.subr.mxu0 0.0
    %2058 = vmatpush1.msra.mxu0 0.0
    %2059 = vmatprep.subr.mxu0 0.0
    %2060 = vmatpush1.msra.mxu0 0.0
    %2061 = vmatprep.subr.mxu0 0.0
    %2062 = vmatpush1.msra.mxu0 0.0
    %2063 = vmatprep.subr.mxu0 0.0
    %2064 = vmatpush1.msra.mxu0 0.0
    %2065 = vmatprep.subr.mxu0 0.0
    %2066 = vmatpush1.msra.mxu0 0.0
    %2067 = vmatprep.subr.mxu0 0.0
    %2068 = vmatpush1.msra.mxu0 0.0
    %2069 = vmatprep.subr.mxu0 0.0
    %2070 = vmatpush1.msra.mxu0 0.0
    %2071 = vmatprep.subr.mxu0 0.0
    %2072 = vmatpush1.msra.mxu0 0.0
    %2073 = vmatprep.subr.mxu0 0.0
    %2074 = vmatpush1.msra.mxu0 0.0
    %2075 = vmatprep.subr.mxu0 0.0
    %2076 = vmatpush1.msra.mxu0 0.0
    %2077 = vmatprep.subr.mxu0 0.0
    %2078 = vmatpush1.msra.mxu0 0.0
    %2079 = vmatprep.subr.mxu0 0.0
    %2080 = vmatpush1.msra.mxu0 0.0
    %2081 = vmatprep.subr.mxu0 0.0
    %2082 = vmatpush1.msra.mxu0 0.0
    %2083 = vmatprep.subr.mxu0 0.0
    %2084 = vmatpush1.msra.mxu0 0.0
    %2085 = vmatprep.subr.mxu0 0.0
    %2086 = vmatpush1.msra.mxu0 0.0
    %2087 = vmatprep.subr.mxu0 0.0
    %2088 = vmatpush1.msra.mxu0 0.0
    %2089 = vmatprep.subr.mxu0 0.0
    %2090 = vmatpush1.msra.mxu0 0.0
    %2091 = vmatprep.subr.mxu0 0.0
    %2092 = vmatpush1.msra.mxu0 0.0
    %2093 = vmatprep.subr.mxu0 0.0
    %2094 = vmatpush1.msra.mxu0 0.0
    %2095 = vmatprep.subr.mxu0 0.0
    %2096 = vmatpush1.msra.mxu0 0.0
    %2097 = vmatprep.subr.mxu0 0.0
    %2098 = vmatpush1.msra.mxu0 0.0
    %2099 = vmatprep.subr.mxu0 0.0
    %2100 = vmatpush1.msra.mxu0 0.0
    %2101 = vmatprep.subr.mxu0 0.0
    %2102 = vmatpush1.msra.mxu0 0.0
    %2103 = vmatprep.subr.mxu0 0.0
    %2104 = vmatpush1.msra.mxu0 0.0
    %2105 = vmatprep.mubr.f32.mxu0 0.0
    %2106 = vmatmul.mubr.f32.gmra.mrb[0].mxu0 %v2039
    %v2107 = vpop.f32.mrb[0].mxu0
    %v2108 = vadd.f32 0.0, %v2107
    %v2109 = vpop.f32.mrb[0].mxu0
    %2110 = vdwg.mxu0
    %2111 = vmatprep.subr.mxu0 0.0
    %2112 = vmatpush1.msra.mxu0 %v366
    %2113 = vmatprep.subr.mxu0 0.0
    %2114 = vmatpush1.msra.mxu0 %v367
    %2115 = vmatprep.subr.mxu0 0.0
    %2116 = vmatpush1.msra.mxu0 %v368
    %2117 = vmatprep.subr.mxu0 0.0
    %2118 = vmatpush1.msra.mxu0 %v369
    %2119 = vmatprep.subr.mxu0 0.0
    %2120 = vmatpush1.msra.mxu0 0.0
    %2121 = vmatprep.subr.mxu0 0.0
    %2122 = vmatpush1.msra.mxu0 0.0
    %2123 = vmatprep.subr.mxu0 0.0
    %2124 = vmatpush1.msra.mxu0 0.0
    %2125 = vmatprep.subr.mxu0 0.0
    %2126 = vmatpush1.msra.mxu0 0.0
    %2127 = vmatprep.subr.mxu0 0.0
    %2128 = vmatpush1.msra.mxu0 0.0
    %2129 = vmatprep.subr.mxu0 0.0
    %2130 = vmatpush1.msra.mxu0 0.0
    %2131 = vmatprep.subr.mxu0 0.0
    %2132 = vmatpush1.msra.mxu0 0.0
    %2133 = vmatprep.subr.mxu0 0.0
    %2134 = vmatpush1.msra.mxu0 0.0
    %2135 = vmatprep.subr.mxu0 0.0
    %2136 = vmatpush1.msra.mxu0 0.0
    %2137 = vmatprep.subr.mxu0 0.0
    %2138 = vmatpush1.msra.mxu0 0.0
    %2139 = vmatprep.subr.mxu0 0.0
    %2140 = vmatpush1.msra.mxu0 0.0
    %2141 = vmatprep.subr.mxu0 0.0
    %2142 = vmatpush1.msra.mxu0 0.0
    %2143 = vmatprep.subr.mxu0 0.0
    %2144 = vmatpush1.msra.mxu0 0.0
    %2145 = vmatprep.subr.mxu0 0.0
    %2146 = vmatpush1.msra.mxu0 0.0
    %2147 = vmatprep.subr.mxu0 0.0
    %2148 = vmatpush1.msra.mxu0 0.0
    %2149 = vmatprep.subr.mxu0 0.0
    %2150 = vmatpush1.msra.mxu0 0.0
    %2151 = vmatprep.subr.mxu0 0.0
    %2152 = vmatpush1.msra.mxu0 0.0
    %2153 = vmatprep.subr.mxu0 0.0
    %2154 = vmatpush1.msra.mxu0 0.0
    %2155 = vmatprep.subr.mxu0 0.0
    %2156 = vmatpush1.msra.mxu0 0.0
    %2157 = vmatprep.subr.mxu0 0.0
    %2158 = vmatpush1.msra.mxu0 0.0
    %2159 = vmatprep.subr.mxu0 0.0
    %2160 = vmatpush1.msra.mxu0 0.0
    %2161 = vmatprep.subr.mxu0 0.0
    %2162 = vmatpush1.msra.mxu0 0.0
    %2163 = vmatprep.subr.mxu0 0.0
    %2164 = vmatpush1.msra.mxu0 0.0
    %2165 = vmatprep.subr.mxu0 0.0
    %2166 = vmatpush1.msra.mxu0 0.0
    %2167 = vmatprep.subr.mxu0 0.0
    %2168 = vmatpush1.msra.mxu0 0.0
    %2169 = vmatprep.subr.mxu0 0.0
    %2170 = vmatpush1.msra.mxu0 0.0
    %2171 = vmatprep.subr.mxu0 0.0
    %2172 = vmatpush1.msra.mxu0 0.0
    %2173 = vmatprep.subr.mxu0 0.0
    %2174 = vmatpush1.msra.mxu0 0.0
    %2175 = vmatprep.mubr.f32.mxu0 0.0
    %2176 = vmatmul.mubr.f32.gmra.mrb[0].mxu0 %v2039
    %v2177 = vpop.f32.mrb[0].mxu0
    %v2178 = vadd.f32 0.0, %v2177
    %v2179 = vpop.f32.mrb[0].mxu0
    %2180 = vdwg.mxu0
    %2181 = vmatprep.subr.mxu0 0.0
    %2182 = vmatpush1.msra.mxu0 %v370
    %2183 = vmatprep.subr.mxu0 0.0
    %2184 = vmatpush1.msra.mxu0 %v371
    %2185 = vmatprep.subr.mxu0 0.0
    %2186 = vmatpush1.msra.mxu0 %v372
    %2187 = vmatprep.subr.mxu0 0.0
    %2188 = vmatpush1.msra.mxu0 %v373
    %2189 = vmatprep.subr.mxu0 0.0
    %2190 = vmatpush1.msra.mxu0 0.0
    %2191 = vmatprep.subr.mxu0 0.0
    %2192 = vmatpush1.msra.mxu0 0.0
    %2193 = vmatprep.subr.mxu0 0.0
    %2194 = vmatpush1.msra.mxu0 0.0
    %2195 = vmatprep.subr.mxu0 0.0
    %2196 = vmatpush1.msra.mxu0 0.0
    %2197 = vmatprep.subr.mxu0 0.0
    %2198 = vmatpush1.msra.mxu0 0.0
    %2199 = vmatprep.subr.mxu0 0.0
    %2200 = vmatpush1.msra.mxu0 0.0
    %2201 = vmatprep.subr.mxu0 0.0
    %2202 = vmatpush1.msra.mxu0 0.0
    %2203 = vmatprep.subr.mxu0 0.0
    %2204 = vmatpush1.msra.mxu0 0.0
    %2205 = vmatprep.subr.mxu0 0.0
    %2206 = vmatpush1.msra.mxu0 0.0
    %2207 = vmatprep.subr.mxu0 0.0
    %2208 = vmatpush1.msra.mxu0 0.0
    %2209 = vmatprep.subr.mxu0 0.0
    %2210 = vmatpush1.msra.mxu0 0.0
    %2211 = vmatprep.subr.mxu0 0.0
    %2212 = vmatpush1.msra.mxu0 0.0
    %2213 = vmatprep.subr.mxu0 0.0
    %2214 = vmatpush1.msra.mxu0 0.0
    %2215 = vmatprep.subr.mxu0 0.0
    %2216 = vmatpush1.msra.mxu0 0.0
    %2217 = vmatprep.subr.mxu0 0.0
    %2218 = vmatpush1.msra.mxu0 0.0
    %2219 = vmatprep.subr.mxu0 0.0
    %2220 = vmatpush1.msra.mxu0 0.0
    %2221 = vmatprep.subr.mxu0 0.0
    %2222 = vmatpush1.msra.mxu0 0.0
    %2223 = vmatprep.subr.mxu0 0.0
    %2224 = vmatpush1.msra.mxu0 0.0
    %2225 = vmatprep.subr.mxu0 0.0
    %2226 = vmatpush1.msra.mxu0 0.0
    %2227 = vmatprep.subr.mxu0 0.0
    %2228 = vmatpush1.msra.mxu0 0.0
    %2229 = vmatprep.subr.mxu0 0.0
    %2230 = vmatpush1.msra.mxu0 0.0
    %2231 = vmatprep.subr.mxu0 0.0
    %2232 = vmatpush1.msra.mxu0 0.0
    %2233 = vmatprep.subr.mxu0 0.0
    %2234 = vmatpush1.msra.mxu0 0.0
    %2235 = vmatprep.subr.mxu0 0.0
    %2236 = vmatpush1.msra.mxu0 0.0
    %2237 = vmatprep.subr.mxu0 0.0
    %2238 = vmatpush1.msra.mxu0 0.0
    %2239 = vmatprep.subr.mxu0 0.0
    %2240 = vmatpush1.msra.mxu0 0.0
    %2241 = vmatprep.subr.mxu0 0.0
    %2242 = vmatpush1.msra.mxu0 0.0
    %2243 = vmatprep.subr.mxu0 0.0
    %2244 = vmatpush1.msra.mxu0 0.0
    %2245 = vmatprep.mubr.f32.mxu0 0.0
    %2246 = vmatmul.mubr.f32.gmra.mrb[0].mxu0 %v2039
    %v2247 = vpop.f32.mrb[0].mxu0
    %v2248 = vadd.f32 %v523, %v2247
    %v2249 = vpop.f32.mrb[0].mxu0
    %2250 = vdwg.mxu0
    %v2252 = vrot.slane %v2108, 2
    %v2253 = vrot.slane %v2108, 3
    %v2256 = vadd.f32 %v182, %v2252
    %v2257 = vadd.f32 %v187, %v2253
    %v2258 = vxor.u32 %v2256, 2147483648
    %v2259 = vxor.u32 %v2257, 2147483648
    %v2260 = vmul.f32 %v2258, 1.442695
    %v2261 = vpow.pop %v2260
    %v2262 = vmul.f32 %v2259, 1.442695
    %v2263 = vpow.pop %v2262
    %v2264 = vadd.f32 %v2261, 1.0
    %v2265 = vadd.f32 %v2263, 1.0
    %v2266 = vrcp.pop %v2264
    %v2267 = vmul.f32 1.0, %v2266
    %v2268 = vrcp.pop %v2265
    %v2269 = vmul.f32 1.0, %v2268
    %v2271 = vrot.slane %v2178, 2
    %v2272 = vrot.slane %v2178, 3
    %v2275 = vadd.f32 %v268, %v2271
    %v2276 = vadd.f32 %v273, %v2272
    %v2277 = vxor.u32 %v2275, 2147483648
    %v2278 = vxor.u32 %v2276, 2147483648
    %v2279 = vmul.f32 %v2277, 1.442695
    %v2280 = vpow.pop %v2279
    %v2281 = vmul.f32 %v2278, 1.442695
    %v2282 = vpow.pop %v2281
    %v2283 = vadd.f32 %v2280, 1.0
    %v2284 = vadd.f32 %v2282, 1.0
    %v2285 = vrcp.pop %v2283
    %v2286 = vmul.f32 1.0, %v2285
    %v2287 = vrcp.pop %v2284
    %v2288 = vmul.f32 1.0, %v2287
    %v2290 = vrot.slane %v2248, 2
    %v2291 = vrot.slane %v2248, 3
    %v2294 = vmul.f32 %v2267, %v2290
    %v2295 = vmul.f32 %v2269, %v2291
    %v2296 = vadd.f32 %v354, %v2294
    %v2297 = vadd.f32 %v359, %v2295
    %v2298 = vtanh.pop %v2296
    %v2299 = vtanh.pop %v2297
    %v2300 = vsub.f32 1.0, %v2286
    %v2301 = vsub.f32 1.0, %v2288
    %v2302 = vmul.f32 %v2300, %v2298
    %v2303 = vmul.f32 %v2301, %v2299
    %v2304 = vrot.slane %v2032, 7
    %v2305 = vrot.slane %v2033, 7
    %v2308 = vmul.f32 %v2286, %v2304
    %v2309 = vmul.f32 %v2288, %v2305
    %v2310 = vadd.f32 %v2302, %v2308
    %v2311 = vadd.f32 %v2303, %v2309
    %v2314 = vrot.slane %v2310, 6
    %v2315 = vrot.slane %v2311, 5
    %v2316 = vsel %vm652, %v2315, %v2314
    %v2317 = vsel %vm375, %v2316, 0
    %2319 = vmatprep.subr.mxu0 0.0
    %2320 = vmatpush1.msra.mxu0 %v362
    %2321 = vmatprep.subr.mxu0 0.0
    %2322 = vmatpush1.msra.mxu0 %v363
    %2323 = vmatprep.subr.mxu0 0.0
    %2324 = vmatpush1.msra.mxu0 %v364
    %2325 = vmatprep.subr.mxu0 0.0
    %2326 = vmatpush1.msra.mxu0 %v365
    %2327 = vmatprep.subr.mxu0 0.0
    %2328 = vmatpush1.msra.mxu0 0.0
    %2329 = vmatprep.subr.mxu0 0.0
    %2330 = vmatpush1.msra.mxu0 0.0
    %2331 = vmatprep.subr.mxu0 0.0
    %2332 = vmatpush1.msra.mxu0 0.0
    %2333 = vmatprep.subr.mxu0 0.0
    %2334 = vmatpush1.msra.mxu0 0.0
    %2335 = vmatprep.subr.mxu0 0.0
    %2336 = vmatpush1.msra.mxu0 0.0
    %2337 = vmatprep.subr.mxu0 0.0
    %2338 = vmatpush1.msra.mxu0 0.0
    %2339 = vmatprep.subr.mxu0 0.0
    %2340 = vmatpush1.msra.mxu0 0.0
    %2341 = vmatprep.subr.mxu0 0.0
    %2342 = vmatpush1.msra.mxu0 0.0
    %2343 = vmatprep.subr.mxu0 0.0
    %2344 = vmatpush1.msra.mxu0 0.0
    %2345 = vmatprep.subr.mxu0 0.0
    %2346 = vmatpush1.msra.mxu0 0.0
    %2347 = vmatprep.subr.mxu0 0.0
    %2348 = vmatpush1.msra.mxu0 0.0
    %2349 = vmatprep.subr.mxu0 0.0
    %2350 = vmatpush1.msra.mxu0 0.0
    %2351 = vmatprep.subr.mxu0 0.0
    %2352 = vmatpush1.msra.mxu0 0.0
    %2353 = vmatprep.subr.mxu0 0.0
    %2354 = vmatpush1.msra.mxu0 0.0
    %2355 = vmatprep.subr.mxu0 0.0
    %2356 = vmatpush1.msra.mxu0 0.0
    %2357 = vmatprep.subr.mxu0 0.0
    %2358 = vmatpush1.msra.mxu0 0.0
    %2359 = vmatprep.subr.mxu0 0.0
    %2360 = vmatpush1.msra.mxu0 0.0
    %2361 = vmatprep.subr.mxu0 0.0
    %2362 = vmatpush1.msra.mxu0 0.0
    %2363 = vmatprep.subr.mxu0 0.0
    %2364 = vmatpush1.msra.mxu0 0.0
    %2365 = vmatprep.subr.mxu0 0.0
    %2366 = vmatpush1.msra.mxu0 0.0
    %2367 = vmatprep.subr.mxu0 0.0
    %2368 = vmatpush1.msra.mxu0 0.0
    %2369 = vmatprep.subr.mxu0 0.0
    %2370 = vmatpush1.msra.mxu0 0.0
    %2371 = vmatprep.subr.mxu0 0.0
    %2372 = vmatpush1.msra.mxu0 0.0
    %2373 = vmatprep.subr.mxu0 0.0
    %2374 = vmatpush1.msra.mxu0 0.0
    %2375 = vmatprep.subr.mxu0 0.0
    %2376 = vmatpush1.msra.mxu0 0.0
    %2377 = vmatprep.subr.mxu0 0.0
    %2378 = vmatpush1.msra.mxu0 0.0
    %2379 = vmatprep.subr.mxu0 0.0
    %2380 = vmatpush1.msra.mxu0 0.0
    %2381 = vmatprep.subr.mxu0 0.0
    %2382 = vmatpush1.msra.mxu0 0.0
    %2383 = vmatprep.mubr.f32.mxu0 0.0
    %2384 = vmatmul.mubr.f32.gmra.mrb[0].mxu0 %v2317
    %v2385 = vpop.f32.mrb[0].mxu0
    %v2386 = vadd.f32 0.0, %v2385
    %v2387 = vpop.f32.mrb[0].mxu0
    %2388 = vdwg.mxu0
    %2389 = vmatprep.subr.mxu0 0.0
    %2390 = vmatpush1.msra.mxu0 %v366
    %2391 = vmatprep.subr.mxu0 0.0
    %2392 = vmatpush1.msra.mxu0 %v367
    %2393 = vmatprep.subr.mxu0 0.0
    %2394 = vmatpush1.msra.mxu0 %v368
    %2395 = vmatprep.subr.mxu0 0.0
    %2396 = vmatpush1.msra.mxu0 %v369
    %2397 = vmatprep.subr.mxu0 0.0
    %2398 = vmatpush1.msra.mxu0 0.0
    %2399 = vmatprep.subr.mxu0 0.0
    %2400 = vmatpush1.msra.mxu0 0.0
    %2401 = vmatprep.subr.mxu0 0.0
    %2402 = vmatpush1.msra.mxu0 0.0
    %2403 = vmatprep.subr.mxu0 0.0
    %2404 = vmatpush1.msra.mxu0 0.0
    %2405 = vmatprep.subr.mxu0 0.0
    %2406 = vmatpush1.msra.mxu0 0.0
    %2407 = vmatprep.subr.mxu0 0.0
    %2408 = vmatpush1.msra.mxu0 0.0
    %2409 = vmatprep.subr.mxu0 0.0
    %2410 = vmatpush1.msra.mxu0 0.0
    %2411 = vmatprep.subr.mxu0 0.0
    %2412 = vmatpush1.msra.mxu0 0.0
    %2413 = vmatprep.subr.mxu0 0.0
    %2414 = vmatpush1.msra.mxu0 0.0
    %2415 = vmatprep.subr.mxu0 0.0
    %2416 = vmatpush1.msra.mxu0 0.0
    %2417 = vmatprep.subr.mxu0 0.0
    %2418 = vmatpush1.msra.mxu0 0.0
    %2419 = vmatprep.subr.mxu0 0.0
    %2420 = vmatpush1.msra.mxu0 0.0
    %2421 = vmatprep.subr.mxu0 0.0
    %2422 = vmatpush1.msra.mxu0 0.0
    %2423 = vmatprep.subr.mxu0 0.0
    %2424 = vmatpush1.msra.mxu0 0.0
    %2425 = vmatprep.subr.mxu0 0.0
    %2426 = vmatpush1.msra.mxu0 0.0
    %2427 = vmatprep.subr.mxu0 0.0
    %2428 = vmatpush1.msra.mxu0 0.0
    %2429 = vmatprep.subr.mxu0 0.0
    %2430 = vmatpush1.msra.mxu0 0.0
    %2431 = vmatprep.subr.mxu0 0.0
    %2432 = vmatpush1.msra.mxu0 0.0
    %2433 = vmatprep.subr.mxu0 0.0
    %2434 = vmatpush1.msra.mxu0 0.0
    %2435 = vmatprep.subr.mxu0 0.0
    %2436 = vmatpush1.msra.mxu0 0.0
    %2437 = vmatprep.subr.mxu0 0.0
    %2438 = vmatpush1.msra.mxu0 0.0
    %2439 = vmatprep.subr.mxu0 0.0
    %2440 = vmatpush1.msra.mxu0 0.0
    %2441 = vmatprep.subr.mxu0 0.0
    %2442 = vmatpush1.msra.mxu0 0.0
    %2443 = vmatprep.subr.mxu0 0.0
    %2444 = vmatpush1.msra.mxu0 0.0
    %2445 = vmatprep.subr.mxu0 0.0
    %2446 = vmatpush1.msra.mxu0 0.0
    %2447 = vmatprep.subr.mxu0 0.0
    %2448 = vmatpush1.msra.mxu0 0.0
    %2449 = vmatprep.subr.mxu0 0.0
    %2450 = vmatpush1.msra.mxu0 0.0
    %2451 = vmatprep.subr.mxu0 0.0
    %2452 = vmatpush1.msra.mxu0 0.0
    %2453 = vmatprep.mubr.f32.mxu0 0.0
    %2454 = vmatmul.mubr.f32.gmra.mrb[0].mxu0 %v2317
    %v2455 = vpop.f32.mrb[0].mxu0
    %v2456 = vadd.f32 0.0, %v2455
    %v2457 = vpop.f32.mrb[0].mxu0
    %2458 = vdwg.mxu0
    %2459 = vmatprep.subr.mxu0 0.0
    %2460 = vmatpush1.msra.mxu0 %v370
    %2461 = vmatprep.subr.mxu0 0.0
    %2462 = vmatpush1.msra.mxu0 %v371
    %2463 = vmatprep.subr.mxu0 0.0
    %2464 = vmatpush1.msra.mxu0 %v372
    %2465 = vmatprep.subr.mxu0 0.0
    %2466 = vmatpush1.msra.mxu0 %v373
    %2467 = vmatprep.subr.mxu0 0.0
    %2468 = vmatpush1.msra.mxu0 0.0
    %2469 = vmatprep.subr.mxu0 0.0
    %2470 = vmatpush1.msra.mxu0 0.0
    %2471 = vmatprep.subr.mxu0 0.0
    %2472 = vmatpush1.msra.mxu0 0.0
    %2473 = vmatprep.subr.mxu0 0.0
    %2474 = vmatpush1.msra.mxu0 0.0
    %2475 = vmatprep.subr.mxu0 0.0
    %2476 = vmatpush1.msra.mxu0 0.0
    %2477 = vmatprep.subr.mxu0 0.0
    %2478 = vmatpush1.msra.mxu0 0.0
    %2479 = vmatprep.subr.mxu0 0.0
    %2480 = vmatpush1.msra.mxu0 0.0
    %2481 = vmatprep.subr.mxu0 0.0
    %2482 = vmatpush1.msra.mxu0 0.0
    %2483 = vmatprep.subr.mxu0 0.0
    %2484 = vmatpush1.msra.mxu0 0.0
    %2485 = vmatprep.subr.mxu0 0.0
    %2486 = vmatpush1.msra.mxu0 0.0
    %2487 = vmatprep.subr.mxu0 0.0
    %2488 = vmatpush1.msra.mxu0 0.0
    %2489 = vmatprep.subr.mxu0 0.0
    %2490 = vmatpush1.msra.mxu0 0.0
    %2491 = vmatprep.subr.mxu0 0.0
    %2492 = vmatpush1.msra.mxu0 0.0
    %2493 = vmatprep.subr.mxu0 0.0
    %2494 = vmatpush1.msra.mxu0 0.0
    %2495 = vmatprep.subr.mxu0 0.0
    %2496 = vmatpush1.msra.mxu0 0.0
    %2497 = vmatprep.subr.mxu0 0.0
    %2498 = vmatpush1.msra.mxu0 0.0
    %2499 = vmatprep.subr.mxu0 0.0
    %2500 = vmatpush1.msra.mxu0 0.0
    %2501 = vmatprep.subr.mxu0 0.0
    %2502 = vmatpush1.msra.mxu0 0.0
    %2503 = vmatprep.subr.mxu0 0.0
    %2504 = vmatpush1.msra.mxu0 0.0
    %2505 = vmatprep.subr.mxu0 0.0
    %2506 = vmatpush1.msra.mxu0 0.0
    %2507 = vmatprep.subr.mxu0 0.0
    %2508 = vmatpush1.msra.mxu0 0.0
    %2509 = vmatprep.subr.mxu0 0.0
    %2510 = vmatpush1.msra.mxu0 0.0
    %2511 = vmatprep.subr.mxu0 0.0
    %2512 = vmatpush1.msra.mxu0 0.0
    %2513 = vmatprep.subr.mxu0 0.0
    %2514 = vmatpush1.msra.mxu0 0.0
    %2515 = vmatprep.subr.mxu0 0.0
    %2516 = vmatpush1.msra.mxu0 0.0
    %2517 = vmatprep.subr.mxu0 0.0
    %2518 = vmatpush1.msra.mxu0 0.0
    %2519 = vmatprep.subr.mxu0 0.0
    %2520 = vmatpush1.msra.mxu0 0.0
    %2521 = vmatprep.subr.mxu0 0.0
    %2522 = vmatpush1.msra.mxu0 0.0
    %2523 = vmatprep.mubr.f32.mxu0 0.0
    %2524 = vmatmul.mubr.f32.gmra.mrb[0].mxu0 %v2317
    %v2525 = vpop.f32.mrb[0].mxu0
    %v2526 = vadd.f32 %v523, %v2525
    %v2527 = vpop.f32.mrb[0].mxu0
    %2528 = vdwg.mxu0
    %v2530 = vrot.slane %v2386, 1
    %v2531 = vrot.slane %v2386, 2
    %v2534 = vadd.f32 %v182, %v2530
    %v2535 = vadd.f32 %v187, %v2531
    %v2536 = vxor.u32 %v2534, 2147483648
    %v2537 = vxor.u32 %v2535, 2147483648
    %v2538 = vmul.f32 %v2536, 1.442695
    %v2539 = vpow.pop %v2538
    %v2540 = vmul.f32 %v2537, 1.442695
    %v2541 = vpow.pop %v2540
    %v2542 = vadd.f32 %v2539, 1.0
    %v2543 = vadd.f32 %v2541, 1.0
    %v2544 = vrcp.pop %v2542
    %v2545 = vmul.f32 1.0, %v2544
    %v2546 = vrcp.pop %v2543
    %v2547 = vmul.f32 1.0, %v2546
    %v2549 = vrot.slane %v2456, 1
    %v2550 = vrot.slane %v2456, 2
    %v2553 = vadd.f32 %v268, %v2549
    %v2554 = vadd.f32 %v273, %v2550
    %v2555 = vxor.u32 %v2553, 2147483648
    %v2556 = vxor.u32 %v2554, 2147483648
    %v2557 = vmul.f32 %v2555, 1.442695
    %v2558 = vpow.pop %v2557
    %v2559 = vmul.f32 %v2556, 1.442695
    %v2560 = vpow.pop %v2559
    %v2561 = vadd.f32 %v2558, 1.0
    %v2562 = vadd.f32 %v2560, 1.0
    %v2563 = vrcp.pop %v2561
    %v2564 = vmul.f32 1.0, %v2563
    %v2565 = vrcp.pop %v2562
    %v2566 = vmul.f32 1.0, %v2565
    %v2568 = vrot.slane %v2526, 1
    %v2569 = vrot.slane %v2526, 2
    %v2572 = vmul.f32 %v2545, %v2568
    %v2573 = vmul.f32 %v2547, %v2569
    %v2574 = vadd.f32 %v354, %v2572
    %v2575 = vadd.f32 %v359, %v2573
    %v2576 = vtanh.pop %v2574
    %v2577 = vtanh.pop %v2575
    %v2578 = vsub.f32 1.0, %v2564
    %v2579 = vsub.f32 1.0, %v2566
    %v2580 = vmul.f32 %v2578, %v2576
    %v2581 = vmul.f32 %v2579, %v2577
    %v2582 = vrot.slane %v2310, 7
    %v2583 = vrot.slane %v2311, 7
    %v2586 = vmul.f32 %v2564, %v2582
    %v2587 = vmul.f32 %v2566, %v2583
    %v2588 = vadd.f32 %v2580, %v2586
    %v2589 = vadd.f32 %v2581, %v2587
    %v2590 = vld [vmem:[%s11] sm:$0xff]
    %v2591 = vld [vmem:[%s11 + $0x8] sm:$0xff]
    %v2592 = vld [vmem:[%s11 + $0x10] sm:$0xff]
    %v2593 = vld [vmem:[%s11 + $0x18] sm:$0xff]
    %v2594 = vld [vmem:[%s12] sm:$0x1]
    %v2596 = vlaneseq
    %v2597 = vshrl.u32 %v2596, 7
    %v2598 = vsub.s32 0, %v2597
    %v2599 = vrot.slane %v2594, %v2598
    %v2603 = vrot.slane %v2588, 7
    %v2604 = vrot.slane %v2589, 6
    %v2605 = vsel %vm652, %v2604, %v2603
    %v2606 = vsel %vm375, %v2605, 0
    %2608 = vmatprep.subr.mxu0 0.0
    %2609 = vmatpush1.msra.mxu0 %v2590
    %2610 = vmatprep.subr.mxu0 0.0
    %2611 = vmatpush1.msra.mxu0 %v2591
    %2612 = vmatprep.subr.mxu0 0.0
    %2613 = vmatpush1.msra.mxu0 %v2592
    %2614 = vmatprep.subr.mxu0 0.0
    %2615 = vmatpush1.msra.mxu0 %v2593
    %2616 = vmatprep.subr.mxu0 0.0
    %2617 = vmatpush1.msra.mxu0 0.0
    %2618 = vmatprep.subr.mxu0 0.0
    %2619 = vmatpush1.msra.mxu0 0.0
    %2620 = vmatprep.subr.mxu0 0.0
    %2621 = vmatpush1.msra.mxu0 0.0
    %2622 = vmatprep.subr.mxu0 0.0
    %2623 = vmatpush1.msra.mxu0 0.0
    %2624 = vmatprep.subr.mxu0 0.0
    %2625 = vmatpush1.msra.mxu0 0.0
    %2626 = vmatprep.subr.mxu0 0.0
    %2627 = vmatpush1.msra.mxu0 0.0
    %2628 = vmatprep.subr.mxu0 0.0
    %2629 = vmatpush1.msra.mxu0 0.0
    %2630 = vmatprep.subr.mxu0 0.0
    %2631 = vmatpush1.msra.mxu0 0.0
    %2632 = vmatprep.subr.mxu0 0.0
    %2633 = vmatpush1.msra.mxu0 0.0
    %2634 = vmatprep.subr.mxu0 0.0
    %2635 = vmatpush1.msra.mxu0 0.0
    %2636 = vmatprep.subr.mxu0 0.0
    %2637 = vmatpush1.msra.mxu0 0.0
    %2638 = vmatprep.subr.mxu0 0.0
    %2639 = vmatpush1.msra.mxu0 0.0
    %2640 = vmatprep.subr.mxu0 0.0
    %2641 = vmatpush1.msra.mxu0 0.0
    %2642 = vmatprep.subr.mxu0 0.0
    %2643 = vmatpush1.msra.mxu0 0.0
    %2644 = vmatprep.subr.mxu0 0.0
    %2645 = vmatpush1.msra.mxu0 0.0
    %2646 = vmatprep.subr.mxu0 0.0
    %2647 = vmatpush1.msra.mxu0 0.0
    %2648 = vmatprep.subr.mxu0 0.0
    %2649 = vmatpush1.msra.mxu0 0.0
    %2650 = vmatprep.subr.mxu0 0.0
    %2651 = vmatpush1.msra.mxu0 0.0
    %2652 = vmatprep.subr.mxu0 0.0
    %2653 = vmatpush1.msra.mxu0 0.0
    %2654 = vmatprep.subr.mxu0 0.0
    %2655 = vmatpush1.msra.mxu0 0.0
    %2656 = vmatprep.subr.mxu0 0.0
    %2657 = vmatpush1.msra.mxu0 0.0
    %2658 = vmatprep.subr.mxu0 0.0
    %2659 = vmatpush1.msra.mxu0 0.0
    %2660 = vmatprep.subr.mxu0 0.0
    %2661 = vmatpush1.msra.mxu0 0.0
    %2662 = vmatprep.subr.mxu0 0.0
    %2663 = vmatpush1.msra.mxu0 0.0
    %2664 = vmatprep.subr.mxu0 0.0
    %2665 = vmatpush1.msra.mxu0 0.0
    %2666 = vmatprep.subr.mxu0 0.0
    %2667 = vmatpush1.msra.mxu0 0.0
    %2668 = vmatprep.subr.mxu0 0.0
    %2669 = vmatpush1.msra.mxu0 0.0
    %2670 = vmatprep.subr.mxu0 0.0
    %2671 = vmatpush1.msra.mxu0 0.0
    %2672 = vmatprep.mubr.f32.mxu0 0.0
    %2673 = vmatmul.mubr.f32.gmra.mrb[0].mxu0 %v2606
    %v2674 = vpop.f32.mrb[0].mxu0
    %v2675 = vadd.f32 %v2599, %v2674
    %v2676 = vpop.f32.mrb[0].mxu0
    %2677 = vdwg.mxu0
    %vm2678 = vcmask 58368
    %2679 = vst.msk [vmem:[#allocation10] sm:$0x3] %vm2678, %v2675
    // Predicated region
    $region70: #{tpu_custom_call.1} parent=1 // pred_check
      _
    $region71: #{tpu_custom_call.1} parent=1 // pred_check_branch
      %2681 = sbr.rel (0) target = $region73
    $region72: #{tpu_custom_call.1} parent=1 // pred_region
      %s2683 = ssub.s32 32, 32
      %2684 = vsyncadd [#allocation4], %s2683
      %s2686 = sshll.u32 [#allocation10], 4
      %s2687 = int_to_ptr.vmem [resolvable:$true] %s2686
      %2689 = dma.vmem_to_hbm [thread:$0]  %s2687, 32, %s13, [#allocation4]
    $region73: #{tpu_custom_call.1} parent=1 // pred_fallthru
      _
    // Predicated region
    $region74: #{tpu_custom_call.1} parent=1 // pred_check
      _
    $region75: #{tpu_custom_call.1} parent=1 // pred_check_branch
      %2691 = sbr.rel (0) target = $region77
    $region76: #{tpu_custom_call.1} parent=1 // pred_region
      %2692 = dma.done [#allocation4], 32
    $region77: #{tpu_custom_call.1} parent=1 // pred_fallthru
      _
    %2693 = vsyncpa [#allocation3], 1
    %2694 = vsyncpa [#allocation6], 1
    %2695 = vsyncpa [#allocation9], 1
    %2696 = vsyncpa [#allocation4], 1

</llo_original>
